<compile_context>
chip_gen: v7x
topology: tpu7x:2x2x1
jax: 0.10.0
libtpu: 0.0.40
codegen_flags: <defaults>
</compile_context>

<pallas_src>
import functools
import math

import jax
import jax.numpy as jnp
from jax.experimental import pallas as pl
from jax.experimental.pallas import tpu as pltpu


def _gelu_tanh(x):
    # tanh-form GELU (one EUP tanh); ~1e-3 max deviation vs exact-erf GELU,
    # below the bf16 weight noise already accepted elsewhere.
    c = math.sqrt(2.0 / math.pi)
    return 0.5 * x * (1.0 + jnp.tanh(c * (x + 0.044715 * x * x * x)))


# ----------------------------------------------------------------------------
# Single fused kernel: embeddings -> transformer stack -> cls head
# Grid = (B, depth).  Token activations carried across depth in VMEM scratch.
# ----------------------------------------------------------------------------
def _context_transformer_kernel(
        patches_ref, txt_ref, base_ref, emb_w_ref, emb_b_ref, ft_w_ref, ft_b_ref,
        wqkv_ref, bqkv_ref, wo_ref, bo_ref, ln1_g_ref, ln1_b_ref,
        w1_ref, b1_ref, w2_ref, b2_ref, ln2_g_ref, ln2_b_ref,
        hw1_ref, hb1_ref, hw2_ref, hb2_ref,
        o_ref, x_sc,
        *, dim, heads, n_cnn, n_txt, s_valid, eps=1e-5):
    l = pl.program_id(1)
    dh = dim // heads
    s_pad = x_sc.shape[0]

    # --- layer 0: build the token stream for this batch item ---------------
    @pl.when(l == 0)
    def _():
        # base already holds: row0 = cls_token + pos[0], rows 1..n_cnn = pos[1:],
        # zeros for text + pad rows.
        x_sc[...] = base_ref[...]
        pe = jnp.dot(patches_ref[0], emb_w_ref[...],
                     preferred_element_type=jnp.float32) + emb_b_ref[...]
        x_sc[1:1 + n_cnn, :] = base_ref[1:1 + n_cnn, :] + pe
        te = jnp.dot(txt_ref[0], ft_w_ref[...],
                     preferred_element_type=jnp.float32) + ft_b_ref[...]
        x_sc[1 + n_cnn:1 + n_cnn + n_txt, :] = te

    x = x_sc[...]                                    # (S_pad, D) f32 residual stream
    xb = x.astype(jnp.bfloat16)

    # --- multi-head self-attention ------------------------------------------
    # One lane-dense QKV GEMM; attention scale pre-folded into the Q weights.
    qkv = jnp.dot(xb, wqkv_ref[0],
                  preferred_element_type=jnp.float32) + bqkv_ref[0]   # (S_pad, 3D)

    # mask padded key columns (token index >= s_valid)
    key_idx = jax.lax.broadcasted_iota(jnp.int32, (1, s_pad), 1)
    key_mask = jnp.where(key_idx < s_valid, 0.0, -1e30).astype(jnp.float32)

    ctx_parts = []
    for h in range(heads):                           # static unroll over heads
        qh = qkv[:, h * dh:(h + 1) * dh].astype(jnp.bfloat16)
        kh = qkv[:, dim + h * dh:dim + (h + 1) * dh].astype(jnp.bfloat16)
        vh = qkv[:, 2 * dim + h * dh:2 * dim + (h + 1) * dh].astype(jnp.bfloat16)
        s = jax.lax.dot_general(qh, kh, (((1,), (1,)), ((), ())),
                                preferred_element_type=jnp.float32)   # (S_pad, S_pad)
        s = s + key_mask
        s = s - jnp.max(s, axis=-1, keepdims=True)
        p = jnp.exp(s)
        p = p * pl.reciprocal(jnp.sum(p, axis=-1, keepdims=True), approx=True)
        ctx_parts.append(jnp.dot(p.astype(jnp.bfloat16), vh,
                                 preferred_element_type=jnp.float32))
    ctx = jnp.concatenate(ctx_parts, axis=-1)        # (S_pad, D) == concat(heads)

    # single lane-dense output projection (replaces per-head K=32 matmuls + sum)
    attn = jnp.dot(ctx.astype(jnp.bfloat16), wo_ref[0],
                   preferred_element_type=jnp.float32) + bo_ref[0]

    def layer_norm(y, g, b):
        mu = jnp.mean(y, axis=-1, keepdims=True)
        var = jnp.mean(jnp.square(y - mu), axis=-1, keepdims=True)
        return (y - mu) * jax.lax.rsqrt(var + eps) * g + b

    # post-norm residual blocks (dropout == identity in eval)
    x1 = layer_norm(x + attn, ln1_g_ref[0], ln1_b_ref[0])
    h1 = jnp.maximum(
        jnp.dot(x1.astype(jnp.bfloat16), w1_ref[0],
                preferred_element_type=jnp.float32) + b1_ref[0], 0.0)
    ff = jnp.dot(h1.astype(jnp.bfloat16), w2_ref[0],
                 preferred_element_type=jnp.float32) + b2_ref[0]
    x2 = layer_norm(x1 + ff, ln2_g_ref[0], ln2_b_ref[0])

    x_sc[...] = x2                                   # carry to next layer

    # --- last layer: classification head on the cls token only -------------
    @pl.when(l == pl.num_programs(1) - 1)
    def _():
        cls = x2[0:1, :].astype(jnp.bfloat16)        # (1, D)
        hid = jnp.dot(cls, hw1_ref[...],
                      preferred_element_type=jnp.float32) + hb1_ref[...]
        hid = _gelu_tanh(hid)
        logits = jnp.dot(hid.astype(jnp.bfloat16), hw2_ref[...],
                         preferred_element_type=jnp.float32) + hb2_ref[...]
        o_ref[0] = logits.astype(o_ref.dtype)


# ----------------------------------------------------------------------------
# Parameter init
# ----------------------------------------------------------------------------
def init_params(key, *, num_classes, dim, depth, heads, mlp_dim,
                num_cnn_features, dim_cnn_features, dim_fasttext,
                patch, img_channels):
    dh = dim // heads
    scale = 1.0 / math.sqrt(dh)
    keys = jax.random.split(key, 8 + 4 * depth)
    kit = iter(keys)

    def dense(din, dout):
        w = jax.random.normal(next(kit), (din, dout), jnp.float32) * 0.02
        return w, jnp.zeros((dout,), jnp.float32)

    # Stand-in backbone "conv" + cnn_feature_to_embedding folded into one linear.
    # TODO(synk): full pretrained resnet50 backbone is not reproduced in-script;
    #             the fold is exact only for this linear stand-in.
    patch_dim = img_channels * patch * patch
    bb_w, bb_b = dense(patch_dim, dim_cnn_features)
    cw, cb = dense(dim_cnn_features, dim)
    emb_w = bb_w @ cw                     # (patch_dim, dim)
    emb_b = bb_b @ cw + cb                # (dim,)

    fw, fb = dense(dim_fasttext, dim)     # fasttext_feature_to_embedding
    hw1, hb1 = dense(dim, mlp_dim)        # mlp_head[0]
    hw2, hb2 = dense(mlp_dim, num_classes)  # mlp_head[3]

    wqkv_l, bqkv_l, wo_l, bo_l = [], [], [], []
    w1_l, b1_l, w2_l, b2_l = [], [], [], []
    for _ in range(depth):
        wqkv, bqkv = dense(dim, 3 * dim)          # columns: [q_allheads|k|v]
        # fold the 1/sqrt(head_dim) attention scale into the Q projection
        wqkv = wqkv.at[:, :dim].multiply(scale)
        bqkv = bqkv.at[:dim].multiply(scale)
        wo, bo = dense(dim, dim)
        w1, b1 = dense(dim, mlp_dim)
        w2, b2 = dense(mlp_dim, dim)
        wqkv_l.append(wqkv); bqkv_l.append(bqkv)
        wo_l.append(wo); bo_l.append(bo)
        w1_l.append(w1); b1_l.append(b1); w2_l.append(w2); b2_l.append(b2)

    stack = dict(
        wqkv=jnp.stack(wqkv_l).astype(jnp.bfloat16),     # (depth, D, 3D)
        bqkv=jnp.stack(bqkv_l)[:, None, :],              # (depth, 1, 3D)
        wo=jnp.stack(wo_l).astype(jnp.bfloat16),          # (depth, D, D)
        bo=jnp.stack(bo_l)[:, None, :],
        ln1_g=jnp.ones((depth, 1, dim), jnp.float32),
        ln1_b=jnp.zeros((depth, 1, dim), jnp.float32),
        w1=jnp.stack(w1_l).astype(jnp.bfloat16),
        b1=jnp.stack(b1_l)[:, None, :],
        w2=jnp.stack(w2_l).astype(jnp.bfloat16),
        b2=jnp.stack(b2_l)[:, None, :],
        ln2_g=jnp.ones((depth, 1, dim), jnp.float32),
        ln2_b=jnp.zeros((depth, 1, dim), jnp.float32),
    )

    return dict(
        emb_w=emb_w.astype(jnp.bfloat16), emb_b=emb_b.reshape(1, dim),
        ft2emb_w=fw.astype(jnp.bfloat16), ft2emb_b=fb.reshape(1, dim),
        cls_token=jax.random.normal(next(kit), (1, 1, dim), jnp.float32),
        pos_embedding=jax.random.normal(
            next(kit), (1, num_cnn_features + 1, dim), jnp.float32),
        head_w1=hw1.astype(jnp.bfloat16), head_b1=hb1.reshape(1, mlp_dim),
        head_w2=hw2.astype(jnp.bfloat16), head_b2=hb2.reshape(1, num_classes),
        stack=stack)


# ----------------------------------------------------------------------------
# Forward wrapper: single pallas_call
# ----------------------------------------------------------------------------
def context_transformer_forward(img, txt, params, *, heads, depth, patch):
    B, C, H, W = img.shape                       # NCHW (PyTorch convention)
    hp, wp = H // patch, W // patch
    n_cnn = hp * wp
    dim = params["pos_embedding"].shape[-1]
    T = txt.shape[1]
    dim_ft = txt.shape[-1]
    mlp_dim = params["head_w1"].shape[1]
    num_classes = params["head_w2"].shape[1]
    patch_dim = C * patch * patch

    S = 1 + n_cnn + T
    S_pad = ((S + 7) // 8) * 8                   # sublane-align; pad keys are masked

    # patchify (tiny XLA glue)
    patches = img.reshape(B, C, hp, patch, wp, patch)
    patches = patches.transpose(0, 2, 4, 1, 3, 5).reshape(B, n_cnn, patch_dim)

    # cls-token + positional embedding rows (pos added only to cls + cnn tokens,
    # matching the reference); zeros for text + pad rows.
    pos = params["pos_embedding"].reshape(n_cnn + 1, dim)
    cls = params["cls_token"].reshape(1, dim)
    base = jnp.concatenate(
        [cls + pos[0:1], pos[1:],
         jnp.zeros((S_pad - (n_cnn + 1), dim), jnp.float32)], axis=0)

    sp = params["stack"]
    kernel = functools.partial(_context_transformer_kernel, dim=dim, heads=heads,
                               n_cnn=n_cnn, n_txt=T, s_valid=S)

    out = pl.pallas_call(
        kernel,
        out_shape=jax.ShapeDtypeStruct((B, 1, num_classes), jnp.float32),
        grid=(B, depth),
        in_specs=[
            pl.BlockSpec((1, n_cnn, patch_dim), lambda b, l: (b, 0, 0)),   # patches
            pl.BlockSpec((1, T, dim_ft), lambda b, l: (b, 0, 0)),          # txt
            pl.BlockSpec((S_pad, dim), lambda b, l: (0, 0)),               # base
            pl.BlockSpec((patch_dim, dim), lambda b, l: (0, 0)),           # emb_w
            pl.BlockSpec((1, dim), lambda b, l: (0, 0)),                   # emb_b
            pl.BlockSpec((dim_ft, dim), lambda b, l: (0, 0)),              # ft_w
            pl.BlockSpec((1, dim), lambda b, l: (0, 0)),                   # ft_b
            pl.BlockSpec((1, dim, 3 * dim), lambda b, l: (l, 0, 0)),       # wqkv
            pl.BlockSpec((1, 1, 3 * dim), lambda b, l: (l, 0, 0)),         # bqkv
            pl.BlockSpec((1, dim, dim), lambda b, l: (l, 0, 0)),           # wo
            pl.BlockSpec((1, 1, dim), lambda b, l: (l, 0, 0)),             # bo
            pl.BlockSpec((1, 1, dim), lambda b, l: (l, 0, 0)),             # ln1_g
            pl.BlockSpec((1, 1, dim), lambda b, l: (l, 0, 0)),             # ln1_b
            pl.BlockSpec((1, dim, mlp_dim), lambda b, l: (l, 0, 0)),       # w1
            pl.BlockSpec((1, 1, mlp_dim), lambda b, l: (l, 0, 0)),         # b1
            pl.BlockSpec((1, mlp_dim, dim), lambda b, l: (l, 0, 0)),       # w2
            pl.BlockSpec((1, 1, dim), lambda b, l: (l, 0, 0)),             # b2
            pl.BlockSpec((1, 1, dim), lambda b, l: (l, 0, 0)),             # ln2_g
            pl.BlockSpec((1, 1, dim), lambda b, l: (l, 0, 0)),             # ln2_b
            pl.BlockSpec((dim, mlp_dim), lambda b, l: (0, 0)),             # head_w1
            pl.BlockSpec((1, mlp_dim), lambda b, l: (0, 0)),               # head_b1
            pl.BlockSpec((mlp_dim, num_classes), lambda b, l: (0, 0)),     # head_w2
            pl.BlockSpec((1, num_classes), lambda b, l: (0, 0)),           # head_b2
        ],
        out_specs=pl.BlockSpec((1, 1, num_classes), lambda b, l: (b, 0, 0)),
        scratch_shapes=[pltpu.VMEM((S_pad, dim), jnp.float32)],
        compiler_params=pltpu.CompilerParams(
            # batch axis parallel (2nd TensorCore on v7x; harmless on v5e/v6e),
            # depth axis is the resident/carry axis.
            dimension_semantics=("parallel", "arbitrary")),
    )(patches.astype(jnp.bfloat16), txt.astype(jnp.bfloat16), base,
      params["emb_w"], params["emb_b"], params["ft2emb_w"], params["ft2emb_b"],
      sp["wqkv"], sp["bqkv"], sp["wo"], sp["bo"], sp["ln1_g"], sp["ln1_b"],
      sp["w1"], sp["b1"], sp["w2"], sp["b2"], sp["ln2_g"], sp["ln2_b"],
      params["head_w1"], params["head_b1"], params["head_w2"], params["head_b2"])

    return out.reshape(B, num_classes)


# ----------------------------------------------------------------------------
if __name__ == "__main__":
    # Module-implied constants: 64 cnn tokens, 2048 cnn feature dim, 300-dim
    # fasttext features. dim/mlp_dim chosen lane-dense (128/256) for the demo.
    num_classes, dim, depth, heads, mlp_dim = 10, 128, 2, 4, 256
    num_cnn_features, dim_cnn_features, dim_fasttext = 64, 2048, 300
    B, C, H, W = 2, 3, 16, 16
    PATCH = 2            # 16/2 * 16/2 = 64 cnn tokens, matching num_cnn_features
    T = 6                # number of fasttext text tokens

    key = jax.random.PRNGKey(0)
    k_img, k_txt, k_par = jax.random.split(key, 3)
    img = jax.random.normal(k_img, (B, C, H, W), jnp.float32)        # NCHW input
    txt = jax.random.normal(k_txt, (B, T, dim_fasttext), jnp.float32)

    params = init_params(
        k_par, num_classes=num_classes, dim=dim, depth=depth, heads=heads,
        mlp_dim=mlp_dim, num_cnn_features=num_cnn_features,
        dim_cnn_features=dim_cnn_features, dim_fasttext=dim_fasttext,
        patch=PATCH, img_channels=C)

    fwd = jax.jit(functools.partial(context_transformer_forward,
                                    heads=heads, depth=depth, patch=PATCH))
    out = fwd(img, txt, params)
    out = jax.block_until_ready(out)
    assert out.shape == (B, num_classes), out.shape
    assert bool(jnp.all(jnp.isfinite(out)))
    print("KERNEL_OK")
</pallas_src>

<mosaic_0001>
module attributes {stable_mosaic.version = 11 : i64} {
  func.func @_context_transformer_kernel(%arg0: i32, %arg1: i32, %arg2: memref<1x64x12xbf16, #tpu.memory_space<vmem>>, %arg3: memref<1x6x300xbf16, #tpu.memory_space<vmem>>, %arg4: memref<72x128xf32, #tpu.memory_space<vmem>>, %arg5: memref<12x128xbf16, #tpu.memory_space<vmem>>, %arg6: memref<1x128xf32, #tpu.memory_space<vmem>>, %arg7: memref<300x128xbf16, #tpu.memory_space<vmem>>, %arg8: memref<1x128xf32, #tpu.memory_space<vmem>>, %arg9: memref<1x128x384xbf16, #tpu.memory_space<vmem>>, %arg10: memref<1x1x384xf32, #tpu.memory_space<vmem>>, %arg11: memref<1x128x128xbf16, #tpu.memory_space<vmem>>, %arg12: memref<1x1x128xf32, #tpu.memory_space<vmem>>, %arg13: memref<1x1x128xf32, #tpu.memory_space<vmem>>, %arg14: memref<1x1x128xf32, #tpu.memory_space<vmem>>, %arg15: memref<1x128x256xbf16, #tpu.memory_space<vmem>>, %arg16: memref<1x1x256xf32, #tpu.memory_space<vmem>>, %arg17: memref<1x256x128xbf16, #tpu.memory_space<vmem>>, %arg18: memref<1x1x128xf32, #tpu.memory_space<vmem>>, %arg19: memref<1x1x128xf32, #tpu.memory_space<vmem>>, %arg20: memref<1x1x128xf32, #tpu.memory_space<vmem>>, %arg21: memref<128x256xbf16, #tpu.memory_space<vmem>>, %arg22: memref<1x256xf32, #tpu.memory_space<vmem>>, %arg23: memref<256x10xbf16, #tpu.memory_space<vmem>>, %arg24: memref<1x10xf32, #tpu.memory_space<vmem>>, %arg25: memref<1x1x10xf32, #tpu.memory_space<vmem>>, %arg26: memref<72x128xf32, #tpu.memory_space<vmem>>) attributes {dimension_semantics = [#tpu.dimension_semantics<parallel>, #tpu.dimension_semantics<arbitrary>], iteration_bounds = array<i64: 2, 2>, scalar_prefetch = 0 : i64, scratch_operands = 1 : i64, tpu.core_type = #tpu.core_type<tc>, window_params = [{transform_indices = @transform_0, window_bounds = array<i64: 1, 64, 12>}, {transform_indices = @transform_1, window_bounds = array<i64: 1, 6, 300>}, {pipeline_mode = #tpu.pipeline_mode<synchronous>, transform_indices = @transform_2, window_bounds = array<i64: 72, 128>}, {pipeline_mode = #tpu.pipeline_mode<synchronous>, transform_indices = @transform_3, window_bounds = array<i64: 12, 128>}, {pipeline_mode = #tpu.pipeline_mode<synchronous>, transform_indices = @transform_4, window_bounds = array<i64: 1, 128>}, {pipeline_mode = #tpu.pipeline_mode<synchronous>, transform_indices = @transform_5, window_bounds = array<i64: 300, 128>}, {pipeline_mode = #tpu.pipeline_mode<synchronous>, transform_indices = @transform_6, window_bounds = array<i64: 1, 128>}, {transform_indices = @transform_7, window_bounds = array<i64: 1, 128, 384>}, {transform_indices = @transform_8, window_bounds = array<i64: 1, 1, 384>}, {transform_indices = @transform_9, window_bounds = array<i64: 1, 128, 128>}, {transform_indices = @transform_10, window_bounds = array<i64: 1, 1, 128>}, {transform_indices = @transform_11, window_bounds = array<i64: 1, 1, 128>}, {transform_indices = @transform_12, window_bounds = array<i64: 1, 1, 128>}, {transform_indices = @transform_13, window_bounds = array<i64: 1, 128, 256>}, {transform_indices = @transform_14, window_bounds = array<i64: 1, 1, 256>}, {transform_indices = @transform_15, window_bounds = array<i64: 1, 256, 128>}, {transform_indices = @transform_16, window_bounds = array<i64: 1, 1, 128>}, {transform_indices = @transform_17, window_bounds = array<i64: 1, 1, 128>}, {transform_indices = @transform_18, window_bounds = array<i64: 1, 1, 128>}, {pipeline_mode = #tpu.pipeline_mode<synchronous>, transform_indices = @transform_19, window_bounds = array<i64: 128, 256>}, {pipeline_mode = #tpu.pipeline_mode<synchronous>, transform_indices = @transform_20, window_bounds = array<i64: 1, 256>}, {pipeline_mode = #tpu.pipeline_mode<synchronous>, transform_indices = @transform_21, window_bounds = array<i64: 256, 10>}, {pipeline_mode = #tpu.pipeline_mode<synchronous>, transform_indices = @transform_22, window_bounds = array<i64: 1, 10>}, {transform_indices = @transform_23, window_bounds = array<i64: 1, 1, 10>}]} {
    %c0_i32 = arith.constant 0 : i32
    %0 = arith.cmpi eq, %arg1, %c0_i32 : i32
    %1 = arith.extui %0 : i1 to i32
    %c0_i32_0 = arith.constant 0 : i32
    %2 = arith.cmpi ne, %1, %c0_i32_0 : i32
    scf.if %2 {
      %c0_73 = arith.constant 0 : index
      %c0_74 = arith.constant 0 : index
      %187 = vector.load %arg4[%c0_73, %c0_74] : memref<72x128xf32, #tpu.memory_space<vmem>>, vector<72x128xf32>
      %c0_75 = arith.constant 0 : index
      %c0_76 = arith.constant 0 : index
      %188 = vector.load %arg26[%c0_75, %c0_76] : memref<72x128xf32, #tpu.memory_space<vmem>>, vector<72x128xf32>
      tpu.vector_store %arg26[%c0_75, %c0_76], %187 {strides = array<i32>} : memref<72x128xf32, #tpu.memory_space<vmem>>, vector<72x128xf32>,
      %c0_77 = arith.constant 0 : index
      %c0_78 = arith.constant 0 : index
      %c0_79 = arith.constant 0 : index
      %189 = vector.load %arg2[%c0_77, %c0_78, %c0_79] : memref<1x64x12xbf16, #tpu.memory_space<vmem>>, vector<1x64x12xbf16>
      %190 = vector.shape_cast %189 : vector<1x64x12xbf16> to vector<64x12xbf16>
      %c0_80 = arith.constant 0 : index
      %c0_81 = arith.constant 0 : index
      %191 = vector.load %arg5[%c0_80, %c0_81] : memref<12x128xbf16, #tpu.memory_space<vmem>>, vector<12x128xbf16>
      %cst_82 = arith.constant dense<0.000000e+00> : vector<64x128xf32>
      %192 = tpu.matmul %190, %191, %cst_82 {dimension_numbers = #tpu.dot_dimension_numbers<[1], [0], [0], [1], [0, 0, 1, 1], [], []>} : vector<64x12xbf16>, vector<12x128xbf16>, vector<64x128xf32> -> vector<64x128xf32>
      %c0_83 = arith.constant 0 : index
      %c0_84 = arith.constant 0 : index
      %193 = vector.load %arg6[%c0_83, %c0_84] : memref<1x128xf32, #tpu.memory_space<vmem>>, vector<1x128xf32>
      %194 = vector.broadcast %193 : vector<1x128xf32> to vector<64x128xf32>
      %195 = arith.addf %192, %194 : vector<64x128xf32>
      %c1 = arith.constant 1 : index
      %c0_85 = arith.constant 0 : index
      %196 = vector.load %arg4[%c1, %c0_85] : memref<72x128xf32, #tpu.memory_space<vmem>>, vector<64x128xf32>
      %197 = arith.addf %196, %195 : vector<64x128xf32>
      %c1_86 = arith.constant 1 : index
      %c0_87 = arith.constant 0 : index
      %198 = vector.load %arg26[%c1_86, %c0_87] : memref<72x128xf32, #tpu.memory_space<vmem>>, vector<64x128xf32>
      tpu.vector_store %arg26[%c1_86, %c0_87], %197 {strides = array<i32>} : memref<72x128xf32, #tpu.memory_space<vmem>>, vector<64x128xf32>,
      %c0_88 = arith.constant 0 : index
      %c0_89 = arith.constant 0 : index
      %c0_90 = arith.constant 0 : index
      %199 = vector.load %arg3[%c0_88, %c0_89, %c0_90] : memref<1x6x300xbf16, #tpu.memory_space<vmem>>, vector<1x6x300xbf16>
      %200 = vector.shape_cast %199 : vector<1x6x300xbf16> to vector<6x300xbf16>
      %c0_91 = arith.constant 0 : index
      %c0_92 = arith.constant 0 : index
      %201 = vector.load %arg7[%c0_91, %c0_92] : memref<300x128xbf16, #tpu.memory_space<vmem>>, vector<300x128xbf16>
      %cst_93 = arith.constant dense<0.000000e+00> : vector<6x128xf32>
      %202 = tpu.matmul %200, %201, %cst_93 {dimension_numbers = #tpu.dot_dimension_numbers<[1], [0], [0], [1], [0, 0, 1, 1], [], []>} : vector<6x300xbf16>, vector<300x128xbf16>, vector<6x128xf32> -> vector<6x128xf32>
      %c0_94 = arith.constant 0 : index
      %c0_95 = arith.constant 0 : index
      %203 = vector.load %arg8[%c0_94, %c0_95] : memref<1x128xf32, #tpu.memory_space<vmem>>, vector<1x128xf32>
      %204 = vector.broadcast %203 : vector<1x128xf32> to vector<6x128xf32>
      %205 = arith.addf %202, %204 : vector<6x128xf32>
      %c65 = arith.constant 65 : index
      %c0_96 = arith.constant 0 : index
      %206 = vector.load %arg26[%c65, %c0_96] : memref<72x128xf32, #tpu.memory_space<vmem>>, vector<6x128xf32>
      tpu.vector_store %arg26[%c65, %c0_96], %205 {strides = array<i32>} : memref<72x128xf32, #tpu.memory_space<vmem>>, vector<6x128xf32>,
    } else {
    }
    %c0 = arith.constant 0 : index
    %c0_1 = arith.constant 0 : index
    %3 = vector.load %arg26[%c0, %c0_1] : memref<72x128xf32, #tpu.memory_space<vmem>>, vector<72x128xf32>
    %4 = arith.truncf %3 : vector<72x128xf32> to vector<72x128xbf16>
    %c0_2 = arith.constant 0 : index
    %c0_3 = arith.constant 0 : index
    %c0_4 = arith.constant 0 : index
    %5 = vector.load %arg9[%c0_2, %c0_3, %c0_4] : memref<1x128x384xbf16, #tpu.memory_space<vmem>>, vector<1x128x384xbf16>
    %6 = vector.shape_cast %5 : vector<1x128x384xbf16> to vector<128x384xbf16>
    %cst = arith.constant dense<0.000000e+00> : vector<72x384xf32>
    %7 = tpu.matmul %4, %6, %cst {dimension_numbers = #tpu.dot_dimension_numbers<[1], [0], [0], [1], [0, 0, 1, 1], [], []>} : vector<72x128xbf16>, vector<128x384xbf16>, vector<72x384xf32> -> vector<72x384xf32>
    %c0_5 = arith.constant 0 : index
    %c0_6 = arith.constant 0 : index
    %c0_7 = arith.constant 0 : index
    %8 = vector.load %arg10[%c0_5, %c0_6, %c0_7] : memref<1x1x384xf32, #tpu.memory_space<vmem>>, vector<1x1x384xf32>
    %9 = vector.shape_cast %8 : vector<1x1x384xf32> to vector<1x384xf32>
    %10 = vector.broadcast %9 : vector<1x384xf32> to vector<72x384xf32>
    %11 = arith.addf %7, %10 : vector<72x384xf32>
    %12 = tpu.iota {dimensions = array<i32: 1>} : vector<1x72xi32>
    %c71_i32 = arith.constant 71 : i32
    %13 = vector.broadcast %c71_i32 : i32 to vector<1x72xi32>
    %14 = arith.cmpi slt, %12, %13 : vector<1x72xi32>
    %cst_8 = arith.constant 0.000000e+00 : f32
    %cst_9 = arith.constant -1.000000e+30 : f32
    %15 = vector.broadcast %cst_8 : f32 to vector<1x72xf32>
    %16 = vector.broadcast %cst_9 : f32 to vector<1x72xf32>
    %17 = arith.select %14, %15, %16 : vector<1x72xi1>, vector<1x72xf32>
    %18 = vector.extract_strided_slice %11 {offsets = [0, 0], sizes = [72, 32], strides = [1, 1]} : vector<72x384xf32> to vector<72x32xf32>
    %19 = arith.truncf %18 : vector<72x32xf32> to vector<72x32xbf16>
    %20 = vector.extract_strided_slice %11 {offsets = [0, 128], sizes = [72, 32], strides = [1, 1]} : vector<72x384xf32> to vector<72x32xf32>
    %21 = arith.truncf %20 : vector<72x32xf32> to vector<72x32xbf16>
    %22 = vector.extract_strided_slice %11 {offsets = [0, 256], sizes = [72, 32], strides = [1, 1]} : vector<72x384xf32> to vector<72x32xf32>
    %23 = arith.truncf %22 : vector<72x32xf32> to vector<72x32xbf16>
    %cst_10 = arith.constant dense<0.000000e+00> : vector<72x72xf32>
    %24 = tpu.matmul %19, %21, %cst_10 {dimension_numbers = #tpu.dot_dimension_numbers<[1], [1], [0], [0], [0, 0, 1, 0], [], []>} : vector<72x32xbf16>, vector<72x32xbf16>, vector<72x72xf32> -> vector<72x72xf32>
    %25 = vector.broadcast %17 : vector<1x72xf32> to vector<72x72xf32>
    %26 = arith.addf %24, %25 : vector<72x72xf32>
    %cst_11 = arith.constant dense<0xFF800000> : vector<72xf32>
    %27 = vector.multi_reduction <maximumf>, %26, %cst_11 [1] : vector<72x72xf32> to vector<72xf32>
    %28 = vector.shape_cast %27 : vector<72xf32> to vector<72x1xf32>
    %29 = vector.broadcast %28 : vector<72x1xf32> to vector<72x72xf32>
    %30 = arith.subf %26, %29 : vector<72x72xf32>
    %31 = math.exp %30 : vector<72x72xf32>
    %cst_12 = arith.constant dense<0.000000e+00> : vector<72xf32>
    %32 = vector.multi_reduction <add>, %31, %cst_12 [1] : vector<72x72xf32> to vector<72xf32>
    %33 = vector.shape_cast %32 : vector<72xf32> to vector<72x1xf32>
    %34 = tpu.reciprocal %33 {approx = true} : vector<72x1xf32> -> vector<72x1xf32>
    %35 = vector.broadcast %34 : vector<72x1xf32> to vector<72x72xf32>
    %36 = arith.mulf %31, %35 : vector<72x72xf32>
    %37 = arith.truncf %36 : vector<72x72xf32> to vector<72x72xbf16>
    %cst_13 = arith.constant dense<0.000000e+00> : vector<72x32xf32>
    %38 = tpu.matmul %37, %23, %cst_13 {dimension_numbers = #tpu.dot_dimension_numbers<[1], [0], [0], [1], [0, 0, 1, 1], [], []>} : vector<72x72xbf16>, vector<72x32xbf16>, vector<72x32xf32> -> vector<72x32xf32>
    %39 = vector.extract_strided_slice %11 {offsets = [0, 32], sizes = [72, 32], strides = [1, 1]} : vector<72x384xf32> to vector<72x32xf32>
    %40 = arith.truncf %39 : vector<72x32xf32> to vector<72x32xbf16>
    %41 = vector.extract_strided_slice %11 {offsets = [0, 160], sizes = [72, 32], strides = [1, 1]} : vector<72x384xf32> to vector<72x32xf32>
    %42 = arith.truncf %41 : vector<72x32xf32> to vector<72x32xbf16>
    %43 = vector.extract_strided_slice %11 {offsets = [0, 288], sizes = [72, 32], strides = [1, 1]} : vector<72x384xf32> to vector<72x32xf32>
    %44 = arith.truncf %43 : vector<72x32xf32> to vector<72x32xbf16>
    %cst_14 = arith.constant dense<0.000000e+00> : vector<72x72xf32>
    %45 = tpu.matmul %40, %42, %cst_14 {dimension_numbers = #tpu.dot_dimension_numbers<[1], [1], [0], [0], [0, 0, 1, 0], [], []>} : vector<72x32xbf16>, vector<72x32xbf16>, vector<72x72xf32> -> vector<72x72xf32>
    %46 = vector.broadcast %17 : vector<1x72xf32> to vector<72x72xf32>
    %47 = arith.addf %45, %46 : vector<72x72xf32>
    %cst_15 = arith.constant dense<0xFF800000> : vector<72xf32>
    %48 = vector.multi_reduction <maximumf>, %47, %cst_15 [1] : vector<72x72xf32> to vector<72xf32>
    %49 = vector.shape_cast %48 : vector<72xf32> to vector<72x1xf32>
    %50 = vector.broadcast %49 : vector<72x1xf32> to vector<72x72xf32>
    %51 = arith.subf %47, %50 : vector<72x72xf32>
    %52 = math.exp %51 : vector<72x72xf32>
    %cst_16 = arith.constant dense<0.000000e+00> : vector<72xf32>
    %53 = vector.multi_reduction <add>, %52, %cst_16 [1] : vector<72x72xf32> to vector<72xf32>
    %54 = vector.shape_cast %53 : vector<72xf32> to vector<72x1xf32>
    %55 = tpu.reciprocal %54 {approx = true} : vector<72x1xf32> -> vector<72x1xf32>
    %56 = vector.broadcast %55 : vector<72x1xf32> to vector<72x72xf32>
    %57 = arith.mulf %52, %56 : vector<72x72xf32>
    %58 = arith.truncf %57 : vector<72x72xf32> to vector<72x72xbf16>
    %cst_17 = arith.constant dense<0.000000e+00> : vector<72x32xf32>
    %59 = tpu.matmul %58, %44, %cst_17 {dimension_numbers = #tpu.dot_dimension_numbers<[1], [0], [0], [1], [0, 0, 1, 1], [], []>} : vector<72x72xbf16>, vector<72x32xbf16>, vector<72x32xf32> -> vector<72x32xf32>
    %60 = vector.extract_strided_slice %11 {offsets = [0, 64], sizes = [72, 32], strides = [1, 1]} : vector<72x384xf32> to vector<72x32xf32>
    %61 = arith.truncf %60 : vector<72x32xf32> to vector<72x32xbf16>
    %62 = vector.extract_strided_slice %11 {offsets = [0, 192], sizes = [72, 32], strides = [1, 1]} : vector<72x384xf32> to vector<72x32xf32>
    %63 = arith.truncf %62 : vector<72x32xf32> to vector<72x32xbf16>
    %64 = vector.extract_strided_slice %11 {offsets = [0, 320], sizes = [72, 32], strides = [1, 1]} : vector<72x384xf32> to vector<72x32xf32>
    %65 = arith.truncf %64 : vector<72x32xf32> to vector<72x32xbf16>
    %cst_18 = arith.constant dense<0.000000e+00> : vector<72x72xf32>
    %66 = tpu.matmul %61, %63, %cst_18 {dimension_numbers = #tpu.dot_dimension_numbers<[1], [1], [0], [0], [0, 0, 1, 0], [], []>} : vector<72x32xbf16>, vector<72x32xbf16>, vector<72x72xf32> -> vector<72x72xf32>
    %67 = vector.broadcast %17 : vector<1x72xf32> to vector<72x72xf32>
    %68 = arith.addf %66, %67 : vector<72x72xf32>
    %cst_19 = arith.constant dense<0xFF800000> : vector<72xf32>
    %69 = vector.multi_reduction <maximumf>, %68, %cst_19 [1] : vector<72x72xf32> to vector<72xf32>
    %70 = vector.shape_cast %69 : vector<72xf32> to vector<72x1xf32>
    %71 = vector.broadcast %70 : vector<72x1xf32> to vector<72x72xf32>
    %72 = arith.subf %68, %71 : vector<72x72xf32>
    %73 = math.exp %72 : vector<72x72xf32>
    %cst_20 = arith.constant dense<0.000000e+00> : vector<72xf32>
    %74 = vector.multi_reduction <add>, %73, %cst_20 [1] : vector<72x72xf32> to vector<72xf32>
    %75 = vector.shape_cast %74 : vector<72xf32> to vector<72x1xf32>
    %76 = tpu.reciprocal %75 {approx = true} : vector<72x1xf32> -> vector<72x1xf32>
    %77 = vector.broadcast %76 : vector<72x1xf32> to vector<72x72xf32>
    %78 = arith.mulf %73, %77 : vector<72x72xf32>
    %79 = arith.truncf %78 : vector<72x72xf32> to vector<72x72xbf16>
    %cst_21 = arith.constant dense<0.000000e+00> : vector<72x32xf32>
    %80 = tpu.matmul %79, %65, %cst_21 {dimension_numbers = #tpu.dot_dimension_numbers<[1], [0], [0], [1], [0, 0, 1, 1], [], []>} : vector<72x72xbf16>, vector<72x32xbf16>, vector<72x32xf32> -> vector<72x32xf32>
    %81 = vector.extract_strided_slice %11 {offsets = [0, 96], sizes = [72, 32], strides = [1, 1]} : vector<72x384xf32> to vector<72x32xf32>
    %82 = arith.truncf %81 : vector<72x32xf32> to vector<72x32xbf16>
    %83 = vector.extract_strided_slice %11 {offsets = [0, 224], sizes = [72, 32], strides = [1, 1]} : vector<72x384xf32> to vector<72x32xf32>
    %84 = arith.truncf %83 : vector<72x32xf32> to vector<72x32xbf16>
    %85 = vector.extract_strided_slice %11 {offsets = [0, 352], sizes = [72, 32], strides = [1, 1]} : vector<72x384xf32> to vector<72x32xf32>
    %86 = arith.truncf %85 : vector<72x32xf32> to vector<72x32xbf16>
    %cst_22 = arith.constant dense<0.000000e+00> : vector<72x72xf32>
    %87 = tpu.matmul %82, %84, %cst_22 {dimension_numbers = #tpu.dot_dimension_numbers<[1], [1], [0], [0], [0, 0, 1, 0], [], []>} : vector<72x32xbf16>, vector<72x32xbf16>, vector<72x72xf32> -> vector<72x72xf32>
    %88 = vector.broadcast %17 : vector<1x72xf32> to vector<72x72xf32>
    %89 = arith.addf %87, %88 : vector<72x72xf32>
    %cst_23 = arith.constant dense<0xFF800000> : vector<72xf32>
    %90 = vector.multi_reduction <maximumf>, %89, %cst_23 [1] : vector<72x72xf32> to vector<72xf32>
    %91 = vector.shape_cast %90 : vector<72xf32> to vector<72x1xf32>
    %92 = vector.broadcast %91 : vector<72x1xf32> to vector<72x72xf32>
    %93 = arith.subf %89, %92 : vector<72x72xf32>
    %94 = math.exp %93 : vector<72x72xf32>
    %cst_24 = arith.constant dense<0.000000e+00> : vector<72xf32>
    %95 = vector.multi_reduction <add>, %94, %cst_24 [1] : vector<72x72xf32> to vector<72xf32>
    %96 = vector.shape_cast %95 : vector<72xf32> to vector<72x1xf32>
    %97 = tpu.reciprocal %96 {approx = true} : vector<72x1xf32> -> vector<72x1xf32>
    %98 = vector.broadcast %97 : vector<72x1xf32> to vector<72x72xf32>
    %99 = arith.mulf %94, %98 : vector<72x72xf32>
    %100 = arith.truncf %99 : vector<72x72xf32> to vector<72x72xbf16>
    %cst_25 = arith.constant dense<0.000000e+00> : vector<72x32xf32>
    %101 = tpu.matmul %100, %86, %cst_25 {dimension_numbers = #tpu.dot_dimension_numbers<[1], [0], [0], [1], [0, 0, 1, 1], [], []>} : vector<72x72xbf16>, vector<72x32xbf16>, vector<72x32xf32> -> vector<72x32xf32>
    %102 = tpu.concatenate %38, %59, %80, %101 in 1 : vector<72x32xf32>, vector<72x32xf32>, vector<72x32xf32>, vector<72x32xf32> -> vector<72x128xf32>
    %103 = arith.truncf %102 : vector<72x128xf32> to vector<72x128xbf16>
    %c0_26 = arith.constant 0 : index
    %c0_27 = arith.constant 0 : index
    %c0_28 = arith.constant 0 : index
    %104 = vector.load %arg11[%c0_26, %c0_27, %c0_28] : memref<1x128x128xbf16, #tpu.memory_space<vmem>>, vector<1x128x128xbf16>
    %105 = vector.shape_cast %104 : vector<1x128x128xbf16> to vector<128x128xbf16>
    %cst_29 = arith.constant dense<0.000000e+00> : vector<72x128xf32>
    %106 = tpu.matmul %103, %105, %cst_29 {dimension_numbers = #tpu.dot_dimension_numbers<[1], [0], [0], [1], [0, 0, 1, 1], [], []>} : vector<72x128xbf16>, vector<128x128xbf16>, vector<72x128xf32> -> vector<72x128xf32>
    %c0_30 = arith.constant 0 : index
    %c0_31 = arith.constant 0 : index
    %c0_32 = arith.constant 0 : index
    %107 = vector.load %arg12[%c0_30, %c0_31, %c0_32] : memref<1x1x128xf32, #tpu.memory_space<vmem>>, vector<1x1x128xf32>
    %108 = vector.shape_cast %107 : vector<1x1x128xf32> to vector<1x128xf32>
    %109 = vector.broadcast %108 : vector<1x128xf32> to vector<72x128xf32>
    %110 = arith.addf %106, %109 : vector<72x128xf32>
    %111 = arith.addf %3, %110 : vector<72x128xf32>
    %c0_33 = arith.constant 0 : index
    %c0_34 = arith.constant 0 : index
    %c0_35 = arith.constant 0 : index
    %112 = vector.load %arg13[%c0_33, %c0_34, %c0_35] : memref<1x1x128xf32, #tpu.memory_space<vmem>>, vector<1x1x128xf32>
    %113 = vector.shape_cast %112 : vector<1x1x128xf32> to vector<1x128xf32>
    %c0_36 = arith.constant 0 : index
    %c0_37 = arith.constant 0 : index
    %c0_38 = arith.constant 0 : index
    %114 = vector.load %arg14[%c0_36, %c0_37, %c0_38] : memref<1x1x128xf32, #tpu.memory_space<vmem>>, vector<1x1x128xf32>
    %115 = vector.shape_cast %114 : vector<1x1x128xf32> to vector<1x128xf32>
    %cst_39 = arith.constant dense<0.000000e+00> : vector<72xf32>
    %116 = vector.multi_reduction <add>, %111, %cst_39 [1] : vector<72x128xf32> to vector<72xf32>
    %117 = vector.shape_cast %116 : vector<72xf32> to vector<72x1xf32>
    %cst_40 = arith.constant 1.280000e+02 : f32
    %118 = vector.broadcast %cst_40 : f32 to vector<72x1xf32>
    %119 = arith.divf %117, %118 : vector<72x1xf32>
    %120 = vector.broadcast %119 : vector<72x1xf32> to vector<72x128xf32>
    %121 = arith.subf %111, %120 : vector<72x128xf32>
    %122 = arith.mulf %121, %121 : vector<72x128xf32>
    %cst_41 = arith.constant dense<0.000000e+00> : vector<72xf32>
    %123 = vector.multi_reduction <add>, %122, %cst_41 [1] : vector<72x128xf32> to vector<72xf32>
    %124 = vector.shape_cast %123 : vector<72xf32> to vector<72x1xf32>
    %cst_42 = arith.constant 1.280000e+02 : f32
    %125 = vector.broadcast %cst_42 : f32 to vector<72x1xf32>
    %126 = arith.divf %124, %125 : vector<72x1xf32>
    %127 = vector.broadcast %119 : vector<72x1xf32> to vector<72x128xf32>
    %128 = arith.subf %111, %127 : vector<72x128xf32>
    %cst_43 = arith.constant 9.99999974E-6 : f32
    %129 = vector.broadcast %cst_43 : f32 to vector<72x1xf32>
    %130 = arith.addf %126, %129 : vector<72x1xf32>
    %131 = math.rsqrt %130 : vector<72x1xf32>
    %132 = vector.broadcast %131 : vector<72x1xf32> to vector<72x128xf32>
    %133 = arith.mulf %128, %132 : vector<72x128xf32>
    %134 = vector.broadcast %113 : vector<1x128xf32> to vector<72x128xf32>
    %135 = arith.mulf %133, %134 : vector<72x128xf32>
    %136 = vector.broadcast %115 : vector<1x128xf32> to vector<72x128xf32>
    %137 = arith.addf %135, %136 : vector<72x128xf32>
    %138 = arith.truncf %137 : vector<72x128xf32> to vector<72x128xbf16>
    %c0_44 = arith.constant 0 : index
    %c0_45 = arith.constant 0 : index
    %c0_46 = arith.constant 0 : index
    %139 = vector.load %arg15[%c0_44, %c0_45, %c0_46] : memref<1x128x256xbf16, #tpu.memory_space<vmem>>, vector<1x128x256xbf16>
    %140 = vector.shape_cast %139 : vector<1x128x256xbf16> to vector<128x256xbf16>
    %cst_47 = arith.constant dense<0.000000e+00> : vector<72x256xf32>
    %141 = tpu.matmul %138, %140, %cst_47 {dimension_numbers = #tpu.dot_dimension_numbers<[1], [0], [0], [1], [0, 0, 1, 1], [], []>} : vector<72x128xbf16>, vector<128x256xbf16>, vector<72x256xf32> -> vector<72x256xf32>
    %c0_48 = arith.constant 0 : index
    %c0_49 = arith.constant 0 : index
    %c0_50 = arith.constant 0 : index
    %142 = vector.load %arg16[%c0_48, %c0_49, %c0_50] : memref<1x1x256xf32, #tpu.memory_space<vmem>>, vector<1x1x256xf32>
    %143 = vector.shape_cast %142 : vector<1x1x256xf32> to vector<1x256xf32>
    %144 = vector.broadcast %143 : vector<1x256xf32> to vector<72x256xf32>
    %145 = arith.addf %141, %144 : vector<72x256xf32>
    %cst_51 = arith.constant 0.000000e+00 : f32
    %146 = vector.broadcast %cst_51 : f32 to vector<72x256xf32>
    %147 = arith.maximumf %145, %146 : vector<72x256xf32>
    %148 = arith.truncf %147 : vector<72x256xf32> to vector<72x256xbf16>
    %c0_52 = arith.constant 0 : index
    %c0_53 = arith.constant 0 : index
    %c0_54 = arith.constant 0 : index
    %149 = vector.load %arg17[%c0_52, %c0_53, %c0_54] : memref<1x256x128xbf16, #tpu.memory_space<vmem>>, vector<1x256x128xbf16>
    %150 = vector.shape_cast %149 : vector<1x256x128xbf16> to vector<256x128xbf16>
    %cst_55 = arith.constant dense<0.000000e+00> : vector<72x128xf32>
    %151 = tpu.matmul %148, %150, %cst_55 {dimension_numbers = #tpu.dot_dimension_numbers<[1], [0], [0], [1], [0, 0, 1, 1], [], []>} : vector<72x256xbf16>, vector<256x128xbf16>, vector<72x128xf32> -> vector<72x128xf32>
    %c0_56 = arith.constant 0 : index
    %c0_57 = arith.constant 0 : index
    %c0_58 = arith.constant 0 : index
    %152 = vector.load %arg18[%c0_56, %c0_57, %c0_58] : memref<1x1x128xf32, #tpu.memory_space<vmem>>, vector<1x1x128xf32>
    %153 = vector.shape_cast %152 : vector<1x1x128xf32> to vector<1x128xf32>
    %154 = vector.broadcast %153 : vector<1x128xf32> to vector<72x128xf32>
    %155 = arith.addf %151, %154 : vector<72x128xf32>
    %156 = arith.addf %137, %155 : vector<72x128xf32>
    %c0_59 = arith.constant 0 : index
    %c0_60 = arith.constant 0 : index
    %c0_61 = arith.constant 0 : index
    %157 = vector.load %arg19[%c0_59, %c0_60, %c0_61] : memref<1x1x128xf32, #tpu.memory_space<vmem>>, vector<1x1x128xf32>
    %158 = vector.shape_cast %157 : vector<1x1x128xf32> to vector<1x128xf32>
    %c0_62 = arith.constant 0 : index
    %c0_63 = arith.constant 0 : index
    %c0_64 = arith.constant 0 : index
    %159 = vector.load %arg20[%c0_62, %c0_63, %c0_64] : memref<1x1x128xf32, #tpu.memory_space<vmem>>, vector<1x1x128xf32>
    %160 = vector.shape_cast %159 : vector<1x1x128xf32> to vector<1x128xf32>
    %cst_65 = arith.constant dense<0.000000e+00> : vector<72xf32>
    %161 = vector.multi_reduction <add>, %156, %cst_65 [1] : vector<72x128xf32> to vector<72xf32>
    %162 = vector.shape_cast %161 : vector<72xf32> to vector<72x1xf32>
    %cst_66 = arith.constant 1.280000e+02 : f32
    %163 = vector.broadcast %cst_66 : f32 to vector<72x1xf32>
    %164 = arith.divf %162, %163 : vector<72x1xf32>
    %165 = vector.broadcast %164 : vector<72x1xf32> to vector<72x128xf32>
    %166 = arith.subf %156, %165 : vector<72x128xf32>
    %167 = arith.mulf %166, %166 : vector<72x128xf32>
    %cst_67 = arith.constant dense<0.000000e+00> : vector<72xf32>
    %168 = vector.multi_reduction <add>, %167, %cst_67 [1] : vector<72x128xf32> to vector<72xf32>
    %169 = vector.shape_cast %168 : vector<72xf32> to vector<72x1xf32>
    %cst_68 = arith.constant 1.280000e+02 : f32
    %170 = vector.broadcast %cst_68 : f32 to vector<72x1xf32>
    %171 = arith.divf %169, %170 : vector<72x1xf32>
    %172 = vector.broadcast %164 : vector<72x1xf32> to vector<72x128xf32>
    %173 = arith.subf %156, %172 : vector<72x128xf32>
    %cst_69 = arith.constant 9.99999974E-6 : f32
    %174 = vector.broadcast %cst_69 : f32 to vector<72x1xf32>
    %175 = arith.addf %171, %174 : vector<72x1xf32>
    %176 = math.rsqrt %175 : vector<72x1xf32>
    %177 = vector.broadcast %176 : vector<72x1xf32> to vector<72x128xf32>
    %178 = arith.mulf %173, %177 : vector<72x128xf32>
    %179 = vector.broadcast %158 : vector<1x128xf32> to vector<72x128xf32>
    %180 = arith.mulf %178, %179 : vector<72x128xf32>
    %181 = vector.broadcast %160 : vector<1x128xf32> to vector<72x128xf32>
    %182 = arith.addf %180, %181 : vector<72x128xf32>
    %c0_70 = arith.constant 0 : index
    %c0_71 = arith.constant 0 : index
    %183 = vector.load %arg26[%c0_70, %c0_71] : memref<72x128xf32, #tpu.memory_space<vmem>>, vector<72x128xf32>
    tpu.vector_store %arg26[%c0_70, %c0_71], %182 {strides = array<i32>} : memref<72x128xf32, #tpu.memory_space<vmem>>, vector<72x128xf32>,
    %c1_i32 = arith.constant 1 : i32
    %184 = arith.cmpi eq, %arg1, %c1_i32 : i32
    %185 = arith.extui %184 : i1 to i32
    %c0_i32_72 = arith.constant 0 : i32
    %186 = arith.cmpi ne, %185, %c0_i32_72 : i32
    scf.if %186 {
      %187 = vector.extract_strided_slice %182 {offsets = [0, 0], sizes = [1, 128], strides = [1, 1]} : vector<72x128xf32> to vector<1x128xf32>
      %188 = arith.truncf %187 : vector<1x128xf32> to vector<1x128xbf16>
      %c0_73 = arith.constant 0 : index
      %c0_74 = arith.constant 0 : index
      %189 = vector.load %arg21[%c0_73, %c0_74] : memref<128x256xbf16, #tpu.memory_space<vmem>>, vector<128x256xbf16>
      %cst_75 = arith.constant dense<0.000000e+00> : vector<1x256xf32>
      %190 = tpu.matmul %188, %189, %cst_75 {dimension_numbers = #tpu.dot_dimension_numbers<[1], [0], [0], [1], [0, 0, 1, 1], [], []>} : vector<1x128xbf16>, vector<128x256xbf16>, vector<1x256xf32> -> vector<1x256xf32>
      %c0_76 = arith.constant 0 : index
      %c0_77 = arith.constant 0 : index
      %191 = vector.load %arg22[%c0_76, %c0_77] : memref<1x256xf32, #tpu.memory_space<vmem>>, vector<1x256xf32>
      %192 = arith.addf %190, %191 : vector<1x256xf32>
      %cst_78 = arith.constant 5.000000e-01 : f32
      %193 = vector.broadcast %cst_78 : f32 to vector<1x256xf32>
      %194 = arith.mulf %193, %192 : vector<1x256xf32>
      %cst_79 = arith.constant 4.471500e-02 : f32
      %195 = vector.broadcast %cst_79 : f32 to vector<1x256xf32>
      %196 = arith.mulf %195, %192 : vector<1x256xf32>
      %197 = arith.mulf %196, %192 : vector<1x256xf32>
      %198 = arith.mulf %197, %192 : vector<1x256xf32>
      %199 = arith.addf %192, %198 : vector<1x256xf32>
      %cst_80 = arith.constant 0.797884583 : f32
      %200 = vector.broadcast %cst_80 : f32 to vector<1x256xf32>
      %201 = arith.mulf %200, %199 : vector<1x256xf32>
      %202 = math.tanh %201 : vector<1x256xf32>
      %cst_81 = arith.constant 1.000000e+00 : f32
      %203 = vector.broadcast %cst_81 : f32 to vector<1x256xf32>
      %204 = arith.addf %203, %202 : vector<1x256xf32>
      %205 = arith.mulf %194, %204 : vector<1x256xf32>
      %206 = arith.truncf %205 : vector<1x256xf32> to vector<1x256xbf16>
      %c0_82 = arith.constant 0 : index
      %c0_83 = arith.constant 0 : index
      %207 = vector.load %arg23[%c0_82, %c0_83] : memref<256x10xbf16, #tpu.memory_space<vmem>>, vector<256x10xbf16>
      %cst_84 = arith.constant dense<0.000000e+00> : vector<1x10xf32>
      %208 = tpu.matmul %206, %207, %cst_84 {dimension_numbers = #tpu.dot_dimension_numbers<[1], [0], [0], [1], [0, 0, 1, 1], [], []>} : vector<1x256xbf16>, vector<256x10xbf16>, vector<1x10xf32> -> vector<1x10xf32>
      %c0_85 = arith.constant 0 : index
      %c0_86 = arith.constant 0 : index
      %209 = vector.load %arg24[%c0_85, %c0_86] : memref<1x10xf32, #tpu.memory_space<vmem>>, vector<1x10xf32>
      %210 = arith.addf %208, %209 : vector<1x10xf32>
      %c0_87 = arith.constant 0 : index
      %c0_88 = arith.constant 0 : index
      %c0_89 = arith.constant 0 : index
      %211 = vector.load %arg25[%c0_87, %c0_88, %c0_89] : memref<1x1x10xf32, #tpu.memory_space<vmem>>, vector<1x1x10xf32>
      %212 = vector.shape_cast %211 : vector<1x1x10xf32> to vector<1x10xf32>
      %213 = vector.shape_cast %210 : vector<1x10xf32> to vector<1x1x10xf32>
      tpu.vector_store %arg25[%c0_87, %c0_88, %c0_89], %213 {strides = array<i32>} : memref<1x1x10xf32, #tpu.memory_space<vmem>>, vector<1x1x10xf32>,
    } else {
    }
    return
  }
  func.func @transform_0(%arg0: i32, %arg1: i32) -> (i32, i32, i32) {
    %c0_i32 = arith.constant 0 : i32
    %c0_i32_0 = arith.constant 0 : i32
    %c0_i32_1 = arith.constant 0 : i32
    return %arg0, %c0_i32, %c0_i32_0 : i32, i32, i32
  }
  func.func @transform_1(%arg0: i32, %arg1: i32) -> (i32, i32, i32) {
    %c0_i32 = arith.constant 0 : i32
    %c0_i32_0 = arith.constant 0 : i32
    %c0_i32_1 = arith.constant 0 : i32
    return %arg0, %c0_i32, %c0_i32_0 : i32, i32, i32
  }
  func.func @transform_2(%arg0: i32, %arg1: i32) -> (i32, i32) {
    %c0_i32 = arith.constant 0 : i32
    %c0_i32_0 = arith.constant 0 : i32
    %c0_i32_1 = arith.constant 0 : i32
    return %c0_i32, %c0_i32_0 : i32, i32
  }
  func.func @transform_3(%arg0: i32, %arg1: i32) -> (i32, i32) {
    %c0_i32 = arith.constant 0 : i32
    %c0_i32_0 = arith.constant 0 : i32
    %c0_i32_1 = arith.constant 0 : i32
    return %c0_i32, %c0_i32_0 : i32, i32
  }
  func.func @transform_4(%arg0: i32, %arg1: i32) -> (i32, i32) {
    %c0_i32 = arith.constant 0 : i32
    %c0_i32_0 = arith.constant 0 : i32
    %c0_i32_1 = arith.constant 0 : i32
    return %c0_i32, %c0_i32_0 : i32, i32
  }
  func.func @transform_5(%arg0: i32, %arg1: i32) -> (i32, i32) {
    %c0_i32 = arith.constant 0 : i32
    %c0_i32_0 = arith.constant 0 : i32
    %c0_i32_1 = arith.constant 0 : i32
    return %c0_i32, %c0_i32_0 : i32, i32
  }
  func.func @transform_6(%arg0: i32, %arg1: i32) -> (i32, i32) {
    %c0_i32 = arith.constant 0 : i32
    %c0_i32_0 = arith.constant 0 : i32
    %c0_i32_1 = arith.constant 0 : i32
    return %c0_i32, %c0_i32_0 : i32, i32
  }
  func.func @transform_7(%arg0: i32, %arg1: i32) -> (i32, i32, i32) {
    %c0_i32 = arith.constant 0 : i32
    %c0_i32_0 = arith.constant 0 : i32
    %c0_i32_1 = arith.constant 0 : i32
    return %arg1, %c0_i32, %c0_i32_0 : i32, i32, i32
  }
  func.func @transform_8(%arg0: i32, %arg1: i32) -> (i32, i32, i32) {
    %c0_i32 = arith.constant 0 : i32
    %c0_i32_0 = arith.constant 0 : i32
    %c0_i32_1 = arith.constant 0 : i32
    return %arg1, %c0_i32, %c0_i32_0 : i32, i32, i32
  }
  func.func @transform_9(%arg0: i32, %arg1: i32) -> (i32, i32, i32) {
    %c0_i32 = arith.constant 0 : i32
    %c0_i32_0 = arith.constant 0 : i32
    %c0_i32_1 = arith.constant 0 : i32
    return %arg1, %c0_i32, %c0_i32_0 : i32, i32, i32
  }
  func.func @transform_10(%arg0: i32, %arg1: i32) -> (i32, i32, i32) {
    %c0_i32 = arith.constant 0 : i32
    %c0_i32_0 = arith.constant 0 : i32
    %c0_i32_1 = arith.constant 0 : i32
    return %arg1, %c0_i32, %c0_i32_0 : i32, i32, i32
  }
  func.func @transform_11(%arg0: i32, %arg1: i32) -> (i32, i32, i32) {
    %c0_i32 = arith.constant 0 : i32
    %c0_i32_0 = arith.constant 0 : i32
    %c0_i32_1 = arith.constant 0 : i32
    return %arg1, %c0_i32, %c0_i32_0 : i32, i32, i32
  }
  func.func @transform_12(%arg0: i32, %arg1: i32) -> (i32, i32, i32) {
    %c0_i32 = arith.constant 0 : i32
    %c0_i32_0 = arith.constant 0 : i32
    %c0_i32_1 = arith.constant 0 : i32
    return %arg1, %c0_i32, %c0_i32_0 : i32, i32, i32
  }
  func.func @transform_13(%arg0: i32, %arg1: i32) -> (i32, i32, i32) {
    %c0_i32 = arith.constant 0 : i32
    %c0_i32_0 = arith.constant 0 : i32
    %c0_i32_1 = arith.constant 0 : i32
    return %arg1, %c0_i32, %c0_i32_0 : i32, i32, i32
  }
  func.func @transform_14(%arg0: i32, %arg1: i32) -> (i32, i32, i32) {
    %c0_i32 = arith.constant 0 : i32
    %c0_i32_0 = arith.constant 0 : i32
    %c0_i32_1 = arith.constant 0 : i32
    return %arg1, %c0_i32, %c0_i32_0 : i32, i32, i32
  }
  func.func @transform_15(%arg0: i32, %arg1: i32) -> (i32, i32, i32) {
    %c0_i32 = arith.constant 0 : i32
    %c0_i32_0 = arith.constant 0 : i32
    %c0_i32_1 = arith.constant 0 : i32
    return %arg1, %c0_i32, %c0_i32_0 : i32, i32, i32
  }
  func.func @transform_16(%arg0: i32, %arg1: i32) -> (i32, i32, i32) {
    %c0_i32 = arith.constant 0 : i32
    %c0_i32_0 = arith.constant 0 : i32
    %c0_i32_1 = arith.constant 0 : i32
    return %arg1, %c0_i32, %c0_i32_0 : i32, i32, i32
  }
  func.func @transform_17(%arg0: i32, %arg1: i32) -> (i32, i32, i32) {
    %c0_i32 = arith.constant 0 : i32
    %c0_i32_0 = arith.constant 0 : i32
    %c0_i32_1 = arith.constant 0 : i32
    return %arg1, %c0_i32, %c0_i32_0 : i32, i32, i32
  }
  func.func @transform_18(%arg0: i32, %arg1: i32) -> (i32, i32, i32) {
    %c0_i32 = arith.constant 0 : i32
    %c0_i32_0 = arith.constant 0 : i32
    %c0_i32_1 = arith.constant 0 : i32
    return %arg1, %c0_i32, %c0_i32_0 : i32, i32, i32
  }
  func.func @transform_19(%arg0: i32, %arg1: i32) -> (i32, i32) {
    %c0_i32 = arith.constant 0 : i32
    %c0_i32_0 = arith.constant 0 : i32
    %c0_i32_1 = arith.constant 0 : i32
    return %c0_i32, %c0_i32_0 : i32, i32
  }
  func.func @transform_20(%arg0: i32, %arg1: i32) -> (i32, i32) {
    %c0_i32 = arith.constant 0 : i32
    %c0_i32_0 = arith.constant 0 : i32
    %c0_i32_1 = arith.constant 0 : i32
    return %c0_i32, %c0_i32_0 : i32, i32
  }
  func.func @transform_21(%arg0: i32, %arg1: i32) -> (i32, i32) {
    %c0_i32 = arith.constant 0 : i32
    %c0_i32_0 = arith.constant 0 : i32
    %c0_i32_1 = arith.constant 0 : i32
    return %c0_i32, %c0_i32_0 : i32, i32
  }
  func.func @transform_22(%arg0: i32, %arg1: i32) -> (i32, i32) {
    %c0_i32 = arith.constant 0 : i32
    %c0_i32_0 = arith.constant 0 : i32
    %c0_i32_1 = arith.constant 0 : i32
    return %c0_i32, %c0_i32_0 : i32, i32
  }
  func.func @transform_23(%arg0: i32, %arg1: i32) -> (i32, i32, i32) {
    %c0_i32 = arith.constant 0 : i32
    %c0_i32_0 = arith.constant 0 : i32
    %c0_i32_1 = arith.constant 0 : i32
    return %arg0, %c0_i32, %c0_i32_0 : i32, i32, i32
  }
}

</mosaic_0001>

<llo_original>
// kernel: context_transformer_forward.1
$region0: #{context_transformer_forward.1}
  #allocation0 [shape = 'u32[]', space=smem, size = 0x4, offset = 0x4, fixed_abs, tag = 'smem constant byte address 0x4 - core index']
  #allocation1 [shape = 'u32[144,128]{1,0:T(1,128)}', space=vmem, size = 0x12000, scoped, tag = 'internal scratch']
  #allocation2 [shape = 'f32[72,128]{1,0:T(8,128)}', space=vmem, size = 0x9000, scoped, tag = 'scratch operand']
  %s0 = inlined_call_operand.vmem [shape: bf16[2,64,12], index: 0, kind: input, shape index: {}]
  %s1 = inlined_call_operand.vmem [shape: bf16[2,6,300], index: 1, kind: input, shape index: {}]
  %s2 = inlined_call_operand.vmem [shape: f32[72,128], index: 2, kind: input, shape index: {}]
  %s3 = inlined_call_operand.vmem [shape: bf16[12,128], index: 3, kind: input, shape index: {}]
  %s4 = inlined_call_operand.vmem [shape: f32[1,128], index: 4, kind: input, shape index: {}]
  %s5 = inlined_call_operand.vmem [shape: bf16[300,128], index: 5, kind: input, shape index: {}]
  %s6 = inlined_call_operand.vmem [shape: f32[1,128], index: 6, kind: input, shape index: {}]
  %s7 = inlined_call_operand.vmem [shape: bf16[2,128,384], index: 7, kind: input, shape index: {}]
  %s8 = inlined_call_operand.vmem [shape: f32[2,1,384], index: 8, kind: input, shape index: {}]
  %s9 = inlined_call_operand.vmem [shape: bf16[2,128,128], index: 9, kind: input, shape index: {}]
  %s10 = inlined_call_operand.vmem [shape: f32[2,1,128], index: 10, kind: input, shape index: {}]
  %s11 = inlined_call_operand.vmem [shape: f32[2,1,128], index: 11, kind: input, shape index: {}]
  %s12 = inlined_call_operand.vmem [shape: f32[2,1,128], index: 12, kind: input, shape index: {}]
  %s13 = inlined_call_operand.vmem [shape: bf16[2,128,256], index: 13, kind: input, shape index: {}]
  %s14 = inlined_call_operand.vmem [shape: f32[2,1,256], index: 14, kind: input, shape index: {}]
  %s15 = inlined_call_operand.vmem [shape: bf16[2,256,128], index: 15, kind: input, shape index: {}]
  %s16 = inlined_call_operand.vmem [shape: f32[2,1,128], index: 16, kind: input, shape index: {}]
  %s17 = inlined_call_operand.vmem [shape: f32[2,1,128], index: 17, kind: input, shape index: {}]
  %s18 = inlined_call_operand.vmem [shape: f32[2,1,128], index: 18, kind: input, shape index: {}]
  %s19 = inlined_call_operand.vmem [shape: bf16[128,256], index: 19, kind: input, shape index: {}]
  %s20 = inlined_call_operand.vmem [shape: f32[1,256], index: 20, kind: input, shape index: {}]
  %s21 = inlined_call_operand.vmem [shape: bf16[256,10], index: 21, kind: input, shape index: {}]
  %s22 = inlined_call_operand.vmem [shape: f32[1,10], index: 22, kind: input, shape index: {}]
  %s23 = inlined_call_operand.hbm [shape: f32[2,1,10], index: 23, kind: output, shape index: {}]
  %s24 = sld [smem:[#allocation0]]
  $region133: #{context_transformer_forward.1} parent=0
    _
  %s26 = ssub.s32 1, %s24
  %s27 = scalar_select 0, %s26, %s24
  $region1: #{context_transformer_forward.1} parent=0
    #allocation3 [shape = 'u8[1024]{0}', space=vmem, size = 0x400, scoped, tag = 'output window, operand 0']
    #allocation4 [shape = 's32[2]{0}', space=sflag, size = 0x8, scoped, tag = 'scoped memory for context_transformer_forward.1']
    %28 = vsyncpa [#allocation4], 0
    %s29 = scalar_lea.sflag [#allocation4], 1
    %30 = vsyncpa %s29, 0
    loop: start=0, step=1, limit=6
    $region2: #{context_transformer_forward.1} parent=1 // loop_pre_header
      _
    $region3: #{context_transformer_forward.1} parent=1 // loop_header
      %s32 = sphi 0, %s36
      %p33 = scmp.ge.s32.totalorder %s32, 6
      %s39 = sphi 0, %s51
      %s40 = sphi 0, %s47
      %s41 = sphi 0, %s39
      %s42 = sphi 0, %s40
      %s43 = sphi 0, %s41
      %s44 = sphi 0, %s42
      %s54 = sphi 0, %s56
      %s57 = sphi 0, %s54
      %s58 = sphi 0, %s57
      %s74 = sphi 0, %s58
      %s80 = sphi 0, %s82
      %s83 = sphi 0, %s80
      %s84 = sphi 0, %s83
      %s100 = sphi 0, %s84
      %s104 = sphi 0, %s104
      %s106 = sphi 0, %s104
      %s107 = sphi 0, %s106
      %s121 = sphi 0, %s107
      %s125 = sphi 0, %s125
      %s127 = sphi 0, %s125
      %s128 = sphi 0, %s127
      %s142 = sphi 0, %s128
      %s146 = sphi 0, %s146
      %s148 = sphi 0, %s146
      %s149 = sphi 0, %s148
      %s163 = sphi 0, %s149
      %s167 = sphi 0, %s167
      %s169 = sphi 0, %s167
      %s170 = sphi 0, %s169
      %s184 = sphi 0, %s170
      %s188 = sphi 0, %s188
      %s190 = sphi 0, %s188
      %s191 = sphi 0, %s190
      %s205 = sphi 0, %s191
      %s211 = sphi 0, %s213
      %s214 = sphi 0, %s211
      %s215 = sphi 0, %s214
      %s231 = sphi 0, %s215
      %s237 = sphi 0, %s239
      %s240 = sphi 0, %s237
      %s241 = sphi 0, %s240
      %s257 = sphi 0, %s241
      %s263 = sphi 0, %s265
      %s266 = sphi 0, %s263
      %s267 = sphi 0, %s266
      %s283 = sphi 0, %s267
      %s289 = sphi 0, %s291
      %s292 = sphi 0, %s289
      %s293 = sphi 0, %s292
      %s309 = sphi 0, %s293
      %s315 = sphi 0, %s317
      %s318 = sphi 0, %s315
      %s319 = sphi 0, %s318
      %s335 = sphi 0, %s319
      %s341 = sphi 0, %s343
      %s344 = sphi 0, %s341
      %s345 = sphi 0, %s344
      %s361 = sphi 0, %s345
      %s367 = sphi 0, %s369
      %s370 = sphi 0, %s367
      %s371 = sphi 0, %s370
      %s387 = sphi 0, %s371
      %s393 = sphi 0, %s395
      %s396 = sphi 0, %s393
      %s397 = sphi 0, %s396
      %s413 = sphi 0, %s397
      %s419 = sphi 0, %s421
      %s422 = sphi 0, %s419
      %s423 = sphi 0, %s422
      %s439 = sphi 0, %s423
      %s445 = sphi 0, %s447
      %s448 = sphi 0, %s445
      %s449 = sphi 0, %s448
      %s465 = sphi 0, %s449
      %s471 = sphi 0, %s473
      %s474 = sphi 0, %s471
      %s475 = sphi 0, %s474
      %s491 = sphi 0, %s475
      %s497 = sphi 0, %s499
      %s500 = sphi 0, %s497
      %s501 = sphi 0, %s500
      %s517 = sphi 0, %s501
      %s521 = sphi 0, %s521
      %s523 = sphi 0, %s521
      %s524 = sphi 0, %s523
      %s538 = sphi 0, %s524
      %s542 = sphi 0, %s542
      %s544 = sphi 0, %s542
      %s545 = sphi 0, %s544
      %s559 = sphi 0, %s545
      %s563 = sphi 0, %s563
      %s565 = sphi 0, %s563
      %s566 = sphi 0, %s565
      %s580 = sphi 0, %s566
      %s584 = sphi 0, %s584
      %s586 = sphi 0, %s584
      %s587 = sphi 0, %s586
      %s601 = sphi 0, %s587
      %s607 = sphi 0, %s609
      %s610 = sphi 0, %s607
      %s611 = sphi 0, %s610
      %s627 = sphi 0, %s611
    $region4: #{context_transformer_forward.1} parent=1 // loop_header_branch
      %35 = sbr.rel (%p33) target = $region8
    $region5: #{context_transformer_forward.1} parent=1 // loop_body
      %s37 = ssub.s32 %s32, 1
      %s38 = ssub.s32 %s32, 2
      %s45 = sadd.s32 1, %s40
      %p46 = scmp.ge.s32.totalorder %s45, 2
      %s47 = scalar_select %p46, 0, %s45
      %s48 = sadd.s32 1, %s39
      %s49 = scalar_select %p46, %s48, %s39
      %p50 = scmp.ge.s32.totalorder %s49, 2
      %s51 = scalar_select %p50, 0, %s49
      %s52 = ssub.s32 %s39, %s51
      %p53 = scmp.eq.s32.totalorder %s52, 0
      %s55 = sadd.s32 %s54, 1
      %s56 = scalar_select %p53, %s54, %s55
      %p59 = pneg %p53
      %p60 = scmp.eq.s32.totalorder %s32, 3
      %p61 = por %p59, %p60
      %p62 = scmp.ne.s32.totalorder %s54, %s57
      %p63 = scmp.eq.s32.totalorder %s32, 0
      %p64 = por %p62, %p63
      %p65 = scmp.ne.s32.totalorder %s54, %s57
      %p66 = scmp.eq.s32.totalorder %s37, 3
      %p67 = por %p65, %p66
      %p68 = scmp.ne.s32.totalorder %s57, %s58
      %p69 = scmp.eq.s32.totalorder %s37, 0
      %p70 = por %p68, %p69
      %p71 = scmp.ne.s32.totalorder %s57, %s58
      %p72 = scmp.eq.s32.totalorder %s38, 3
      %p73 = por %p71, %p72
      %p75 = scmp.ne.s32.totalorder %s58, %s74
      %p76 = scmp.eq.s32.totalorder %s38, 0
      %p77 = por %p75, %p76
      %s78 = ssub.s32 %s39, %s51
      %p79 = scmp.eq.s32.totalorder %s78, 0
      %s81 = sadd.s32 %s80, 1
      %s82 = scalar_select %p79, %s80, %s81
      %p85 = pneg %p79
      %p86 = scmp.eq.s32.totalorder %s32, 3
      %p87 = por %p85, %p86
      %p88 = scmp.ne.s32.totalorder %s80, %s83
      %p89 = scmp.eq.s32.totalorder %s32, 0
      %p90 = por %p88, %p89
      %p91 = scmp.ne.s32.totalorder %s80, %s83
      %p92 = scmp.eq.s32.totalorder %s37, 3
      %p93 = por %p91, %p92
      %p94 = scmp.ne.s32.totalorder %s83, %s84
      %p95 = scmp.eq.s32.totalorder %s37, 0
      %p96 = por %p94, %p95
      %p97 = scmp.ne.s32.totalorder %s83, %s84
      %p98 = scmp.eq.s32.totalorder %s38, 3
      %p99 = por %p97, %p98
      %p101 = scmp.ne.s32.totalorder %s84, %s100
      %p102 = scmp.eq.s32.totalorder %s38, 0
      %p103 = por %p101, %p102
      %s105 = sadd.s32 %s104, 1
      %p108 = scmp.eq.s32.totalorder %s32, 3
      %p109 = scmp.ne.s32.totalorder %s104, %s106
      %p110 = scmp.eq.s32.totalorder %s32, 0
      %p111 = por %p109, %p110
      %p112 = scmp.ne.s32.totalorder %s104, %s106
      %p113 = scmp.eq.s32.totalorder %s37, 3
      %p114 = por %p112, %p113
      %p115 = scmp.ne.s32.totalorder %s106, %s107
      %p116 = scmp.eq.s32.totalorder %s37, 0
      %p117 = por %p115, %p116
      %p118 = scmp.ne.s32.totalorder %s106, %s107
      %p119 = scmp.eq.s32.totalorder %s38, 3
      %p120 = por %p118, %p119
      %p122 = scmp.ne.s32.totalorder %s107, %s121
      %p123 = scmp.eq.s32.totalorder %s38, 0
      %p124 = por %p122, %p123
      %s126 = sadd.s32 %s125, 1
      %p129 = scmp.eq.s32.totalorder %s32, 3
      %p130 = scmp.ne.s32.totalorder %s125, %s127
      %p131 = scmp.eq.s32.totalorder %s32, 0
      %p132 = por %p130, %p131
      %p133 = scmp.ne.s32.totalorder %s125, %s127
      %p134 = scmp.eq.s32.totalorder %s37, 3
      %p135 = por %p133, %p134
      %p136 = scmp.ne.s32.totalorder %s127, %s128
      %p137 = scmp.eq.s32.totalorder %s37, 0
      %p138 = por %p136, %p137
      %p139 = scmp.ne.s32.totalorder %s127, %s128
      %p140 = scmp.eq.s32.totalorder %s38, 3
      %p141 = por %p139, %p140
      %p143 = scmp.ne.s32.totalorder %s128, %s142
      %p144 = scmp.eq.s32.totalorder %s38, 0
      %p145 = por %p143, %p144
      %s147 = sadd.s32 %s146, 1
      %p150 = scmp.eq.s32.totalorder %s32, 3
      %p151 = scmp.ne.s32.totalorder %s146, %s148
      %p152 = scmp.eq.s32.totalorder %s32, 0
      %p153 = por %p151, %p152
      %p154 = scmp.ne.s32.totalorder %s146, %s148
      %p155 = scmp.eq.s32.totalorder %s37, 3
      %p156 = por %p154, %p155
      %p157 = scmp.ne.s32.totalorder %s148, %s149
      %p158 = scmp.eq.s32.totalorder %s37, 0
      %p159 = por %p157, %p158
      %p160 = scmp.ne.s32.totalorder %s148, %s149
      %p161 = scmp.eq.s32.totalorder %s38, 3
      %p162 = por %p160, %p161
      %p164 = scmp.ne.s32.totalorder %s149, %s163
      %p165 = scmp.eq.s32.totalorder %s38, 0
      %p166 = por %p164, %p165
      %s168 = sadd.s32 %s167, 1
      %p171 = scmp.eq.s32.totalorder %s32, 3
      %p172 = scmp.ne.s32.totalorder %s167, %s169
      %p173 = scmp.eq.s32.totalorder %s32, 0
      %p174 = por %p172, %p173
      %p175 = scmp.ne.s32.totalorder %s167, %s169
      %p176 = scmp.eq.s32.totalorder %s37, 3
      %p177 = por %p175, %p176
      %p178 = scmp.ne.s32.totalorder %s169, %s170
      %p179 = scmp.eq.s32.totalorder %s37, 0
      %p180 = por %p178, %p179
      %p181 = scmp.ne.s32.totalorder %s169, %s170
      %p182 = scmp.eq.s32.totalorder %s38, 3
      %p183 = por %p181, %p182
      %p185 = scmp.ne.s32.totalorder %s170, %s184
      %p186 = scmp.eq.s32.totalorder %s38, 0
      %p187 = por %p185, %p186
      %s189 = sadd.s32 %s188, 1
      %p192 = scmp.eq.s32.totalorder %s32, 3
      %p193 = scmp.ne.s32.totalorder %s188, %s190
      %p194 = scmp.eq.s32.totalorder %s32, 0
      %p195 = por %p193, %p194
      %p196 = scmp.ne.s32.totalorder %s188, %s190
      %p197 = scmp.eq.s32.totalorder %s37, 3
      %p198 = por %p196, %p197
      %p199 = scmp.ne.s32.totalorder %s190, %s191
      %p200 = scmp.eq.s32.totalorder %s37, 0
      %p201 = por %p199, %p200
      %p202 = scmp.ne.s32.totalorder %s190, %s191
      %p203 = scmp.eq.s32.totalorder %s38, 3
      %p204 = por %p202, %p203
      %p206 = scmp.ne.s32.totalorder %s191, %s205
      %p207 = scmp.eq.s32.totalorder %s38, 0
      %p208 = por %p206, %p207
      %s209 = ssub.s32 %s40, %s47
      %p210 = scmp.eq.s32.totalorder %s209, 0
      %s212 = sadd.s32 %s211, 1
      %s213 = scalar_select %p210, %s211, %s212
      %p216 = pneg %p210
      %p217 = scmp.eq.s32.totalorder %s32, 3
      %p218 = por %p216, %p217
      %p219 = scmp.ne.s32.totalorder %s211, %s214
      %p220 = scmp.eq.s32.totalorder %s32, 0
      %p221 = por %p219, %p220
      %p222 = scmp.ne.s32.totalorder %s211, %s214
      %p223 = scmp.eq.s32.totalorder %s37, 3
      %p224 = por %p222, %p223
      %p225 = scmp.ne.s32.totalorder %s214, %s215
      %p226 = scmp.eq.s32.totalorder %s37, 0
      %p227 = por %p225, %p226
      %p228 = scmp.ne.s32.totalorder %s214, %s215
      %p229 = scmp.eq.s32.totalorder %s38, 3
      %p230 = por %p228, %p229
      %p232 = scmp.ne.s32.totalorder %s215, %s231
      %p233 = scmp.eq.s32.totalorder %s38, 0
      %p234 = por %p232, %p233
      %s235 = ssub.s32 %s40, %s47
      %p236 = scmp.eq.s32.totalorder %s235, 0
      %s238 = sadd.s32 %s237, 1
      %s239 = scalar_select %p236, %s237, %s238
      %p242 = pneg %p236
      %p243 = scmp.eq.s32.totalorder %s32, 3
      %p244 = por %p242, %p243
      %p245 = scmp.ne.s32.totalorder %s237, %s240
      %p246 = scmp.eq.s32.totalorder %s32, 0
      %p247 = por %p245, %p246
      %p248 = scmp.ne.s32.totalorder %s237, %s240
      %p249 = scmp.eq.s32.totalorder %s37, 3
      %p250 = por %p248, %p249
      %p251 = scmp.ne.s32.totalorder %s240, %s241
      %p252 = scmp.eq.s32.totalorder %s37, 0
      %p253 = por %p251, %p252
      %p254 = scmp.ne.s32.totalorder %s240, %s241
      %p255 = scmp.eq.s32.totalorder %s38, 3
      %p256 = por %p254, %p255
      %p258 = scmp.ne.s32.totalorder %s241, %s257
      %p259 = scmp.eq.s32.totalorder %s38, 0
      %p260 = por %p258, %p259
      %s261 = ssub.s32 %s40, %s47
      %p262 = scmp.eq.s32.totalorder %s261, 0
      %s264 = sadd.s32 %s263, 1
      %s265 = scalar_select %p262, %s263, %s264
      %p268 = pneg %p262
      %p269 = scmp.eq.s32.totalorder %s32, 3
      %p270 = por %p268, %p269
      %p271 = scmp.ne.s32.totalorder %s263, %s266
      %p272 = scmp.eq.s32.totalorder %s32, 0
      %p273 = por %p271, %p272
      %p274 = scmp.ne.s32.totalorder %s263, %s266
      %p275 = scmp.eq.s32.totalorder %s37, 3
      %p276 = por %p274, %p275
      %p277 = scmp.ne.s32.totalorder %s266, %s267
      %p278 = scmp.eq.s32.totalorder %s37, 0
      %p279 = por %p277, %p278
      %p280 = scmp.ne.s32.totalorder %s266, %s267
      %p281 = scmp.eq.s32.totalorder %s38, 3
      %p282 = por %p280, %p281
      %p284 = scmp.ne.s32.totalorder %s267, %s283
      %p285 = scmp.eq.s32.totalorder %s38, 0
      %p286 = por %p284, %p285
      %s287 = ssub.s32 %s40, %s47
      %p288 = scmp.eq.s32.totalorder %s287, 0
      %s290 = sadd.s32 %s289, 1
      %s291 = scalar_select %p288, %s289, %s290
      %p294 = pneg %p288
      %p295 = scmp.eq.s32.totalorder %s32, 3
      %p296 = por %p294, %p295
      %p297 = scmp.ne.s32.totalorder %s289, %s292
      %p298 = scmp.eq.s32.totalorder %s32, 0
      %p299 = por %p297, %p298
      %p300 = scmp.ne.s32.totalorder %s289, %s292
      %p301 = scmp.eq.s32.totalorder %s37, 3
      %p302 = por %p300, %p301
      %p303 = scmp.ne.s32.totalorder %s292, %s293
      %p304 = scmp.eq.s32.totalorder %s37, 0
      %p305 = por %p303, %p304
      %p306 = scmp.ne.s32.totalorder %s292, %s293
      %p307 = scmp.eq.s32.totalorder %s38, 3
      %p308 = por %p306, %p307
      %p310 = scmp.ne.s32.totalorder %s293, %s309
      %p311 = scmp.eq.s32.totalorder %s38, 0
      %p312 = por %p310, %p311
      %s313 = ssub.s32 %s40, %s47
      %p314 = scmp.eq.s32.totalorder %s313, 0
      %s316 = sadd.s32 %s315, 1
      %s317 = scalar_select %p314, %s315, %s316
      %p320 = pneg %p314
      %p321 = scmp.eq.s32.totalorder %s32, 3
      %p322 = por %p320, %p321
      %p323 = scmp.ne.s32.totalorder %s315, %s318
      %p324 = scmp.eq.s32.totalorder %s32, 0
      %p325 = por %p323, %p324
      %p326 = scmp.ne.s32.totalorder %s315, %s318
      %p327 = scmp.eq.s32.totalorder %s37, 3
      %p328 = por %p326, %p327
      %p329 = scmp.ne.s32.totalorder %s318, %s319
      %p330 = scmp.eq.s32.totalorder %s37, 0
      %p331 = por %p329, %p330
      %p332 = scmp.ne.s32.totalorder %s318, %s319
      %p333 = scmp.eq.s32.totalorder %s38, 3
      %p334 = por %p332, %p333
      %p336 = scmp.ne.s32.totalorder %s319, %s335
      %p337 = scmp.eq.s32.totalorder %s38, 0
      %p338 = por %p336, %p337
      %s339 = ssub.s32 %s40, %s47
      %p340 = scmp.eq.s32.totalorder %s339, 0
      %s342 = sadd.s32 %s341, 1
      %s343 = scalar_select %p340, %s341, %s342
      %p346 = pneg %p340
      %p347 = scmp.eq.s32.totalorder %s32, 3
      %p348 = por %p346, %p347
      %p349 = scmp.ne.s32.totalorder %s341, %s344
      %p350 = scmp.eq.s32.totalorder %s32, 0
      %p351 = por %p349, %p350
      %p352 = scmp.ne.s32.totalorder %s341, %s344
      %p353 = scmp.eq.s32.totalorder %s37, 3
      %p354 = por %p352, %p353
      %p355 = scmp.ne.s32.totalorder %s344, %s345
      %p356 = scmp.eq.s32.totalorder %s37, 0
      %p357 = por %p355, %p356
      %p358 = scmp.ne.s32.totalorder %s344, %s345
      %p359 = scmp.eq.s32.totalorder %s38, 3
      %p360 = por %p358, %p359
      %p362 = scmp.ne.s32.totalorder %s345, %s361
      %p363 = scmp.eq.s32.totalorder %s38, 0
      %p364 = por %p362, %p363
      %s365 = ssub.s32 %s40, %s47
      %p366 = scmp.eq.s32.totalorder %s365, 0
      %s368 = sadd.s32 %s367, 1
      %s369 = scalar_select %p366, %s367, %s368
      %p372 = pneg %p366
      %p373 = scmp.eq.s32.totalorder %s32, 3
      %p374 = por %p372, %p373
      %p375 = scmp.ne.s32.totalorder %s367, %s370
      %p376 = scmp.eq.s32.totalorder %s32, 0
      %p377 = por %p375, %p376
      %p378 = scmp.ne.s32.totalorder %s367, %s370
      %p379 = scmp.eq.s32.totalorder %s37, 3
      %p380 = por %p378, %p379
      %p381 = scmp.ne.s32.totalorder %s370, %s371
      %p382 = scmp.eq.s32.totalorder %s37, 0
      %p383 = por %p381, %p382
      %p384 = scmp.ne.s32.totalorder %s370, %s371
      %p385 = scmp.eq.s32.totalorder %s38, 3
      %p386 = por %p384, %p385
      %p388 = scmp.ne.s32.totalorder %s371, %s387
      %p389 = scmp.eq.s32.totalorder %s38, 0
      %p390 = por %p388, %p389
      %s391 = ssub.s32 %s40, %s47
      %p392 = scmp.eq.s32.totalorder %s391, 0
      %s394 = sadd.s32 %s393, 1
      %s395 = scalar_select %p392, %s393, %s394
      %p398 = pneg %p392
      %p399 = scmp.eq.s32.totalorder %s32, 3
      %p400 = por %p398, %p399
      %p401 = scmp.ne.s32.totalorder %s393, %s396
      %p402 = scmp.eq.s32.totalorder %s32, 0
      %p403 = por %p401, %p402
      %p404 = scmp.ne.s32.totalorder %s393, %s396
      %p405 = scmp.eq.s32.totalorder %s37, 3
      %p406 = por %p404, %p405
      %p407 = scmp.ne.s32.totalorder %s396, %s397
      %p408 = scmp.eq.s32.totalorder %s37, 0
      %p409 = por %p407, %p408
      %p410 = scmp.ne.s32.totalorder %s396, %s397
      %p411 = scmp.eq.s32.totalorder %s38, 3
      %p412 = por %p410, %p411
      %p414 = scmp.ne.s32.totalorder %s397, %s413
      %p415 = scmp.eq.s32.totalorder %s38, 0
      %p416 = por %p414, %p415
      %s417 = ssub.s32 %s40, %s47
      %p418 = scmp.eq.s32.totalorder %s417, 0
      %s420 = sadd.s32 %s419, 1
      %s421 = scalar_select %p418, %s419, %s420
      %p424 = pneg %p418
      %p425 = scmp.eq.s32.totalorder %s32, 3
      %p426 = por %p424, %p425
      %p427 = scmp.ne.s32.totalorder %s419, %s422
      %p428 = scmp.eq.s32.totalorder %s32, 0
      %p429 = por %p427, %p428
      %p430 = scmp.ne.s32.totalorder %s419, %s422
      %p431 = scmp.eq.s32.totalorder %s37, 3
      %p432 = por %p430, %p431
      %p433 = scmp.ne.s32.totalorder %s422, %s423
      %p434 = scmp.eq.s32.totalorder %s37, 0
      %p435 = por %p433, %p434
      %p436 = scmp.ne.s32.totalorder %s422, %s423
      %p437 = scmp.eq.s32.totalorder %s38, 3
      %p438 = por %p436, %p437
      %p440 = scmp.ne.s32.totalorder %s423, %s439
      %p441 = scmp.eq.s32.totalorder %s38, 0
      %p442 = por %p440, %p441
      %s443 = ssub.s32 %s40, %s47
      %p444 = scmp.eq.s32.totalorder %s443, 0
      %s446 = sadd.s32 %s445, 1
      %s447 = scalar_select %p444, %s445, %s446
      %p450 = pneg %p444
      %p451 = scmp.eq.s32.totalorder %s32, 3
      %p452 = por %p450, %p451
      %p453 = scmp.ne.s32.totalorder %s445, %s448
      %p454 = scmp.eq.s32.totalorder %s32, 0
      %p455 = por %p453, %p454
      %p456 = scmp.ne.s32.totalorder %s445, %s448
      %p457 = scmp.eq.s32.totalorder %s37, 3
      %p458 = por %p456, %p457
      %p459 = scmp.ne.s32.totalorder %s448, %s449
      %p460 = scmp.eq.s32.totalorder %s37, 0
      %p461 = por %p459, %p460
      %p462 = scmp.ne.s32.totalorder %s448, %s449
      %p463 = scmp.eq.s32.totalorder %s38, 3
      %p464 = por %p462, %p463
      %p466 = scmp.ne.s32.totalorder %s449, %s465
      %p467 = scmp.eq.s32.totalorder %s38, 0
      %p468 = por %p466, %p467
      %s469 = ssub.s32 %s40, %s47
      %p470 = scmp.eq.s32.totalorder %s469, 0
      %s472 = sadd.s32 %s471, 1
      %s473 = scalar_select %p470, %s471, %s472
      %p476 = pneg %p470
      %p477 = scmp.eq.s32.totalorder %s32, 3
      %p478 = por %p476, %p477
      %p479 = scmp.ne.s32.totalorder %s471, %s474
      %p480 = scmp.eq.s32.totalorder %s32, 0
      %p481 = por %p479, %p480
      %p482 = scmp.ne.s32.totalorder %s471, %s474
      %p483 = scmp.eq.s32.totalorder %s37, 3
      %p484 = por %p482, %p483
      %p485 = scmp.ne.s32.totalorder %s474, %s475
      %p486 = scmp.eq.s32.totalorder %s37, 0
      %p487 = por %p485, %p486
      %p488 = scmp.ne.s32.totalorder %s474, %s475
      %p489 = scmp.eq.s32.totalorder %s38, 3
      %p490 = por %p488, %p489
      %p492 = scmp.ne.s32.totalorder %s475, %s491
      %p493 = scmp.eq.s32.totalorder %s38, 0
      %p494 = por %p492, %p493
      %s495 = ssub.s32 %s40, %s47
      %p496 = scmp.eq.s32.totalorder %s495, 0
      %s498 = sadd.s32 %s497, 1
      %s499 = scalar_select %p496, %s497, %s498
      %p502 = pneg %p496
      %p503 = scmp.eq.s32.totalorder %s32, 3
      %p504 = por %p502, %p503
      %p505 = scmp.ne.s32.totalorder %s497, %s500
      %p506 = scmp.eq.s32.totalorder %s32, 0
      %p507 = por %p505, %p506
      %p508 = scmp.ne.s32.totalorder %s497, %s500
      %p509 = scmp.eq.s32.totalorder %s37, 3
      %p510 = por %p508, %p509
      %p511 = scmp.ne.s32.totalorder %s500, %s501
      %p512 = scmp.eq.s32.totalorder %s37, 0
      %p513 = por %p511, %p512
      %p514 = scmp.ne.s32.totalorder %s500, %s501
      %p515 = scmp.eq.s32.totalorder %s38, 3
      %p516 = por %p514, %p515
      %p518 = scmp.ne.s32.totalorder %s501, %s517
      %p519 = scmp.eq.s32.totalorder %s38, 0
      %p520 = por %p518, %p519
      %s522 = sadd.s32 %s521, 1
      %p525 = scmp.eq.s32.totalorder %s32, 3
      %p526 = scmp.ne.s32.totalorder %s521, %s523
      %p527 = scmp.eq.s32.totalorder %s32, 0
      %p528 = por %p526, %p527
      %p529 = scmp.ne.s32.totalorder %s521, %s523
      %p530 = scmp.eq.s32.totalorder %s37, 3
      %p531 = por %p529, %p530
      %p532 = scmp.ne.s32.totalorder %s523, %s524
      %p533 = scmp.eq.s32.totalorder %s37, 0
      %p534 = por %p532, %p533
      %p535 = scmp.ne.s32.totalorder %s523, %s524
      %p536 = scmp.eq.s32.totalorder %s38, 3
      %p537 = por %p535, %p536
      %p539 = scmp.ne.s32.totalorder %s524, %s538
      %p540 = scmp.eq.s32.totalorder %s38, 0
      %p541 = por %p539, %p540
      %s543 = sadd.s32 %s542, 1
      %p546 = scmp.eq.s32.totalorder %s32, 3
      %p547 = scmp.ne.s32.totalorder %s542, %s544
      %p548 = scmp.eq.s32.totalorder %s32, 0
      %p549 = por %p547, %p548
      %p550 = scmp.ne.s32.totalorder %s542, %s544
      %p551 = scmp.eq.s32.totalorder %s37, 3
      %p552 = por %p550, %p551
      %p553 = scmp.ne.s32.totalorder %s544, %s545
      %p554 = scmp.eq.s32.totalorder %s37, 0
      %p555 = por %p553, %p554
      %p556 = scmp.ne.s32.totalorder %s544, %s545
      %p557 = scmp.eq.s32.totalorder %s38, 3
      %p558 = por %p556, %p557
      %p560 = scmp.ne.s32.totalorder %s545, %s559
      %p561 = scmp.eq.s32.totalorder %s38, 0
      %p562 = por %p560, %p561
      %s564 = sadd.s32 %s563, 1
      %p567 = scmp.eq.s32.totalorder %s32, 3
      %p568 = scmp.ne.s32.totalorder %s563, %s565
      %p569 = scmp.eq.s32.totalorder %s32, 0
      %p570 = por %p568, %p569
      %p571 = scmp.ne.s32.totalorder %s563, %s565
      %p572 = scmp.eq.s32.totalorder %s37, 3
      %p573 = por %p571, %p572
      %p574 = scmp.ne.s32.totalorder %s565, %s566
      %p575 = scmp.eq.s32.totalorder %s37, 0
      %p576 = por %p574, %p575
      %p577 = scmp.ne.s32.totalorder %s565, %s566
      %p578 = scmp.eq.s32.totalorder %s38, 3
      %p579 = por %p577, %p578
      %p581 = scmp.ne.s32.totalorder %s566, %s580
      %p582 = scmp.eq.s32.totalorder %s38, 0
      %p583 = por %p581, %p582
      %s585 = sadd.s32 %s584, 1
      %p588 = scmp.eq.s32.totalorder %s32, 3
      %p589 = scmp.ne.s32.totalorder %s584, %s586
      %p590 = scmp.eq.s32.totalorder %s32, 0
      %p591 = por %p589, %p590
      %p592 = scmp.ne.s32.totalorder %s584, %s586
      %p593 = scmp.eq.s32.totalorder %s37, 3
      %p594 = por %p592, %p593
      %p595 = scmp.ne.s32.totalorder %s586, %s587
      %p596 = scmp.eq.s32.totalorder %s37, 0
      %p597 = por %p595, %p596
      %p598 = scmp.ne.s32.totalorder %s586, %s587
      %p599 = scmp.eq.s32.totalorder %s38, 3
      %p600 = por %p598, %p599
      %p602 = scmp.ne.s32.totalorder %s587, %s601
      %p603 = scmp.eq.s32.totalorder %s38, 0
      %p604 = por %p602, %p603
      %s605 = ssub.s32 %s39, %s51
      %p606 = scmp.eq.s32.totalorder %s605, 0
      %s608 = sadd.s32 %s607, 1
      %s609 = scalar_select %p606, %s607, %s608
      %p612 = pneg %p606
      %p613 = scmp.eq.s32.totalorder %s32, 3
      %p614 = por %p612, %p613
      %p615 = scmp.ne.s32.totalorder %s607, %s610
      %p616 = scmp.eq.s32.totalorder %s32, 0
      %p617 = por %p615, %p616
      %p618 = scmp.ne.s32.totalorder %s607, %s610
      %p619 = scmp.eq.s32.totalorder %s37, 3
      %p620 = por %p618, %p619
      %p621 = scmp.ne.s32.totalorder %s610, %s611
      %p622 = scmp.eq.s32.totalorder %s37, 0
      %p623 = por %p621, %p622
      %p624 = scmp.ne.s32.totalorder %s610, %s611
      %p625 = scmp.eq.s32.totalorder %s38, 3
      %p626 = por %p624, %p625
      %p628 = scmp.ne.s32.totalorder %s611, %s627
      %p629 = scmp.eq.s32.totalorder %s38, 0
      %p630 = por %p628, %p629
      %p631 = scmp.le.s32.totalorder 1, %s32
      %p632 = scmp.lt.s32.totalorder %s32, 5
      %p633 = pnand %p631, %p632
      %p634 = pneg %p633
      // Predicated region
      $region9: #{context_transformer_forward.1} parent=5 // pred_check
        _
      $region10: #{context_transformer_forward.1} parent=5 // pred_check_branch
        %636 = sbr.rel (%p633) target = $region12
      $region11: #{context_transformer_forward.1} parent=5 // pred_region
        %s637 = ssub.s32 %s32, 1
        // Predicated region
        $region13: #{context_transformer_forward.1} parent=11 // pred_check
          %p638 = pneg %p117
        $region14: #{context_transformer_forward.1} parent=11 // pred_check_branch
          %640 = sbr.rel (%p638) target = $region16
        $region15: #{context_transformer_forward.1} parent=11 // pred_region
          _
        $region16: #{context_transformer_forward.1} parent=11 // pred_fallthru
          _
        // Predicated region
        $region17: #{context_transformer_forward.1} parent=11 // pred_check
          %p641 = pneg %p138
        $region18: #{context_transformer_forward.1} parent=11 // pred_check_branch
          %643 = sbr.rel (%p641) target = $region20
        $region19: #{context_transformer_forward.1} parent=11 // pred_region
          _
        $region20: #{context_transformer_forward.1} parent=11 // pred_fallthru
          _
        // Predicated region
        $region21: #{context_transformer_forward.1} parent=11 // pred_check
          %p644 = pneg %p159
        $region22: #{context_transformer_forward.1} parent=11 // pred_check_branch
          %646 = sbr.rel (%p644) target = $region24
        $region23: #{context_transformer_forward.1} parent=11 // pred_region
          _
        $region24: #{context_transformer_forward.1} parent=11 // pred_fallthru
          _
        // Predicated region
        $region25: #{context_transformer_forward.1} parent=11 // pred_check
          %p647 = pneg %p180
        $region26: #{context_transformer_forward.1} parent=11 // pred_check_branch
          %649 = sbr.rel (%p647) target = $region28
        $region27: #{context_transformer_forward.1} parent=11 // pred_region
          _
        $region28: #{context_transformer_forward.1} parent=11 // pred_fallthru
          _
        // Predicated region
        $region29: #{context_transformer_forward.1} parent=11 // pred_check
          %p650 = pneg %p201
        $region30: #{context_transformer_forward.1} parent=11 // pred_check_branch
          %652 = sbr.rel (%p650) target = $region32
        $region31: #{context_transformer_forward.1} parent=11 // pred_region
          _
        $region32: #{context_transformer_forward.1} parent=11 // pred_fallthru
          _
        // Predicated region
        $region33: #{context_transformer_forward.1} parent=11 // pred_check
          %p653 = pneg %p534
        $region34: #{context_transformer_forward.1} parent=11 // pred_check_branch
          %655 = sbr.rel (%p653) target = $region36
        $region35: #{context_transformer_forward.1} parent=11 // pred_region
          _
        $region36: #{context_transformer_forward.1} parent=11 // pred_fallthru
          _
        // Predicated region
        $region37: #{context_transformer_forward.1} parent=11 // pred_check
          %p656 = pneg %p555
        $region38: #{context_transformer_forward.1} parent=11 // pred_check_branch
          %658 = sbr.rel (%p656) target = $region40
        $region39: #{context_transformer_forward.1} parent=11 // pred_region
          _
        $region40: #{context_transformer_forward.1} parent=11 // pred_fallthru
          _
        // Predicated region
        $region41: #{context_transformer_forward.1} parent=11 // pred_check
          %p659 = pneg %p576
        $region42: #{context_transformer_forward.1} parent=11 // pred_check_branch
          %661 = sbr.rel (%p659) target = $region44
        $region43: #{context_transformer_forward.1} parent=11 // pred_region
          _
        $region44: #{context_transformer_forward.1} parent=11 // pred_fallthru
          _
        // Predicated region
        $region45: #{context_transformer_forward.1} parent=11 // pred_check
          %p662 = pneg %p597
        $region46: #{context_transformer_forward.1} parent=11 // pred_check_branch
          %664 = sbr.rel (%p662) target = $region48
        $region47: #{context_transformer_forward.1} parent=11 // pred_region
          _
        $region48: #{context_transformer_forward.1} parent=11 // pred_fallthru
          _
      $region12: #{context_transformer_forward.1} parent=5 // pred_fallthru
        _
      %p665 = scmp.lt.s32.totalorder %s32, 4
      // Predicated region
      $region49: #{context_transformer_forward.1} parent=5 // pred_check
        %p666 = pneg %p665
      $region50: #{context_transformer_forward.1} parent=5 // pred_check_branch
        %668 = sbr.rel (%p666) target = $region52
      $region51: #{context_transformer_forward.1} parent=5 // pred_region
        // Predicated region
        $region53: #{context_transformer_forward.1} parent=51 // pred_check
          %p669 = pneg %p64
        $region54: #{context_transformer_forward.1} parent=51 // pred_check_branch
          %671 = sbr.rel (%p669) target = $region56
        $region55: #{context_transformer_forward.1} parent=51 // pred_region
          %p672 = scmp.lt.s32.totalorder %s39, 1
          %s673 = scalar_select %p672, %s39, 1
          %s674 = smul.addr %s673, 8
          %s675 = smul.addr %s674, 4
          %s676 = scalar_lea.vmem %s0, %s675
        $region56: #{context_transformer_forward.1} parent=51 // pred_fallthru
          _
        // Predicated region
        $region57: #{context_transformer_forward.1} parent=51 // pred_check
          %p677 = pneg %p90
        $region58: #{context_transformer_forward.1} parent=51 // pred_check_branch
          %679 = sbr.rel (%p677) target = $region60
        $region59: #{context_transformer_forward.1} parent=51 // pred_region
          %p680 = scmp.lt.s32.totalorder %s39, 1
          %s681 = scalar_select %p680, %s39, 1
          %s682 = smul.addr %s681, 3
          %s683 = smul.addr %s682, 4
          %s684 = scalar_lea.vmem %s1, %s683
        $region60: #{context_transformer_forward.1} parent=51 // pred_fallthru
          _
        // Predicated region
        $region61: #{context_transformer_forward.1} parent=51 // pred_check
          %p685 = pneg %p221
        $region62: #{context_transformer_forward.1} parent=51 // pred_check_branch
          %687 = sbr.rel (%p685) target = $region64
        $region63: #{context_transformer_forward.1} parent=51 // pred_region
          %p688 = scmp.lt.s32.totalorder %s40, 1
          %s689 = scalar_select %p688, %s40, 1
          %s690 = smul.addr %s689, 48
          %s691 = smul.addr %s690, 4
          %s692 = scalar_lea.vmem %s7, %s691
        $region64: #{context_transformer_forward.1} parent=51 // pred_fallthru
          _
        // Predicated region
        $region65: #{context_transformer_forward.1} parent=51 // pred_check
          %p693 = pneg %p247
        $region66: #{context_transformer_forward.1} parent=51 // pred_check_branch
          %695 = sbr.rel (%p693) target = $region68
        $region67: #{context_transformer_forward.1} parent=51 // pred_region
          %p696 = scmp.lt.s32.totalorder %s40, 1
          %s697 = scalar_select %p696, %s40, 1
          %s698 = smul.addr %s697, 3
          %s699 = scalar_lea.vmem %s8, %s698
        $region68: #{context_transformer_forward.1} parent=51 // pred_fallthru
          _
        // Predicated region
        $region69: #{context_transformer_forward.1} parent=51 // pred_check
          %p700 = pneg %p273
        $region70: #{context_transformer_forward.1} parent=51 // pred_check_branch
          %702 = sbr.rel (%p700) target = $region72
        $region71: #{context_transformer_forward.1} parent=51 // pred_region
          %p703 = scmp.lt.s32.totalorder %s40, 1
          %s704 = scalar_select %p703, %s40, 1
          %s705 = smul.addr %s704, 16
          %s706 = smul.addr %s705, 4
          %s707 = scalar_lea.vmem %s9, %s706
        $region72: #{context_transformer_forward.1} parent=51 // pred_fallthru
          _
        // Predicated region
        $region73: #{context_transformer_forward.1} parent=51 // pred_check
          %p708 = pneg %p299
        $region74: #{context_transformer_forward.1} parent=51 // pred_check_branch
          %710 = sbr.rel (%p708) target = $region76
        $region75: #{context_transformer_forward.1} parent=51 // pred_region
          %p711 = scmp.lt.s32.totalorder %s40, 1
          %s712 = scalar_select %p711, %s40, 1
          %s713 = scalar_lea.vmem %s10, %s712
        $region76: #{context_transformer_forward.1} parent=51 // pred_fallthru
          _
        // Predicated region
        $region77: #{context_transformer_forward.1} parent=51 // pred_check
          %p714 = pneg %p325
        $region78: #{context_transformer_forward.1} parent=51 // pred_check_branch
          %716 = sbr.rel (%p714) target = $region80
        $region79: #{context_transformer_forward.1} parent=51 // pred_region
          %p717 = scmp.lt.s32.totalorder %s40, 1
          %s718 = scalar_select %p717, %s40, 1
          %s719 = scalar_lea.vmem %s11, %s718
        $region80: #{context_transformer_forward.1} parent=51 // pred_fallthru
          _
        // Predicated region
        $region81: #{context_transformer_forward.1} parent=51 // pred_check
          %p720 = pneg %p351
        $region82: #{context_transformer_forward.1} parent=51 // pred_check_branch
          %722 = sbr.rel (%p720) target = $region84
        $region83: #{context_transformer_forward.1} parent=51 // pred_region
          %p723 = scmp.lt.s32.totalorder %s40, 1
          %s724 = scalar_select %p723, %s40, 1
          %s725 = scalar_lea.vmem %s12, %s724
        $region84: #{context_transformer_forward.1} parent=51 // pred_fallthru
          _
        // Predicated region
        $region85: #{context_transformer_forward.1} parent=51 // pred_check
          %p726 = pneg %p377
        $region86: #{context_transformer_forward.1} parent=51 // pred_check_branch
          %728 = sbr.rel (%p726) target = $region88
        $region87: #{context_transformer_forward.1} parent=51 // pred_region
          %p729 = scmp.lt.s32.totalorder %s40, 1
          %s730 = scalar_select %p729, %s40, 1
          %s731 = smul.addr %s730, 32
          %s732 = smul.addr %s731, 4
          %s733 = scalar_lea.vmem %s13, %s732
        $region88: #{context_transformer_forward.1} parent=51 // pred_fallthru
          _
        // Predicated region
        $region89: #{context_transformer_forward.1} parent=51 // pred_check
          %p734 = pneg %p403
        $region90: #{context_transformer_forward.1} parent=51 // pred_check_branch
          %736 = sbr.rel (%p734) target = $region92
        $region91: #{context_transformer_forward.1} parent=51 // pred_region
          %p737 = scmp.lt.s32.totalorder %s40, 1
          %s738 = scalar_select %p737, %s40, 1
          %s739 = smul.addr %s738, 2
          %s740 = scalar_lea.vmem %s14, %s739
        $region92: #{context_transformer_forward.1} parent=51 // pred_fallthru
          _
        // Predicated region
        $region93: #{context_transformer_forward.1} parent=51 // pred_check
          %p741 = pneg %p429
        $region94: #{context_transformer_forward.1} parent=51 // pred_check_branch
          %743 = sbr.rel (%p741) target = $region96
        $region95: #{context_transformer_forward.1} parent=51 // pred_region
          %p744 = scmp.lt.s32.totalorder %s40, 1
          %s745 = scalar_select %p744, %s40, 1
          %s746 = smul.addr %s745, 32
          %s747 = smul.addr %s746, 4
          %s748 = scalar_lea.vmem %s15, %s747
        $region96: #{context_transformer_forward.1} parent=51 // pred_fallthru
          _
        // Predicated region
        $region97: #{context_transformer_forward.1} parent=51 // pred_check
          %p749 = pneg %p455
        $region98: #{context_transformer_forward.1} parent=51 // pred_check_branch
          %751 = sbr.rel (%p749) target = $region100
        $region99: #{context_transformer_forward.1} parent=51 // pred_region
          %p752 = scmp.lt.s32.totalorder %s40, 1
          %s753 = scalar_select %p752, %s40, 1
          %s754 = scalar_lea.vmem %s16, %s753
        $region100: #{context_transformer_forward.1} parent=51 // pred_fallthru
          _
        // Predicated region
        $region101: #{context_transformer_forward.1} parent=51 // pred_check
          %p755 = pneg %p481
        $region102: #{context_transformer_forward.1} parent=51 // pred_check_branch
          %757 = sbr.rel (%p755) target = $region104
        $region103: #{context_transformer_forward.1} parent=51 // pred_region
          %p758 = scmp.lt.s32.totalorder %s40, 1
          %s759 = scalar_select %p758, %s40, 1
          %s760 = scalar_lea.vmem %s17, %s759
        $region104: #{context_transformer_forward.1} parent=51 // pred_fallthru
          _
        // Predicated region
        $region105: #{context_transformer_forward.1} parent=51 // pred_check
          %p761 = pneg %p507
        $region106: #{context_transformer_forward.1} parent=51 // pred_check_branch
          %763 = sbr.rel (%p761) target = $region108
        $region107: #{context_transformer_forward.1} parent=51 // pred_region
          %p764 = scmp.lt.s32.totalorder %s40, 1
          %s765 = scalar_select %p764, %s40, 1
          %s766 = scalar_lea.vmem %s18, %s765
        $region108: #{context_transformer_forward.1} parent=51 // pred_fallthru
          _
      $region52: #{context_transformer_forward.1} parent=5 // pred_fallthru
        _
      %p767 = scmp.le.s32.totalorder 1, %s32
      %p768 = scmp.lt.s32.totalorder %s32, 5
      %p769 = pnand %p767, %p768
      %p770 = pneg %p769
      // Predicated region
      $region109: #{context_transformer_forward.1} parent=5 // pred_check
        _
      $region110: #{context_transformer_forward.1} parent=5 // pred_check_branch
        %772 = sbr.rel (%p769) target = $region112
      $region111: #{context_transformer_forward.1} parent=5 // pred_region
        %s773 = ssub.s32 %s32, 1
        %p774 = scmp.lt.s32.totalorder %s41, 1
        %s775 = scalar_select %p774, %s41, 1
        %s776 = smul.addr %s775, 8
        %s777 = smul.addr %s776, 4
        %s778 = scalar_lea.vmem %s0, %s777
        %p779 = pneg %p70
        %p780 = pneg %p67
        %p781 = scmp.lt.s32.totalorder %s41, 1
        %s782 = scalar_select %p781, %s41, 1
        %s783 = smul.addr %s782, 3
        %s784 = smul.addr %s783, 4
        %s785 = scalar_lea.vmem %s1, %s784
        %p786 = pneg %p96
        %p787 = pneg %p93
        %p788 = pneg %p117
        %p789 = pneg %p114
        %p790 = pneg %p138
        %p791 = pneg %p135
        %p792 = pneg %p159
        %p793 = pneg %p156
        %p794 = pneg %p180
        %p795 = pneg %p177
        %p796 = pneg %p201
        %p797 = pneg %p198
        %p798 = scmp.lt.s32.totalorder %s42, 1
        %s799 = scalar_select %p798, %s42, 1
        %s800 = smul.addr %s799, 48
        %s801 = smul.addr %s800, 4
        %s802 = scalar_lea.vmem %s7, %s801
        %p803 = pneg %p227
        %p804 = pneg %p224
        %p805 = scmp.lt.s32.totalorder %s42, 1
        %s806 = scalar_select %p805, %s42, 1
        %s807 = smul.addr %s806, 3
        %s808 = scalar_lea.vmem %s8, %s807
        %p809 = pneg %p253
        %p810 = pneg %p250
        %p811 = scmp.lt.s32.totalorder %s42, 1
        %s812 = scalar_select %p811, %s42, 1
        %s813 = smul.addr %s812, 16
        %s814 = smul.addr %s813, 4
        %s815 = scalar_lea.vmem %s9, %s814
        %p816 = pneg %p279
        %p817 = pneg %p276
        %p818 = scmp.lt.s32.totalorder %s42, 1
        %s819 = scalar_select %p818, %s42, 1
        %s820 = scalar_lea.vmem %s10, %s819
        %p821 = pneg %p305
        %p822 = pneg %p302
        %p823 = scmp.lt.s32.totalorder %s42, 1
        %s824 = scalar_select %p823, %s42, 1
        %s825 = scalar_lea.vmem %s11, %s824
        %p826 = pneg %p331
        %p827 = pneg %p328
        %p828 = scmp.lt.s32.totalorder %s42, 1
        %s829 = scalar_select %p828, %s42, 1
        %s830 = scalar_lea.vmem %s12, %s829
        %p831 = pneg %p357
        %p832 = pneg %p354
        %p833 = scmp.lt.s32.totalorder %s42, 1
        %s834 = scalar_select %p833, %s42, 1
        %s835 = smul.addr %s834, 32
        %s836 = smul.addr %s835, 4
        %s837 = scalar_lea.vmem %s13, %s836
        %p838 = pneg %p383
        %p839 = pneg %p380
        %p840 = scmp.lt.s32.totalorder %s42, 1
        %s841 = scalar_select %p840, %s42, 1
        %s842 = smul.addr %s841, 2
        %s843 = scalar_lea.vmem %s14, %s842
        %p844 = pneg %p409
        %p845 = pneg %p406
        %p846 = scmp.lt.s32.totalorder %s42, 1
        %s847 = scalar_select %p846, %s42, 1
        %s848 = smul.addr %s847, 32
        %s849 = smul.addr %s848, 4
        %s850 = scalar_lea.vmem %s15, %s849
        %p851 = pneg %p435
        %p852 = pneg %p432
        %p853 = scmp.lt.s32.totalorder %s42, 1
        %s854 = scalar_select %p853, %s42, 1
        %s855 = scalar_lea.vmem %s16, %s854
        %p856 = pneg %p461
        %p857 = pneg %p458
        %p858 = scmp.lt.s32.totalorder %s42, 1
        %s859 = scalar_select %p858, %s42, 1
        %s860 = scalar_lea.vmem %s17, %s859
        %p861 = pneg %p487
        %p862 = pneg %p484
        %p863 = scmp.lt.s32.totalorder %s42, 1
        %s864 = scalar_select %p863, %s42, 1
        %s865 = scalar_lea.vmem %s18, %s864
        %p866 = pneg %p513
        %p867 = pneg %p510
        %p868 = pneg %p534
        %p869 = pneg %p531
        %p870 = pneg %p555
        %p871 = pneg %p552
        %p872 = pneg %p576
        %p873 = pneg %p573
        %p874 = pneg %p597
        %p875 = pneg %p594
        %p876 = pneg %p623
        %p877 = pneg %p620
        %s878 = sand.u32 %s610, 1
        %s879 = scalar_lea.sflag [#allocation4], %s878
        %s880 = sand.u32 %s610, 1
        %s881 = scalar_lea.vmem [#allocation3], %s880
        %p882 = scmp.lt.s32.totalorder %s41, 1
        %s883 = scalar_select %p882, %s41, 1
        %s884 = smul.addr %s883, 8
        %s885 = smul.addr %s884, 4
        %s886 = scalar_lea.vmem %s0, %s885
        %p887 = scmp.lt.s32.totalorder %s41, 1
        %s888 = scalar_select %p887, %s41, 1
        %s889 = smul.addr %s888, 3
        %s890 = smul.addr %s889, 4
        %s891 = scalar_lea.vmem %s1, %s890
        %p892 = scmp.lt.s32.totalorder %s42, 1
        %s893 = scalar_select %p892, %s42, 1
        %s894 = smul.addr %s893, 48
        %s895 = smul.addr %s894, 4
        %s896 = scalar_lea.vmem %s7, %s895
        %p897 = scmp.lt.s32.totalorder %s42, 1
        %s898 = scalar_select %p897, %s42, 1
        %s899 = smul.addr %s898, 3
        %s900 = scalar_lea.vmem %s8, %s899
        %p901 = scmp.lt.s32.totalorder %s42, 1
        %s902 = scalar_select %p901, %s42, 1
        %s903 = smul.addr %s902, 16
        %s904 = smul.addr %s903, 4
        %s905 = scalar_lea.vmem %s9, %s904
        %p906 = scmp.lt.s32.totalorder %s42, 1
        %s907 = scalar_select %p906, %s42, 1
        %s908 = scalar_lea.vmem %s10, %s907
        %p909 = scmp.lt.s32.totalorder %s42, 1
        %s910 = scalar_select %p909, %s42, 1
        %s911 = scalar_lea.vmem %s11, %s910
        %p912 = scmp.lt.s32.totalorder %s42, 1
        %s913 = scalar_select %p912, %s42, 1
        %s914 = scalar_lea.vmem %s12, %s913
        %p915 = scmp.lt.s32.totalorder %s42, 1
        %s916 = scalar_select %p915, %s42, 1
        %s917 = smul.addr %s916, 32
        %s918 = smul.addr %s917, 4
        %s919 = scalar_lea.vmem %s13, %s918
        %p920 = scmp.lt.s32.totalorder %s42, 1
        %s921 = scalar_select %p920, %s42, 1
        %s922 = smul.addr %s921, 2
        %s923 = scalar_lea.vmem %s14, %s922
        %p924 = scmp.lt.s32.totalorder %s42, 1
        %s925 = scalar_select %p924, %s42, 1
        %s926 = smul.addr %s925, 32
        %s927 = smul.addr %s926, 4
        %s928 = scalar_lea.vmem %s15, %s927
        %p929 = scmp.lt.s32.totalorder %s42, 1
        %s930 = scalar_select %p929, %s42, 1
        %s931 = scalar_lea.vmem %s16, %s930
        %p932 = scmp.lt.s32.totalorder %s42, 1
        %s933 = scalar_select %p932, %s42, 1
        %s934 = scalar_lea.vmem %s17, %s933
        %p935 = scmp.lt.s32.totalorder %s42, 1
        %s936 = scalar_select %p935, %s42, 1
        %s937 = scalar_lea.vmem %s18, %s936
        %p939 = scmp.eq.s32.totalorder %s42, 0
        // Predicated region
        $region113: #{context_transformer_forward.1} parent=111 // pred_check
          %p940 = pneg %p939
        $region114: #{context_transformer_forward.1} parent=111 // pred_check_branch
          %942 = sbr.rel (%p940) target = $region116
        $region115: #{context_transformer_forward.1} parent=111 // pred_region
          %v943 = vld [vmem:[%s2] sm:$0xff]
          %v944 = vld [vmem:[%s2 + $0x8] sm:$0xff]
          %v945 = vld [vmem:[%s2 + $0x10] sm:$0xff]
          %v946 = vld [vmem:[%s2 + $0x18] sm:$0xff]
          %v947 = vld [vmem:[%s2 + $0x20] sm:$0xff]
          %v948 = vld [vmem:[%s2 + $0x28] sm:$0xff]
          %v949 = vld [vmem:[%s2 + $0x30] sm:$0xff]
          %v950 = vld [vmem:[%s2 + $0x38] sm:$0xff]
          %v951 = vld [vmem:[%s2 + $0x40] sm:$0xff]
          %952 = vst [vmem:[#allocation2] sm:$0xff] %v943
          %953 = vst [vmem:[#allocation2 + $0x8] sm:$0xff] %v944
          %954 = vst [vmem:[#allocation2 + $0x10] sm:$0xff] %v945
          %955 = vst [vmem:[#allocation2 + $0x18] sm:$0xff] %v946
          %956 = vst [vmem:[#allocation2 + $0x20] sm:$0xff] %v947
          %957 = vst [vmem:[#allocation2 + $0x28] sm:$0xff] %v948
          %958 = vst [vmem:[#allocation2 + $0x30] sm:$0xff] %v949
          %959 = vst [vmem:[#allocation2 + $0x38] sm:$0xff] %v950
          %960 = vst [vmem:[#allocation2 + $0x40] sm:$0xff] %v951
          %v961 = vld [vmem:[%s886] sm:$0xf]
          %v962 = vld [vmem:[%s886 + $0x4] sm:$0xf]
          %v963 = vld [vmem:[%s886 + $0x8] sm:$0xf]
          %v964 = vld [vmem:[%s886 + $0xc] sm:$0xf]
          %v965 = vld [vmem:[%s886 + $0x10] sm:$0xf]
          %v966 = vld [vmem:[%s886 + $0x14] sm:$0xf]
          %v967 = vld [vmem:[%s886 + $0x18] sm:$0xf]
          %v968 = vld [vmem:[%s886 + $0x1c] sm:$0xf]
          %v969 = vld [vmem:[%s3] sm:$0xf]
          %v970 = vld [vmem:[%s3 + $0x4] sm:$0x3]
          %v971 = vld [vmem:[%s4] sm:$0x1]
          %v973 = vlaneseq
          %v974 = vshrl.u32 %v973, 7
          %v975 = vsub.s32 0, %v974
          %v976 = vrot.slane %v971, %v975
          %v986 = vunpack.c.l.b16 %v961
          %v987 = vunpack.c.l.b16 %v962
          %v988 = vunpack.c.l.b16 %v963
          %v989 = vunpack.c.l.b16 %v964
          %v990 = vunpack.c.l.b16 %v965
          %v991 = vunpack.c.l.b16 %v966
          %v992 = vunpack.c.l.b16 %v967
          %v993 = vunpack.c.l.b16 %v968
          %v994 = vpack.c.b16 %v987, %v986
          %v995 = vpack.c.b16 %v989, %v988
          %v996 = vpack.c.b16 %v991, %v990
          %v997 = vpack.c.b16 %v993, %v992
          %v1000 = vunpack.c.l.b16 %v969
          %v1001 = vunpack.c.l.b16 %v970
          %v1002 = vpack.c.b16 %v1001, %v1000
          %vm1003 = vcmask 97280
          %v1005 = vsel %vm1003, %v994, 0
          %v1008 = vsel %vm1003, %v995, 0
          %v1011 = vsel %vm1003, %v996, 0
          %v1014 = vsel %vm1003, %v997, 0
          %vm1016 = vcmask 1045504
          %v1018 = vsel %vm1016, %v1002, 0
          %1020 = vmatprep.subr.bf16.mxu0 0
          %1021 = vmatpush1.bf16.msra.mxu0 %v1018
          %1022 = vmatprep.subr.bf16.mxu0 0
          %1023 = vmatpush1.bf16.msra.mxu0 0
          %1024 = vmatprep.subr.bf16.mxu0 0
          %1025 = vmatpush1.bf16.msra.mxu0 0
          %1026 = vmatprep.subr.bf16.mxu0 0
          %1027 = vmatpush1.bf16.msra.mxu0 0
          %1028 = vmatprep.subr.bf16.mxu0 0
          %1029 = vmatpush1.bf16.msra.mxu0 0
          %1030 = vmatprep.subr.bf16.mxu0 0
          %1031 = vmatpush1.bf16.msra.mxu0 0
          %1032 = vmatprep.subr.bf16.mxu0 0
          %1033 = vmatpush1.bf16.msra.mxu0 0
          %1034 = vmatprep.subr.bf16.mxu0 0
          %1035 = vmatpush1.bf16.msra.mxu0 0
          %1036 = vmatprep.subr.bf16.mxu0 0
          %1037 = vmatpush1.bf16.msra.mxu0 0
          %1038 = vmatprep.subr.bf16.mxu0 0
          %1039 = vmatpush1.bf16.msra.mxu0 0
          %1040 = vmatprep.subr.bf16.mxu0 0
          %1041 = vmatpush1.bf16.msra.mxu0 0
          %1042 = vmatprep.subr.bf16.mxu0 0
          %1043 = vmatpush1.bf16.msra.mxu0 0
          %1044 = vmatprep.subr.bf16.mxu0 0
          %1045 = vmatpush1.bf16.msra.mxu0 0
          %1046 = vmatprep.subr.bf16.mxu0 0
          %1047 = vmatpush1.bf16.msra.mxu0 0
          %1048 = vmatprep.subr.bf16.mxu0 0
          %1049 = vmatpush1.bf16.msra.mxu0 0
          %1050 = vmatprep.subr.bf16.mxu0 0
          %1051 = vmatpush1.bf16.msra.mxu0 0
          %1052 = vmatprep.mubr.bf16.mxu0 0
          %1053 = vmatmul.mubr.bf16.gmra.mrb[0].mxu0 %v1005
          %v1054 = vpop.f32.mrb[0].mxu0
          %v1055 = vadd.f32 %v976, %v1054
          %v1056 = vpop.f32.mrb[0].mxu0
          %v1057 = vpop.f32.mrb[0].mxu0
          %v1058 = vadd.f32 %v976, %v1057
          %v1059 = vpop.f32.mrb[0].mxu0
          %1060 = vmatprep.mubr.bf16.mxu0 0
          %1061 = vmatmul.mubr.bf16.gmra.mrb[0].mxu0 %v1008
          %v1062 = vpop.f32.mrb[0].mxu0
          %v1063 = vadd.f32 %v976, %v1062
          %v1064 = vpop.f32.mrb[0].mxu0
          %v1065 = vpop.f32.mrb[0].mxu0
          %v1066 = vadd.f32 %v976, %v1065
          %v1067 = vpop.f32.mrb[0].mxu0
          %1068 = vmatprep.mubr.bf16.mxu0 0
          %1069 = vmatmul.mubr.bf16.gmra.mrb[0].mxu0 %v1011
          %v1070 = vpop.f32.mrb[0].mxu0
          %v1071 = vadd.f32 %v976, %v1070
          %v1072 = vpop.f32.mrb[0].mxu0
          %v1073 = vpop.f32.mrb[0].mxu0
          %v1074 = vadd.f32 %v976, %v1073
          %v1075 = vpop.f32.mrb[0].mxu0
          %1076 = vmatprep.mubr.bf16.mxu0 0
          %1077 = vmatmul.mubr.bf16.gmra.mrb[0].mxu0 %v1014
          %v1078 = vpop.f32.mrb[0].mxu0
          %v1079 = vadd.f32 %v976, %v1078
          %v1080 = vpop.f32.mrb[0].mxu0
          %v1081 = vpop.f32.mrb[0].mxu0
          %v1082 = vadd.f32 %v976, %v1081
          %v1083 = vpop.f32.mrb[0].mxu0
          %1084 = vdwg.mxu0
          %v1085 = vld [vmem:[%s2 + $0x1] sm:$0xff]
          %v1086 = vld [vmem:[%s2 + $0x9] sm:$0xff]
          %v1087 = vld [vmem:[%s2 + $0x11] sm:$0xff]
          %v1088 = vld [vmem:[%s2 + $0x19] sm:$0xff]
          %v1089 = vld [vmem:[%s2 + $0x21] sm:$0xff]
          %v1090 = vld [vmem:[%s2 + $0x29] sm:$0xff]
          %v1091 = vld [vmem:[%s2 + $0x31] sm:$0xff]
          %v1092 = vld [vmem:[%s2 + $0x39] sm:$0xff]
          %v1093 = vadd.f32 %v1085, %v1055
          %v1094 = vadd.f32 %v1086, %v1058
          %v1095 = vadd.f32 %v1087, %v1063
          %v1096 = vadd.f32 %v1088, %v1066
          %v1097 = vadd.f32 %v1089, %v1071
          %v1098 = vadd.f32 %v1090, %v1074
          %v1099 = vadd.f32 %v1091, %v1079
          %v1100 = vadd.f32 %v1092, %v1082
          %1101 = vst [vmem:[#allocation2 + $0x1] sm:$0xff] %v1093
          %1102 = vst [vmem:[#allocation2 + $0x9] sm:$0xff] %v1094
          %1103 = vst [vmem:[#allocation2 + $0x11] sm:$0xff] %v1095
          %1104 = vst [vmem:[#allocation2 + $0x19] sm:$0xff] %v1096
          %1105 = vst [vmem:[#allocation2 + $0x21] sm:$0xff] %v1097
          %1106 = vst [vmem:[#allocation2 + $0x29] sm:$0xff] %v1098
          %1107 = vst [vmem:[#allocation2 + $0x31] sm:$0xff] %v1099
          %1108 = vst [vmem:[#allocation2 + $0x39] sm:$0xff] %v1100
          %v1109 = vld [vmem:[%s891] sm:$0x77]
          %v1110 = vld [vmem:[%s891 + $0x8] sm:$0x7]
          %v1111 = vld [vmem:[%s5] sm:$0xf]
          %v1112 = vld [vmem:[%s5 + $0x4] sm:$0xf]
          %v1113 = vld [vmem:[%s5 + $0x8] sm:$0xf]
          %v1114 = vld [vmem:[%s5 + $0xc] sm:$0xf]
          %v1115 = vld [vmem:[%s5 + $0x10] sm:$0xf]
          %v1116 = vld [vmem:[%s5 + $0x14] sm:$0xf]
          %v1117 = vld [vmem:[%s5 + $0x18] sm:$0xf]
          %v1118 = vld [vmem:[%s5 + $0x1c] sm:$0xf]
          %v1119 = vld [vmem:[%s5 + $0x20] sm:$0xf]
          %v1120 = vld [vmem:[%s5 + $0x24] sm:$0xf]
          %v1121 = vld [vmem:[%s5 + $0x28] sm:$0xf]
          %v1122 = vld [vmem:[%s5 + $0x2c] sm:$0xf]
          %v1123 = vld [vmem:[%s5 + $0x30] sm:$0xf]
          %v1124 = vld [vmem:[%s5 + $0x34] sm:$0xf]
          %v1125 = vld [vmem:[%s5 + $0x38] sm:$0xf]
          %v1126 = vld [vmem:[%s5 + $0x3c] sm:$0xf]
          %v1127 = vld [vmem:[%s5 + $0x40] sm:$0xf]
          %v1128 = vld [vmem:[%s5 + $0x44] sm:$0xf]
          %v1129 = vld [vmem:[%s5 + $0x48] sm:$0xf]
          %v1130 = vld [vmem:[%s5 + $0x4c] sm:$0xf]
          %v1131 = vld [vmem:[%s5 + $0x50] sm:$0xf]
          %v1132 = vld [vmem:[%s5 + $0x54] sm:$0xf]
          %v1133 = vld [vmem:[%s5 + $0x58] sm:$0xf]
          %v1134 = vld [vmem:[%s5 + $0x5c] sm:$0xf]
          %v1135 = vld [vmem:[%s5 + $0x60] sm:$0xf]
          %v1136 = vld [vmem:[%s5 + $0x64] sm:$0xf]
          %v1137 = vld [vmem:[%s5 + $0x68] sm:$0xf]
          %v1138 = vld [vmem:[%s5 + $0x6c] sm:$0xf]
          %v1139 = vld [vmem:[%s5 + $0x70] sm:$0xf]
          %v1140 = vld [vmem:[%s5 + $0x74] sm:$0xf]
          %v1141 = vld [vmem:[%s5 + $0x78] sm:$0xf]
          %v1142 = vld [vmem:[%s5 + $0x7c] sm:$0xf]
          %v1143 = vld [vmem:[%s5 + $0x80] sm:$0xf]
          %v1144 = vld [vmem:[%s5 + $0x84] sm:$0xf]
          %v1145 = vld [vmem:[%s5 + $0x88] sm:$0xf]
          %v1146 = vld [vmem:[%s5 + $0x8c] sm:$0xf]
          %v1147 = vld [vmem:[%s5 + $0x90] sm:$0xf]
          %v1148 = vld [vmem:[%s5 + $0x94] sm:$0x3]
          %v1149 = vld [vmem:[%s6] sm:$0x1]
          %v1151 = vlaneseq
          %v1152 = vshrl.u32 %v1151, 7
          %v1153 = vsub.s32 0, %v1152
          %v1154 = vrot.slane %v1149, %v1153
          %v1158 = vunpack.c.l.b16 %v1109
          %v1159 = vunpack.c.h.b16 %v1109
          %v1160 = vunpack.c.l.b16 %v1110
          %v1161 = vpack.c.b16 %v1158, %v1158
          %v1162 = vpack.c.b16 %v1159, %v1159
          %v1163 = vpack.c.b16 %v1160, %v1160
          %v1204 = vunpack.c.l.b16 %v1111
          %v1205 = vunpack.c.l.b16 %v1112
          %v1206 = vunpack.c.l.b16 %v1113
          %v1207 = vunpack.c.l.b16 %v1114
          %v1208 = vunpack.c.l.b16 %v1115
          %v1209 = vunpack.c.l.b16 %v1116
          %v1210 = vunpack.c.l.b16 %v1117
          %v1211 = vunpack.c.l.b16 %v1118
          %v1212 = vunpack.c.l.b16 %v1119
          %v1213 = vunpack.c.l.b16 %v1120
          %v1214 = vunpack.c.l.b16 %v1121
          %v1215 = vunpack.c.l.b16 %v1122
          %v1216 = vunpack.c.l.b16 %v1123
          %v1217 = vunpack.c.l.b16 %v1124
          %v1218 = vunpack.c.l.b16 %v1125
          %v1219 = vunpack.c.l.b16 %v1126
          %v1220 = vunpack.c.l.b16 %v1127
          %v1221 = vunpack.c.l.b16 %v1128
          %v1222 = vunpack.c.l.b16 %v1129
          %v1223 = vunpack.c.l.b16 %v1130
          %v1224 = vunpack.c.l.b16 %v1131
          %v1225 = vunpack.c.l.b16 %v1132
          %v1226 = vunpack.c.l.b16 %v1133
          %v1227 = vunpack.c.l.b16 %v1134
          %v1228 = vunpack.c.l.b16 %v1135
          %v1229 = vunpack.c.l.b16 %v1136
          %v1230 = vunpack.c.l.b16 %v1137
          %v1231 = vunpack.c.l.b16 %v1138
          %v1232 = vunpack.c.l.b16 %v1139
          %v1233 = vunpack.c.l.b16 %v1140
          %v1234 = vunpack.c.l.b16 %v1141
          %v1235 = vunpack.c.l.b16 %v1142
          %v1236 = vunpack.c.l.b16 %v1143
          %v1237 = vunpack.c.l.b16 %v1144
          %v1238 = vunpack.c.l.b16 %v1145
          %v1239 = vunpack.c.l.b16 %v1146
          %v1240 = vunpack.c.l.b16 %v1147
          %v1241 = vunpack.c.l.b16 %v1148
          %v1242 = vpack.c.b16 %v1205, %v1204
          %v1243 = vpack.c.b16 %v1207, %v1206
          %v1244 = vpack.c.b16 %v1209, %v1208
          %v1245 = vpack.c.b16 %v1211, %v1210
          %v1246 = vpack.c.b16 %v1213, %v1212
          %v1247 = vpack.c.b16 %v1215, %v1214
          %v1248 = vpack.c.b16 %v1217, %v1216
          %v1249 = vpack.c.b16 %v1219, %v1218
          %v1250 = vpack.c.b16 %v1221, %v1220
          %v1251 = vpack.c.b16 %v1223, %v1222
          %v1252 = vpack.c.b16 %v1225, %v1224
          %v1253 = vpack.c.b16 %v1227, %v1226
          %v1254 = vpack.c.b16 %v1229, %v1228
          %v1255 = vpack.c.b16 %v1231, %v1230
          %v1256 = vpack.c.b16 %v1233, %v1232
          %v1257 = vpack.c.b16 %v1235, %v1234
          %v1258 = vpack.c.b16 %v1237, %v1236
          %v1259 = vpack.c.b16 %v1239, %v1238
          %v1260 = vpack.c.b16 %v1241, %v1240
          %vm1279 = vcmask 359424
          %v1281 = vsel %vm1279, %v1163, 0
          %v1284 = vsel %vm1016, %v1260, 0
          %1286 = vmatprep.subr.bf16.mxu0 0
          %1287 = vmatpush1.bf16.msra.mxu0 %v1242
          %1288 = vmatprep.subr.bf16.mxu0 0
          %1289 = vmatpush1.bf16.msra.mxu0 %v1243
          %1290 = vmatprep.subr.bf16.mxu0 0
          %1291 = vmatpush1.bf16.msra.mxu0 %v1244
          %1292 = vmatprep.subr.bf16.mxu0 0
          %1293 = vmatpush1.bf16.msra.mxu0 %v1245
          %1294 = vmatprep.subr.bf16.mxu0 0
          %1295 = vmatpush1.bf16.msra.mxu0 %v1246
          %1296 = vmatprep.subr.bf16.mxu0 0
          %1297 = vmatpush1.bf16.msra.mxu0 %v1247
          %1298 = vmatprep.subr.bf16.mxu0 0
          %1299 = vmatpush1.bf16.msra.mxu0 %v1248
          %1300 = vmatprep.subr.bf16.mxu0 0
          %1301 = vmatpush1.bf16.msra.mxu0 %v1249
          %1302 = vmatprep.subr.bf16.mxu0 0
          %1303 = vmatpush1.bf16.msra.mxu0 %v1250
          %1304 = vmatprep.subr.bf16.mxu0 0
          %1305 = vmatpush1.bf16.msra.mxu0 %v1251
          %1306 = vmatprep.subr.bf16.mxu0 0
          %1307 = vmatpush1.bf16.msra.mxu0 %v1252
          %1308 = vmatprep.subr.bf16.mxu0 0
          %1309 = vmatpush1.bf16.msra.mxu0 %v1253
          %1310 = vmatprep.subr.bf16.mxu0 0
          %1311 = vmatpush1.bf16.msra.mxu0 %v1254
          %1312 = vmatprep.subr.bf16.mxu0 0
          %1313 = vmatpush1.bf16.msra.mxu0 %v1255
          %1314 = vmatprep.subr.bf16.mxu0 0
          %1315 = vmatpush1.bf16.msra.mxu0 %v1256
          %1316 = vmatprep.subr.bf16.mxu0 0
          %1317 = vmatpush1.bf16.msra.mxu0 %v1257
          %1318 = vmatprep.mubr.bf16.mxu0 %v1162
          %1319 = vmatmul.mubr.bf16.gmra.mrb[0].mxu0 %v1161
          %v1320 = vpop.f32.mrb[0].mxu0
          %v1321 = vadd.f32 %v1154, %v1320
          %v1322 = vpop.f32.mrb[0].mxu0
          %v1323 = vpop.f32.mrb[0].mxu0
          %v1324 = vpop.f32.mrb[0].mxu0
          %1325 = vdwg.mxu0
          %1326 = vmatprep.subr.bf16.mxu0 0
          %1327 = vmatpush1.bf16.msra.mxu0 %v1258
          %1328 = vmatprep.subr.bf16.mxu0 0
          %1329 = vmatpush1.bf16.msra.mxu0 %v1259
          %1330 = vmatprep.subr.bf16.mxu0 0
          %1331 = vmatpush1.bf16.msra.mxu0 %v1284
          %1332 = vmatprep.subr.bf16.mxu0 0
          %1333 = vmatpush1.bf16.msra.mxu0 0
          %1334 = vmatprep.subr.bf16.mxu0 0
          %1335 = vmatpush1.bf16.msra.mxu0 0
          %1336 = vmatprep.subr.bf16.mxu0 0
          %1337 = vmatpush1.bf16.msra.mxu0 0
          %1338 = vmatprep.subr.bf16.mxu0 0
          %1339 = vmatpush1.bf16.msra.mxu0 0
          %1340 = vmatprep.subr.bf16.mxu0 0
          %1341 = vmatpush1.bf16.msra.mxu0 0
          %1342 = vmatprep.subr.bf16.mxu0 0
          %1343 = vmatpush1.bf16.msra.mxu0 0
          %1344 = vmatprep.subr.bf16.mxu0 0
          %1345 = vmatpush1.bf16.msra.mxu0 0
          %1346 = vmatprep.subr.bf16.mxu0 0
          %1347 = vmatpush1.bf16.msra.mxu0 0
          %1348 = vmatprep.subr.bf16.mxu0 0
          %1349 = vmatpush1.bf16.msra.mxu0 0
          %1350 = vmatprep.subr.bf16.mxu0 0
          %1351 = vmatpush1.bf16.msra.mxu0 0
          %1352 = vmatprep.subr.bf16.mxu0 0
          %1353 = vmatpush1.bf16.msra.mxu0 0
          %1354 = vmatprep.subr.bf16.mxu0 0
          %1355 = vmatpush1.bf16.msra.mxu0 0
          %1356 = vmatprep.subr.bf16.mxu0 0
          %1357 = vmatpush1.bf16.msra.mxu0 0
          %1358 = vmatprep.mubr.bf16.mxu0 0
          %1359 = vmatmul.mubr.bf16.gmra.mrb[0].mxu0 %v1281
          %v1360 = vpop.f32.mrb[0].mxu0
          %v1361 = vadd.f32 %v1321, %v1360
          %v1362 = vpop.f32.mrb[0].mxu0
          %v1363 = vpop.f32.mrb[0].mxu0
          %v1364 = vpop.f32.mrb[0].mxu0
          %1365 = vdwg.mxu0
          %1366 = vst [vmem:[#allocation2 + $0x41] sm:$0x3f] %v1361
        $region116: #{context_transformer_forward.1} parent=111 // pred_fallthru
          _
        %v1367 = vld [vmem:[#allocation2] sm:$0xff]
        %v1368 = vld [vmem:[#allocation2 + $0x8] sm:$0xff]
        %v1369 = vld [vmem:[#allocation2 + $0x10] sm:$0xff]
        %v1370 = vld [vmem:[#allocation2 + $0x18] sm:$0xff]
        %v1371 = vld [vmem:[#allocation2 + $0x20] sm:$0xff]
        %v1372 = vld [vmem:[#allocation2 + $0x28] sm:$0xff]
        %v1373 = vld [vmem:[#allocation2 + $0x30] sm:$0xff]
        %v1374 = vld [vmem:[#allocation2 + $0x38] sm:$0xff]
        %v1375 = vld [vmem:[#allocation2 + $0x40] sm:$0xff]
        %v1376 = vpack.c.bf16 %v1368, %v1367
        %v1377 = vpack.c.bf16 %v1370, %v1369
        %v1378 = vpack.c.bf16 %v1372, %v1371
        %v1379 = vpack.c.bf16 %v1374, %v1373
        %v1380 = vpack.c.bf16 %v1375, %v1375
        %v1381 = vld [vmem:[%s896] sm:$0xff]
        %v1382 = vld [vmem:[%s896 + $0x8] sm:$0xf]
        %v1383 = vld [vmem:[%s896 + $0xc] sm:$0xff]
        %v1384 = vld [vmem:[%s896 + $0x14] sm:$0xf]
        %v1385 = vld [vmem:[%s896 + $0x18] sm:$0xff]
        %v1386 = vld [vmem:[%s896 + $0x20] sm:$0xf]
        %v1387 = vld [vmem:[%s896 + $0x24] sm:$0xff]
        %v1388 = vld [vmem:[%s896 + $0x2c] sm:$0xf]
        %v1389 = vld [vmem:[%s896 + $0x30] sm:$0xff]
        %v1390 = vld [vmem:[%s896 + $0x38] sm:$0xf]
        %v1391 = vld [vmem:[%s896 + $0x3c] sm:$0xff]
        %v1392 = vld [vmem:[%s896 + $0x44] sm:$0xf]
        %v1393 = vld [vmem:[%s896 + $0x48] sm:$0xff]
        %v1394 = vld [vmem:[%s896 + $0x50] sm:$0xf]
        %v1395 = vld [vmem:[%s896 + $0x54] sm:$0xff]
        %v1396 = vld [vmem:[%s896 + $0x5c] sm:$0xf]
        %v1397 = vld [vmem:[%s896 + $0x60] sm:$0xff]
        %v1398 = vld [vmem:[%s896 + $0x68] sm:$0xf]
        %v1399 = vld [vmem:[%s896 + $0x6c] sm:$0xff]
        %v1400 = vld [vmem:[%s896 + $0x74] sm:$0xf]
        %v1401 = vld [vmem:[%s896 + $0x78] sm:$0xff]
        %v1402 = vld [vmem:[%s896 + $0x80] sm:$0xf]
        %v1403 = vld [vmem:[%s896 + $0x84] sm:$0xff]
        %v1404 = vld [vmem:[%s896 + $0x8c] sm:$0xf]
        %v1405 = vld [vmem:[%s896 + $0x90] sm:$0xff]
        %v1406 = vld [vmem:[%s896 + $0x98] sm:$0xf]
        %v1407 = vld [vmem:[%s896 + $0x9c] sm:$0xff]
        %v1408 = vld [vmem:[%s896 + $0xa4] sm:$0xf]
        %v1409 = vld [vmem:[%s896 + $0xa8] sm:$0xff]
        %v1410 = vld [vmem:[%s896 + $0xb0] sm:$0xf]
        %v1411 = vld [vmem:[%s896 + $0xb4] sm:$0xff]
        %v1412 = vld [vmem:[%s896 + $0xbc] sm:$0xf]
        %v1413 = vld [vmem:[%s900] sm:$0x7]
        %v1415 = vlaneseq
        %v1416 = vshrl.u32 %v1415, 7
        %v1417 = vsub.s32 0, %v1416
        %v1418 = vrot.slane %v1413, %v1417
        %v1419 = vlaneseq
        %v1420 = vshrl.u32 %v1419, 7
        %v1421 = vsub.s32 1, %v1420
        %v1422 = vrot.slane %v1413, %v1421
        %v1423 = vlaneseq
        %v1424 = vshrl.u32 %v1423, 7
        %v1425 = vsub.s32 2, %v1424
        %v1426 = vrot.slane %v1413, %v1425
        %v1462 = vunpack.c.l.b16 %v1381
        %v1463 = vunpack.c.h.b16 %v1381
        %v1464 = vunpack.c.l.b16 %v1382
        %v1465 = vunpack.c.l.b16 %v1383
        %v1466 = vunpack.c.h.b16 %v1383
        %v1467 = vunpack.c.l.b16 %v1384
        %v1468 = vunpack.c.l.b16 %v1385
        %v1469 = vunpack.c.h.b16 %v1385
        %v1470 = vunpack.c.l.b16 %v1386
        %v1471 = vunpack.c.l.b16 %v1387
        %v1472 = vunpack.c.h.b16 %v1387
        %v1473 = vunpack.c.l.b16 %v1388
        %v1474 = vunpack.c.l.b16 %v1389
        %v1475 = vunpack.c.h.b16 %v1389
        %v1476 = vunpack.c.l.b16 %v1390
        %v1477 = vunpack.c.l.b16 %v1391
        %v1478 = vunpack.c.h.b16 %v1391
        %v1479 = vunpack.c.l.b16 %v1392
        %v1480 = vunpack.c.l.b16 %v1393
        %v1481 = vunpack.c.h.b16 %v1393
        %v1482 = vunpack.c.l.b16 %v1394
        %v1483 = vunpack.c.l.b16 %v1395
        %v1484 = vunpack.c.h.b16 %v1395
        %v1485 = vunpack.c.l.b16 %v1396
        %v1486 = vunpack.c.l.b16 %v1397
        %v1487 = vunpack.c.h.b16 %v1397
        %v1488 = vunpack.c.l.b16 %v1398
        %v1489 = vunpack.c.l.b16 %v1399
        %v1490 = vunpack.c.h.b16 %v1399
        %v1491 = vunpack.c.l.b16 %v1400
        %v1492 = vunpack.c.l.b16 %v1401
        %v1493 = vunpack.c.h.b16 %v1401
        %v1494 = vunpack.c.l.b16 %v1402
        %v1495 = vunpack.c.l.b16 %v1403
        %v1496 = vunpack.c.h.b16 %v1403
        %v1497 = vunpack.c.l.b16 %v1404
        %v1498 = vunpack.c.l.b16 %v1405
        %v1499 = vunpack.c.h.b16 %v1405
        %v1500 = vunpack.c.l.b16 %v1406
        %v1501 = vunpack.c.l.b16 %v1407
        %v1502 = vunpack.c.h.b16 %v1407
        %v1503 = vunpack.c.l.b16 %v1408
        %v1504 = vunpack.c.l.b16 %v1409
        %v1505 = vunpack.c.h.b16 %v1409
        %v1506 = vunpack.c.l.b16 %v1410
        %v1507 = vunpack.c.l.b16 %v1411
        %v1508 = vunpack.c.h.b16 %v1411
        %v1509 = vunpack.c.l.b16 %v1412
        %v1510 = vpack.c.b16 %v1465, %v1462
        %v1511 = vpack.c.b16 %v1466, %v1463
        %v1512 = vpack.c.b16 %v1467, %v1464
        %v1513 = vpack.c.b16 %v1471, %v1468
        %v1514 = vpack.c.b16 %v1472, %v1469
        %v1515 = vpack.c.b16 %v1473, %v1470
        %v1516 = vpack.c.b16 %v1477, %v1474
        %v1517 = vpack.c.b16 %v1478, %v1475
        %v1518 = vpack.c.b16 %v1479, %v1476
        %v1519 = vpack.c.b16 %v1483, %v1480
        %v1520 = vpack.c.b16 %v1484, %v1481
        %v1521 = vpack.c.b16 %v1485, %v1482
        %v1522 = vpack.c.b16 %v1489, %v1486
        %v1523 = vpack.c.b16 %v1490, %v1487
        %v1524 = vpack.c.b16 %v1491, %v1488
        %v1525 = vpack.c.b16 %v1495, %v1492
        %v1526 = vpack.c.b16 %v1496, %v1493
        %v1527 = vpack.c.b16 %v1497, %v1494
        %v1528 = vpack.c.b16 %v1501, %v1498
        %v1529 = vpack.c.b16 %v1502, %v1499
        %v1530 = vpack.c.b16 %v1503, %v1500
        %v1531 = vpack.c.b16 %v1507, %v1504
        %v1532 = vpack.c.b16 %v1508, %v1505
        %v1533 = vpack.c.b16 %v1509, %v1506
        %1558 = vmatprep.subr.bf16.mxu0 %v1511
        %1559 = vmatpush1.bf16.msra.mxu0 %v1510
        %1560 = vmatprep.subr.bf16.mxu0 %v1514
        %1561 = vmatpush1.bf16.msra.mxu0 %v1513
        %1562 = vmatprep.subr.bf16.mxu0 %v1517
        %1563 = vmatpush1.bf16.msra.mxu0 %v1516
        %1564 = vmatprep.subr.bf16.mxu0 %v1520
        %1565 = vmatpush1.bf16.msra.mxu0 %v1519
        %1566 = vmatprep.subr.bf16.mxu0 %v1523
        %1567 = vmatpush1.bf16.msra.mxu0 %v1522
        %1568 = vmatprep.subr.bf16.mxu0 %v1526
        %1569 = vmatpush1.bf16.msra.mxu0 %v1525
        %1570 = vmatprep.subr.bf16.mxu0 %v1529
        %1571 = vmatpush1.bf16.msra.mxu0 %v1528
        %1572 = vmatprep.subr.bf16.mxu0 %v1532
        %1573 = vmatpush1.bf16.msra.mxu0 %v1531
        %1574 = vmatprep.subr.bf16.mxu0 0
        %1575 = vmatpush1.bf16.msra.mxu0 0
        %1576 = vmatprep.subr.bf16.mxu0 0
        %1577 = vmatpush1.bf16.msra.mxu0 0
        %1578 = vmatprep.subr.bf16.mxu0 0
        %1579 = vmatpush1.bf16.msra.mxu0 0
        %1580 = vmatprep.subr.bf16.mxu0 0
        %1581 = vmatpush1.bf16.msra.mxu0 0
        %1582 = vmatprep.subr.bf16.mxu0 0
        %1583 = vmatpush1.bf16.msra.mxu0 0
        %1584 = vmatprep.subr.bf16.mxu0 0
        %1585 = vmatpush1.bf16.msra.mxu0 0
        %1586 = vmatprep.subr.bf16.mxu0 0
        %1587 = vmatpush1.bf16.msra.mxu0 0
        %1588 = vmatprep.subr.bf16.mxu0 0
        %1589 = vmatpush1.bf16.msra.mxu0 0
        %1590 = vmatprep.mubr.bf16.mxu0 0
        %1591 = vmatmul.mubr.bf16.gmra.mrb[0].mxu0 %v1376
        %v1592 = vpop.f32.mrb[0].mxu0
        %v1593 = vadd.f32 %v1418, %v1592
        %v1594 = vpop.f32.mrb[0].mxu0
        %v1595 = vadd.f32 %v1422, %v1594
        %v1596 = vpop.f32.mrb[0].mxu0
        %v1597 = vadd.f32 %v1418, %v1596
        %v1598 = vpop.f32.mrb[0].mxu0
        %v1599 = vadd.f32 %v1422, %v1598
        %1600 = vmatprep.mubr.bf16.mxu0 0
        %1601 = vmatmul.mubr.bf16.gmra.mrb[0].mxu0 %v1377
        %v1602 = vpop.f32.mrb[0].mxu0
        %v1603 = vadd.f32 %v1418, %v1602
        %v1604 = vpop.f32.mrb[0].mxu0
        %v1605 = vadd.f32 %v1422, %v1604
        %v1606 = vpop.f32.mrb[0].mxu0
        %v1607 = vadd.f32 %v1418, %v1606
        %v1608 = vpop.f32.mrb[0].mxu0
        %v1609 = vadd.f32 %v1422, %v1608
        %1610 = vmatprep.mubr.bf16.mxu0 0
        %1611 = vmatmul.mubr.bf16.gmra.mrb[0].mxu0 %v1378
        %v1612 = vpop.f32.mrb[0].mxu0
        %v1613 = vadd.f32 %v1418, %v1612
        %v1614 = vpop.f32.mrb[0].mxu0
        %v1615 = vadd.f32 %v1422, %v1614
        %v1616 = vpop.f32.mrb[0].mxu0
        %v1617 = vadd.f32 %v1418, %v1616
        %v1618 = vpop.f32.mrb[0].mxu0
        %v1619 = vadd.f32 %v1422, %v1618
        %1620 = vmatprep.mubr.bf16.mxu0 0
        %1621 = vmatmul.mubr.bf16.gmra.mrb[0].mxu0 %v1379
        %v1622 = vpop.f32.mrb[0].mxu0
        %v1623 = vadd.f32 %v1418, %v1622
        %v1624 = vpop.f32.mrb[0].mxu0
        %v1625 = vadd.f32 %v1422, %v1624
        %v1626 = vpop.f32.mrb[0].mxu0
        %v1627 = vadd.f32 %v1418, %v1626
        %v1628 = vpop.f32.mrb[0].mxu0
        %v1629 = vadd.f32 %v1422, %v1628
        %1630 = vmatprep.mubr.bf16.mxu0 0
        %1631 = vmatmul.mubr.bf16.gmra.mrb[0].mxu0 %v1380
        %v1632 = vpop.f32.mrb[0].mxu0
        %v1633 = vadd.f32 %v1418, %v1632
        %v1634 = vpop.f32.mrb[0].mxu0
        %v1635 = vadd.f32 %v1422, %v1634
        %v1636 = vpop.f32.mrb[0].mxu0
        %v1637 = vpop.f32.mrb[0].mxu0
        %1638 = vdwg.mxu0
        %1639 = vmatprep.subr.bf16.mxu0 0
        %1640 = vmatpush1.bf16.msra.mxu0 %v1512
        %1641 = vmatprep.subr.bf16.mxu0 0
        %1642 = vmatpush1.bf16.msra.mxu0 %v1515
        %1643 = vmatprep.subr.bf16.mxu0 0
        %1644 = vmatpush1.bf16.msra.mxu0 %v1518
        %1645 = vmatprep.subr.bf16.mxu0 0
        %1646 = vmatpush1.bf16.msra.mxu0 %v1521
        %1647 = vmatprep.subr.bf16.mxu0 0
        %1648 = vmatpush1.bf16.msra.mxu0 %v1524
        %1649 = vmatprep.subr.bf16.mxu0 0
        %1650 = vmatpush1.bf16.msra.mxu0 %v1527
        %1651 = vmatprep.subr.bf16.mxu0 0
        %1652 = vmatpush1.bf16.msra.mxu0 %v1530
        %1653 = vmatprep.subr.bf16.mxu0 0
        %1654 = vmatpush1.bf16.msra.mxu0 %v1533
        %1655 = vmatprep.subr.bf16.mxu0 0
        %1656 = vmatpush1.bf16.msra.mxu0 0
        %1657 = vmatprep.subr.bf16.mxu0 0
        %1658 = vmatpush1.bf16.msra.mxu0 0
        %1659 = vmatprep.subr.bf16.mxu0 0
        %1660 = vmatpush1.bf16.msra.mxu0 0
        %1661 = vmatprep.subr.bf16.mxu0 0
        %1662 = vmatpush1.bf16.msra.mxu0 0
        %1663 = vmatprep.subr.bf16.mxu0 0
        %1664 = vmatpush1.bf16.msra.mxu0 0
        %1665 = vmatprep.subr.bf16.mxu0 0
        %1666 = vmatpush1.bf16.msra.mxu0 0
        %1667 = vmatprep.subr.bf16.mxu0 0
        %1668 = vmatpush1.bf16.msra.mxu0 0
        %1669 = vmatprep.subr.bf16.mxu0 0
        %1670 = vmatpush1.bf16.msra.mxu0 0
        %1671 = vmatprep.mubr.bf16.mxu0 0
        %1672 = vmatmul.mubr.bf16.gmra.mrb[0].mxu0 %v1376
        %v1673 = vpop.f32.mrb[0].mxu0
        %v1674 = vadd.f32 %v1426, %v1673
        %v1675 = vpop.f32.mrb[0].mxu0
        %v1676 = vpop.f32.mrb[0].mxu0
        %v1677 = vadd.f32 %v1426, %v1676
        %v1678 = vpop.f32.mrb[0].mxu0
        %1679 = vmatprep.mubr.bf16.mxu0 0
        %1680 = vmatmul.mubr.bf16.gmra.mrb[0].mxu0 %v1377
        %v1681 = vpop.f32.mrb[0].mxu0
        %v1682 = vadd.f32 %v1426, %v1681
        %v1683 = vpop.f32.mrb[0].mxu0
        %v1684 = vpop.f32.mrb[0].mxu0
        %v1685 = vadd.f32 %v1426, %v1684
        %v1686 = vpop.f32.mrb[0].mxu0
        %1687 = vmatprep.mubr.bf16.mxu0 0
        %1688 = vmatmul.mubr.bf16.gmra.mrb[0].mxu0 %v1378
        %v1689 = vpop.f32.mrb[0].mxu0
        %v1690 = vadd.f32 %v1426, %v1689
        %v1691 = vpop.f32.mrb[0].mxu0
        %v1692 = vpop.f32.mrb[0].mxu0
        %v1693 = vadd.f32 %v1426, %v1692
        %v1694 = vpop.f32.mrb[0].mxu0
        %1695 = vmatprep.mubr.bf16.mxu0 0
        %1696 = vmatmul.mubr.bf16.gmra.mrb[0].mxu0 %v1379
        %v1697 = vpop.f32.mrb[0].mxu0
        %v1698 = vadd.f32 %v1426, %v1697
        %v1699 = vpop.f32.mrb[0].mxu0
        %v1700 = vpop.f32.mrb[0].mxu0
        %v1701 = vadd.f32 %v1426, %v1700
        %v1702 = vpop.f32.mrb[0].mxu0
        %1703 = vmatprep.mubr.bf16.mxu0 0
        %1704 = vmatmul.mubr.bf16.gmra.mrb[0].mxu0 %v1380
        %v1705 = vpop.f32.mrb[0].mxu0
        %v1706 = vadd.f32 %v1426, %v1705
        %v1707 = vpop.f32.mrb[0].mxu0
        %v1708 = vpop.f32.mrb[0].mxu0
        %v1709 = vpop.f32.mrb[0].mxu0
        %1710 = vdwg.mxu0
        %v1711 = vlaneseq
        %v1712 = vand.u32 %v1711, 127
        %vm1713 = vcmp.lt.s32.totalorder %v1712, 71
        %v1714 = vsel %vm1713, 0.0, -1e+30
        %v1715 = vpack.c.bf16 %v1597, %v1593
        %v1716 = vpack.c.bf16 %v1607, %v1603
        %v1717 = vpack.c.bf16 %v1617, %v1613
        %v1718 = vpack.c.bf16 %v1627, %v1623
        %v1719 = vpack.c.bf16 %v1633, %v1633
        %v1720 = vpack.c.bf16 %v1599, %v1595
        %v1721 = vpack.c.bf16 %v1609, %v1605
        %v1722 = vpack.c.bf16 %v1619, %v1615
        %v1723 = vpack.c.bf16 %v1629, %v1625
        %v1724 = vpack.c.bf16 %v1635, %v1635
        %v1725 = vpack.c.bf16 %v1677, %v1674
        %v1726 = vpack.c.bf16 %v1685, %v1682
        %v1727 = vpack.c.bf16 %v1693, %v1690
        %v1728 = vpack.c.bf16 %v1701, %v1698
        %v1729 = vpack.c.bf16 %v1706, %v1706
        %vm1730 = vcmask 261120
        %v1732 = vsel %vm1730, %v1715, 0
        %v1735 = vsel %vm1730, %v1716, 0
        %v1738 = vsel %vm1730, %v1717, 0
        %v1741 = vsel %vm1730, %v1718, 0
        %v1744 = vsel %vm1730, %v1719, 0
        %v1747 = vsel %vm1730, %v1720, 0
        %v1750 = vsel %vm1730, %v1721, 0
        %v1753 = vsel %vm1730, %v1722, 0
        %v1756 = vsel %vm1730, %v1723, 0
        %v1759 = vsel %vm1730, %v1724, 0
        %1761 = vmatprep.subr.bf16.mxu0 0
        %1762 = vmatpush1.bf16.xpose.msra.mxu0 %v1747
        %1763 = vmatprep.subr.bf16.mxu0 0
        %1764 = vmatpush1.bf16.xpose.msra.mxu0 %v1750
        %1765 = vmatprep.subr.bf16.mxu0 0
        %1766 = vmatpush1.bf16.xpose.msra.mxu0 %v1753
        %1767 = vmatprep.subr.bf16.mxu0 0
        %1768 = vmatpush1.bf16.xpose.msra.mxu0 %v1756
        %1769 = vmatprep.subr.bf16.mxu0 0
        %1770 = vmatpush1.bf16.xpose.msra.mxu0 %v1759
        %1771 = vmatprep.subr.bf16.mxu0 0
        %1772 = vmatpush1.bf16.xpose.msra.mxu0 0
        %1773 = vmatprep.subr.bf16.mxu0 0
        %1774 = vmatpush1.bf16.xpose.msra.mxu0 0
        %1775 = vmatprep.subr.bf16.mxu0 0
        %1776 = vmatpush1.bf16.xpose.msra.mxu0 0
        %1777 = vmatprep.subr.bf16.mxu0 0
        %1778 = vmatpush1.bf16.xpose.msra.mxu0 0
        %1779 = vmatprep.subr.bf16.mxu0 0
        %1780 = vmatpush1.bf16.xpose.msra.mxu0 0
        %1781 = vmatprep.subr.bf16.mxu0 0
        %1782 = vmatpush1.bf16.xpose.msra.mxu0 0
        %1783 = vmatprep.subr.bf16.mxu0 0
        %1784 = vmatpush1.bf16.xpose.msra.mxu0 0
        %1785 = vmatprep.subr.bf16.mxu0 0
        %1786 = vmatpush1.bf16.xpose.msra.mxu0 0
        %1787 = vmatprep.subr.bf16.mxu0 0
        %1788 = vmatpush1.bf16.xpose.msra.mxu0 0
        %1789 = vmatprep.subr.bf16.mxu0 0
        %1790 = vmatpush1.bf16.xpose.msra.mxu0 0
        %1791 = vmatprep.subr.bf16.mxu0 0
        %1792 = vmatpush1.bf16.xpose.msra.mxu0 0
        %1793 = vmatprep.mubr.bf16.mxu0 0
        %1794 = vmatmul.mubr.bf16.gmra.mrb[0].mxu0 %v1732
        %v1795 = vpop.f32.mrb[0].mxu0
        %v1796 = vadd.f32 %v1714, %v1795
        %v1797 = vpop.f32.mrb[0].mxu0
        %v1798 = vpop.f32.mrb[0].mxu0
        %v1799 = vadd.f32 %v1714, %v1798
        %v1800 = vpop.f32.mrb[0].mxu0
        %1801 = vmatprep.mubr.bf16.mxu0 0
        %1802 = vmatmul.mubr.bf16.gmra.mrb[0].mxu0 %v1735
        %v1803 = vpop.f32.mrb[0].mxu0
        %v1804 = vadd.f32 %v1714, %v1803
        %v1805 = vpop.f32.mrb[0].mxu0
        %v1806 = vpop.f32.mrb[0].mxu0
        %v1807 = vadd.f32 %v1714, %v1806
        %v1808 = vpop.f32.mrb[0].mxu0
        %1809 = vmatprep.mubr.bf16.mxu0 0
        %1810 = vmatmul.mubr.bf16.gmra.mrb[0].mxu0 %v1738
        %v1811 = vpop.f32.mrb[0].mxu0
        %v1812 = vadd.f32 %v1714, %v1811
        %v1813 = vpop.f32.mrb[0].mxu0
        %v1814 = vpop.f32.mrb[0].mxu0
        %v1815 = vadd.f32 %v1714, %v1814
        %v1816 = vpop.f32.mrb[0].mxu0
        %1817 = vmatprep.mubr.bf16.mxu0 0
        %1818 = vmatmul.mubr.bf16.gmra.mrb[0].mxu0 %v1741
        %v1819 = vpop.f32.mrb[0].mxu0
        %v1820 = vadd.f32 %v1714, %v1819
        %v1821 = vpop.f32.mrb[0].mxu0
        %v1822 = vpop.f32.mrb[0].mxu0
        %v1823 = vadd.f32 %v1714, %v1822
        %v1824 = vpop.f32.mrb[0].mxu0
        %1825 = vmatprep.mubr.bf16.mxu0 0
        %1826 = vmatmul.mubr.bf16.gmra.mrb[0].mxu0 %v1744
        %v1827 = vpop.f32.mrb[0].mxu0
        %v1828 = vadd.f32 %v1714, %v1827
        %v1829 = vpop.f32.mrb[0].mxu0
        %v1830 = vpop.f32.mrb[0].mxu0
        %v1831 = vpop.f32.mrb[0].mxu0
        %1832 = vdwg.mxu0
        %vm1833 = vcmask 588800
        %v1834 = vsel %vm1833, %v1796, -inf
        %1835 = vmax.xlane.f32.xlu0 %v1834
        %v1836 = vpop.xlane.xlu0 %1835
        %v1837 = vsel %vm1833, %v1799, -inf
        %1838 = vmax.xlane.f32.xlu0 %v1837
        %v1839 = vpop.xlane.xlu0 %1838
        %v1840 = vsel %vm1833, %v1804, -inf
        %1841 = vmax.xlane.f32.xlu0 %v1840
        %v1842 = vpop.xlane.xlu0 %1841
        %v1843 = vsel %vm1833, %v1807, -inf
        %1844 = vmax.xlane.f32.xlu0 %v1843
        %v1845 = vpop.xlane.xlu0 %1844
        %v1846 = vsel %vm1833, %v1812, -inf
        %1847 = vmax.xlane.f32.xlu0 %v1846
        %v1848 = vpop.xlane.xlu0 %1847
        %v1849 = vsel %vm1833, %v1815, -inf
        %1850 = vmax.xlane.f32.xlu0 %v1849
        %v1851 = vpop.xlane.xlu0 %1850
        %v1852 = vsel %vm1833, %v1820, -inf
        %1853 = vmax.xlane.f32.xlu0 %v1852
        %v1854 = vpop.xlane.xlu0 %1853
        %v1855 = vsel %vm1833, %v1823, -inf
        %1856 = vmax.xlane.f32.xlu0 %v1855
        %v1857 = vpop.xlane.xlu0 %1856
        %v1858 = vsel %vm1833, %v1828, -inf
        %1859 = vmax.xlane.f32.xlu0 %v1858
        %v1860 = vpop.xlane.xlu0 %1859
        %v1861 = vsub.f32 %v1796, %v1836
        %v1862 = vsub.f32 %v1799, %v1839
        %v1863 = vsub.f32 %v1804, %v1842
        %v1864 = vsub.f32 %v1807, %v1845
        %v1865 = vsub.f32 %v1812, %v1848
        %v1866 = vsub.f32 %v1815, %v1851
        %v1867 = vsub.f32 %v1820, %v1854
        %v1868 = vsub.f32 %v1823, %v1857
        %v1869 = vsub.f32 %v1828, %v1860
        %v1870 = vmul.f32 %v1861, 1.442695
        %v1871 = vpow.pop %v1870
        %v1872 = vmul.f32 %v1862, 1.442695
        %v1873 = vpow.pop %v1872
        %v1874 = vmul.f32 %v1863, 1.442695
        %v1875 = vpow.pop %v1874
        %v1876 = vmul.f32 %v1864, 1.442695
        %v1877 = vpow.pop %v1876
        %v1878 = vmul.f32 %v1865, 1.442695
        %v1879 = vpow.pop %v1878
        %v1880 = vmul.f32 %v1866, 1.442695
        %v1881 = vpow.pop %v1880
        %v1882 = vmul.f32 %v1867, 1.442695
        %v1883 = vpow.pop %v1882
        %v1884 = vmul.f32 %v1868, 1.442695
        %v1885 = vpow.pop %v1884
        %v1886 = vmul.f32 %v1869, 1.442695
        %v1887 = vpow.pop %v1886
        %v1888 = vsel %vm1833, %v1871, 0.0
        %1889 = vadd.xlane.f32.xlu0 %v1888
        %v1890 = vpop.xlane.xlu0 %1889
        %v1891 = vsel %vm1833, %v1873, 0.0
        %1892 = vadd.xlane.f32.xlu0 %v1891
        %v1893 = vpop.xlane.xlu0 %1892
        %v1894 = vsel %vm1833, %v1875, 0.0
        %1895 = vadd.xlane.f32.xlu0 %v1894
        %v1896 = vpop.xlane.xlu0 %1895
        %v1897 = vsel %vm1833, %v1877, 0.0
        %1898 = vadd.xlane.f32.xlu0 %v1897
        %v1899 = vpop.xlane.xlu0 %1898
        %v1900 = vsel %vm1833, %v1879, 0.0
        %1901 = vadd.xlane.f32.xlu0 %v1900
        %v1902 = vpop.xlane.xlu0 %1901
        %v1903 = vsel %vm1833, %v1881, 0.0
        %1904 = vadd.xlane.f32.xlu0 %v1903
        %v1905 = vpop.xlane.xlu0 %1904
        %v1906 = vsel %vm1833, %v1883, 0.0
        %1907 = vadd.xlane.f32.xlu0 %v1906
        %v1908 = vpop.xlane.xlu0 %1907
        %v1909 = vsel %vm1833, %v1885, 0.0
        %1910 = vadd.xlane.f32.xlu0 %v1909
        %v1911 = vpop.xlane.xlu0 %1910
        %v1912 = vsel %vm1833, %v1887, 0.0
        %1913 = vadd.xlane.f32.xlu0 %v1912
        %v1914 = vpop.xlane.xlu0 %1913
        %v1915 = vrcp.pop %v1890
        %v1916 = vrcp.pop %v1893
        %v1917 = vrcp.pop %v1896
        %v1918 = vrcp.pop %v1899
        %v1919 = vrcp.pop %v1902
        %v1920 = vrcp.pop %v1905
        %v1921 = vrcp.pop %v1908
        %v1922 = vrcp.pop %v1911
        %v1923 = vrcp.pop %v1914
        %v1924 = vmul.f32 %v1871, %v1915
        %v1925 = vmul.f32 %v1873, %v1916
        %v1926 = vmul.f32 %v1875, %v1917
        %v1927 = vmul.f32 %v1877, %v1918
        %v1928 = vmul.f32 %v1879, %v1919
        %v1929 = vmul.f32 %v1881, %v1920
        %v1930 = vmul.f32 %v1883, %v1921
        %v1931 = vmul.f32 %v1885, %v1922
        %v1932 = vmul.f32 %v1887, %v1923
        %v1933 = vpack.c.bf16 %v1925, %v1924
        %v1934 = vpack.c.bf16 %v1927, %v1926
        %v1935 = vpack.c.bf16 %v1929, %v1928
        %v1936 = vpack.c.bf16 %v1931, %v1930
        %v1937 = vpack.c.bf16 %v1932, %v1932
        %v1939 = vsel %vm1833, %v1933, 0
        %v1942 = vsel %vm1833, %v1934, 0
        %v1945 = vsel %vm1833, %v1935, 0
        %v1948 = vsel %vm1833, %v1936, 0
        %v1951 = vsel %vm1833, %v1937, 0
        %vm1953 = vcmask 1043456
        %v1955 = vsel %vm1953, %v1729, 0
        %1957 = vmatprep.subr.bf16.mxu0 0
        %1958 = vmatpush1.bf16.msra.mxu0 %v1725
        %1959 = vmatprep.subr.bf16.mxu0 0
        %1960 = vmatpush1.bf16.msra.mxu0 %v1726
        %1961 = vmatprep.subr.bf16.mxu0 0
        %1962 = vmatpush1.bf16.msra.mxu0 %v1727
        %1963 = vmatprep.subr.bf16.mxu0 0
        %1964 = vmatpush1.bf16.msra.mxu0 %v1728
        %1965 = vmatprep.subr.bf16.mxu0 0
        %1966 = vmatpush1.bf16.msra.mxu0 %v1955
        %1967 = vmatprep.subr.bf16.mxu0 0
        %1968 = vmatpush1.bf16.msra.mxu0 0
        %1969 = vmatprep.subr.bf16.mxu0 0
        %1970 = vmatpush1.bf16.msra.mxu0 0
        %1971 = vmatprep.subr.bf16.mxu0 0
        %1972 = vmatpush1.bf16.msra.mxu0 0
        %1973 = vmatprep.subr.bf16.mxu0 0
        %1974 = vmatpush1.bf16.msra.mxu0 0
        %1975 = vmatprep.subr.bf16.mxu0 0
        %1976 = vmatpush1.bf16.msra.mxu0 0
        %1977 = vmatprep.subr.bf16.mxu0 0
        %1978 = vmatpush1.bf16.msra.mxu0 0
        %1979 = vmatprep.subr.bf16.mxu0 0
        %1980 = vmatpush1.bf16.msra.mxu0 0
        %1981 = vmatprep.subr.bf16.mxu0 0
        %1982 = vmatpush1.bf16.msra.mxu0 0
        %1983 = vmatprep.subr.bf16.mxu0 0
        %1984 = vmatpush1.bf16.msra.mxu0 0
        %1985 = vmatprep.subr.bf16.mxu0 0
        %1986 = vmatpush1.bf16.msra.mxu0 0
        %1987 = vmatprep.subr.bf16.mxu0 0
        %1988 = vmatpush1.bf16.msra.mxu0 0
        %1989 = vmatprep.mubr.bf16.mxu0 0
        %1990 = vmatmul.mubr.bf16.gmra.mrb[0].mxu0 %v1939
        %v1991 = vpop.f32.mrb[0].mxu0
        %v1992 = vadd.f32 0.0, %v1991
        %v1993 = vpop.f32.mrb[0].mxu0
        %v1994 = vpop.f32.mrb[0].mxu0
        %v1995 = vadd.f32 0.0, %v1994
        %v1996 = vpop.f32.mrb[0].mxu0
        %1997 = vmatprep.mubr.bf16.mxu0 0
        %1998 = vmatmul.mubr.bf16.gmra.mrb[0].mxu0 %v1942
        %v1999 = vpop.f32.mrb[0].mxu0
        %v2000 = vadd.f32 0.0, %v1999
        %v2001 = vpop.f32.mrb[0].mxu0
        %v2002 = vpop.f32.mrb[0].mxu0
        %v2003 = vadd.f32 0.0, %v2002
        %v2004 = vpop.f32.mrb[0].mxu0
        %2005 = vmatprep.mubr.bf16.mxu0 0
        %2006 = vmatmul.mubr.bf16.gmra.mrb[0].mxu0 %v1945
        %v2007 = vpop.f32.mrb[0].mxu0
        %v2008 = vadd.f32 0.0, %v2007
        %v2009 = vpop.f32.mrb[0].mxu0
        %v2010 = vpop.f32.mrb[0].mxu0
        %v2011 = vadd.f32 0.0, %v2010
        %v2012 = vpop.f32.mrb[0].mxu0
        %2013 = vmatprep.mubr.bf16.mxu0 0
        %2014 = vmatmul.mubr.bf16.gmra.mrb[0].mxu0 %v1948
        %v2015 = vpop.f32.mrb[0].mxu0
        %v2016 = vadd.f32 0.0, %v2015
        %v2017 = vpop.f32.mrb[0].mxu0
        %v2018 = vpop.f32.mrb[0].mxu0
        %v2019 = vadd.f32 0.0, %v2018
        %v2020 = vpop.f32.mrb[0].mxu0
        %2021 = vmatprep.mubr.bf16.mxu0 0
        %2022 = vmatmul.mubr.bf16.gmra.mrb[0].mxu0 %v1951
        %v2023 = vpop.f32.mrb[0].mxu0
        %v2024 = vadd.f32 0.0, %v2023
        %v2025 = vpop.f32.mrb[0].mxu0
        %v2026 = vpop.f32.mrb[0].mxu0
        %v2027 = vpop.f32.mrb[0].mxu0
        %2028 = vdwg.mxu0
        %2034 = vrot.lane.b32.xlu0 %v1715, 96
        %v2035 = vpop.permute.xlu0 %2034
        %2036 = vrot.lane.b32.xlu0 %v1716, 96
        %v2037 = vpop.permute.xlu0 %2036
        %2038 = vrot.lane.b32.xlu0 %v1717, 96
        %v2039 = vpop.permute.xlu0 %2038
        %2040 = vrot.lane.b32.xlu0 %v1718, 96
        %v2041 = vpop.permute.xlu0 %2040
        %2042 = vrot.lane.b32.xlu0 %v1719, 96
        %v2043 = vpop.permute.xlu0 %2042
        %2049 = vrot.lane.b32.xlu0 %v1720, 96
        %v2050 = vpop.permute.xlu0 %2049
        %2051 = vrot.lane.b32.xlu0 %v1721, 96
        %v2052 = vpop.permute.xlu0 %2051
        %2053 = vrot.lane.b32.xlu0 %v1722, 96
        %v2054 = vpop.permute.xlu0 %2053
        %2055 = vrot.lane.b32.xlu0 %v1723, 96
        %v2056 = vpop.permute.xlu0 %2055
        %2057 = vrot.lane.b32.xlu0 %v1724, 96
        %v2058 = vpop.permute.xlu0 %2057
        %v2060 = vsel %vm1730, %v2035, 0
        %v2063 = vsel %vm1730, %v2037, 0
        %v2066 = vsel %vm1730, %v2039, 0
        %v2069 = vsel %vm1730, %v2041, 0
        %v2072 = vsel %vm1730, %v2043, 0
        %v2075 = vsel %vm1730, %v2050, 0
        %v2078 = vsel %vm1730, %v2052, 0
        %v2081 = vsel %vm1730, %v2054, 0
        %v2084 = vsel %vm1730, %v2056, 0
        %v2087 = vsel %vm1730, %v2058, 0
        %2089 = vmatprep.subr.bf16.mxu0 0
        %2090 = vmatpush1.bf16.xpose.msra.mxu0 %v2075
        %2091 = vmatprep.subr.bf16.mxu0 0
        %2092 = vmatpush1.bf16.xpose.msra.mxu0 %v2078
        %2093 = vmatprep.subr.bf16.mxu0 0
        %2094 = vmatpush1.bf16.xpose.msra.mxu0 %v2081
        %2095 = vmatprep.subr.bf16.mxu0 0
        %2096 = vmatpush1.bf16.xpose.msra.mxu0 %v2084
        %2097 = vmatprep.subr.bf16.mxu0 0
        %2098 = vmatpush1.bf16.xpose.msra.mxu0 %v2087
        %2099 = vmatprep.subr.bf16.mxu0 0
        %2100 = vmatpush1.bf16.xpose.msra.mxu0 0
        %2101 = vmatprep.subr.bf16.mxu0 0
        %2102 = vmatpush1.bf16.xpose.msra.mxu0 0
        %2103 = vmatprep.subr.bf16.mxu0 0
        %2104 = vmatpush1.bf16.xpose.msra.mxu0 0
        %2105 = vmatprep.subr.bf16.mxu0 0
        %2106 = vmatpush1.bf16.xpose.msra.mxu0 0
        %2107 = vmatprep.subr.bf16.mxu0 0
        %2108 = vmatpush1.bf16.xpose.msra.mxu0 0
        %2109 = vmatprep.subr.bf16.mxu0 0
        %2110 = vmatpush1.bf16.xpose.msra.mxu0 0
        %2111 = vmatprep.subr.bf16.mxu0 0
        %2112 = vmatpush1.bf16.xpose.msra.mxu0 0
        %2113 = vmatprep.subr.bf16.mxu0 0
        %2114 = vmatpush1.bf16.xpose.msra.mxu0 0
        %2115 = vmatprep.subr.bf16.mxu0 0
        %2116 = vmatpush1.bf16.xpose.msra.mxu0 0
        %2117 = vmatprep.subr.bf16.mxu0 0
        %2118 = vmatpush1.bf16.xpose.msra.mxu0 0
        %2119 = vmatprep.subr.bf16.mxu0 0
        %2120 = vmatpush1.bf16.xpose.msra.mxu0 0
        %2121 = vmatprep.mubr.bf16.mxu0 0
        %2122 = vmatmul.mubr.bf16.gmra.mrb[0].mxu0 %v2060
        %v2123 = vpop.f32.mrb[0].mxu0
        %v2124 = vadd.f32 %v1714, %v2123
        %v2125 = vpop.f32.mrb[0].mxu0
        %v2126 = vpop.f32.mrb[0].mxu0
        %v2127 = vadd.f32 %v1714, %v2126
        %v2128 = vpop.f32.mrb[0].mxu0
        %2129 = vmatprep.mubr.bf16.mxu0 0
        %2130 = vmatmul.mubr.bf16.gmra.mrb[0].mxu0 %v2063
        %v2131 = vpop.f32.mrb[0].mxu0
        %v2132 = vadd.f32 %v1714, %v2131
        %v2133 = vpop.f32.mrb[0].mxu0
        %v2134 = vpop.f32.mrb[0].mxu0
        %v2135 = vadd.f32 %v1714, %v2134
        %v2136 = vpop.f32.mrb[0].mxu0
        %2137 = vmatprep.mubr.bf16.mxu0 0
        %2138 = vmatmul.mubr.bf16.gmra.mrb[0].mxu0 %v2066
        %v2139 = vpop.f32.mrb[0].mxu0
        %v2140 = vadd.f32 %v1714, %v2139
        %v2141 = vpop.f32.mrb[0].mxu0
        %v2142 = vpop.f32.mrb[0].mxu0
        %v2143 = vadd.f32 %v1714, %v2142
        %v2144 = vpop.f32.mrb[0].mxu0
        %2145 = vmatprep.mubr.bf16.mxu0 0
        %2146 = vmatmul.mubr.bf16.gmra.mrb[0].mxu0 %v2069
        %v2147 = vpop.f32.mrb[0].mxu0
        %v2148 = vadd.f32 %v1714, %v2147
        %v2149 = vpop.f32.mrb[0].mxu0
        %v2150 = vpop.f32.mrb[0].mxu0
        %v2151 = vadd.f32 %v1714, %v2150
        %v2152 = vpop.f32.mrb[0].mxu0
        %2153 = vmatprep.mubr.bf16.mxu0 0
        %2154 = vmatmul.mubr.bf16.gmra.mrb[0].mxu0 %v2072
        %v2155 = vpop.f32.mrb[0].mxu0
        %v2156 = vadd.f32 %v1714, %v2155
        %v2157 = vpop.f32.mrb[0].mxu0
        %v2158 = vpop.f32.mrb[0].mxu0
        %v2159 = vpop.f32.mrb[0].mxu0
        %2160 = vdwg.mxu0
        %v2161 = vsel %vm1833, %v2124, -inf
        %2162 = vmax.xlane.f32.xlu0 %v2161
        %v2163 = vpop.xlane.xlu0 %2162
        %v2164 = vsel %vm1833, %v2127, -inf
        %2165 = vmax.xlane.f32.xlu0 %v2164
        %v2166 = vpop.xlane.xlu0 %2165
        %v2167 = vsel %vm1833, %v2132, -inf
        %2168 = vmax.xlane.f32.xlu0 %v2167
        %v2169 = vpop.xlane.xlu0 %2168
        %v2170 = vsel %vm1833, %v2135, -inf
        %2171 = vmax.xlane.f32.xlu0 %v2170
        %v2172 = vpop.xlane.xlu0 %2171
        %v2173 = vsel %vm1833, %v2140, -inf
        %2174 = vmax.xlane.f32.xlu0 %v2173
        %v2175 = vpop.xlane.xlu0 %2174
        %v2176 = vsel %vm1833, %v2143, -inf
        %2177 = vmax.xlane.f32.xlu0 %v2176
        %v2178 = vpop.xlane.xlu0 %2177
        %v2179 = vsel %vm1833, %v2148, -inf
        %2180 = vmax.xlane.f32.xlu0 %v2179
        %v2181 = vpop.xlane.xlu0 %2180
        %v2182 = vsel %vm1833, %v2151, -inf
        %2183 = vmax.xlane.f32.xlu0 %v2182
        %v2184 = vpop.xlane.xlu0 %2183
        %v2185 = vsel %vm1833, %v2156, -inf
        %2186 = vmax.xlane.f32.xlu0 %v2185
        %v2187 = vpop.xlane.xlu0 %2186
        %v2188 = vsub.f32 %v2124, %v2163
        %v2189 = vsub.f32 %v2127, %v2166
        %v2190 = vsub.f32 %v2132, %v2169
        %v2191 = vsub.f32 %v2135, %v2172
        %v2192 = vsub.f32 %v2140, %v2175
        %v2193 = vsub.f32 %v2143, %v2178
        %v2194 = vsub.f32 %v2148, %v2181
        %v2195 = vsub.f32 %v2151, %v2184
        %v2196 = vsub.f32 %v2156, %v2187
        %v2197 = vmul.f32 %v2188, 1.442695
        %v2198 = vpow.pop %v2197
        %v2199 = vmul.f32 %v2189, 1.442695
        %v2200 = vpow.pop %v2199
        %v2201 = vmul.f32 %v2190, 1.442695
        %v2202 = vpow.pop %v2201
        %v2203 = vmul.f32 %v2191, 1.442695
        %v2204 = vpow.pop %v2203
        %v2205 = vmul.f32 %v2192, 1.442695
        %v2206 = vpow.pop %v2205
        %v2207 = vmul.f32 %v2193, 1.442695
        %v2208 = vpow.pop %v2207
        %v2209 = vmul.f32 %v2194, 1.442695
        %v2210 = vpow.pop %v2209
        %v2211 = vmul.f32 %v2195, 1.442695
        %v2212 = vpow.pop %v2211
        %v2213 = vmul.f32 %v2196, 1.442695
        %v2214 = vpow.pop %v2213
        %v2215 = vsel %vm1833, %v2198, 0.0
        %2216 = vadd.xlane.f32.xlu0 %v2215
        %v2217 = vpop.xlane.xlu0 %2216
        %v2218 = vsel %vm1833, %v2200, 0.0
        %2219 = vadd.xlane.f32.xlu0 %v2218
        %v2220 = vpop.xlane.xlu0 %2219
        %v2221 = vsel %vm1833, %v2202, 0.0
        %2222 = vadd.xlane.f32.xlu0 %v2221
        %v2223 = vpop.xlane.xlu0 %2222
        %v2224 = vsel %vm1833, %v2204, 0.0
        %2225 = vadd.xlane.f32.xlu0 %v2224
        %v2226 = vpop.xlane.xlu0 %2225
        %v2227 = vsel %vm1833, %v2206, 0.0
        %2228 = vadd.xlane.f32.xlu0 %v2227
        %v2229 = vpop.xlane.xlu0 %2228
        %v2230 = vsel %vm1833, %v2208, 0.0
        %2231 = vadd.xlane.f32.xlu0 %v2230
        %v2232 = vpop.xlane.xlu0 %2231
        %v2233 = vsel %vm1833, %v2210, 0.0
        %2234 = vadd.xlane.f32.xlu0 %v2233
        %v2235 = vpop.xlane.xlu0 %2234
        %v2236 = vsel %vm1833, %v2212, 0.0
        %2237 = vadd.xlane.f32.xlu0 %v2236
        %v2238 = vpop.xlane.xlu0 %2237
        %v2239 = vsel %vm1833, %v2214, 0.0
        %2240 = vadd.xlane.f32.xlu0 %v2239
        %v2241 = vpop.xlane.xlu0 %2240
        %v2242 = vrcp.pop %v2217
        %v2243 = vrcp.pop %v2220
        %v2244 = vrcp.pop %v2223
        %v2245 = vrcp.pop %v2226
        %v2246 = vrcp.pop %v2229
        %v2247 = vrcp.pop %v2232
        %v2248 = vrcp.pop %v2235
        %v2249 = vrcp.pop %v2238
        %v2250 = vrcp.pop %v2241
        %v2251 = vmul.f32 %v2198, %v2242
        %v2252 = vmul.f32 %v2200, %v2243
        %v2253 = vmul.f32 %v2202, %v2244
        %v2254 = vmul.f32 %v2204, %v2245
        %v2255 = vmul.f32 %v2206, %v2246
        %v2256 = vmul.f32 %v2208, %v2247
        %v2257 = vmul.f32 %v2210, %v2248
        %v2258 = vmul.f32 %v2212, %v2249
        %v2259 = vmul.f32 %v2214, %v2250
        %v2260 = vpack.c.bf16 %v2252, %v2251
        %v2261 = vpack.c.bf16 %v2254, %v2253
        %v2262 = vpack.c.bf16 %v2256, %v2255
        %v2263 = vpack.c.bf16 %v2258, %v2257
        %v2264 = vpack.c.bf16 %v2259, %v2259
        %2270 = vrot.lane.b32.xlu0 %v1725, 96
        %v2271 = vpop.permute.xlu0 %2270
        %2272 = vrot.lane.b32.xlu0 %v1726, 96
        %v2273 = vpop.permute.xlu0 %2272
        %2274 = vrot.lane.b32.xlu0 %v1727, 96
        %v2275 = vpop.permute.xlu0 %2274
        %2276 = vrot.lane.b32.xlu0 %v1728, 96
        %v2277 = vpop.permute.xlu0 %2276
        %2278 = vrot.lane.b32.xlu0 %v1729, 96
        %v2279 = vpop.permute.xlu0 %2278
        %v2285 = vsel %vm1833, %v2260, 0
        %v2288 = vsel %vm1833, %v2261, 0
        %v2291 = vsel %vm1833, %v2262, 0
        %v2294 = vsel %vm1833, %v2263, 0
        %v2297 = vsel %vm1833, %v2264, 0
        %v2300 = vsel %vm1953, %v2279, 0
        %2302 = vmatprep.subr.bf16.mxu0 0
        %2303 = vmatpush1.bf16.msra.mxu0 %v2271
        %2304 = vmatprep.subr.bf16.mxu0 0
        %2305 = vmatpush1.bf16.msra.mxu0 %v2273
        %2306 = vmatprep.subr.bf16.mxu0 0
        %2307 = vmatpush1.bf16.msra.mxu0 %v2275
        %2308 = vmatprep.subr.bf16.mxu0 0
        %2309 = vmatpush1.bf16.msra.mxu0 %v2277
        %2310 = vmatprep.subr.bf16.mxu0 0
        %2311 = vmatpush1.bf16.msra.mxu0 %v2300
        %2312 = vmatprep.subr.bf16.mxu0 0
        %2313 = vmatpush1.bf16.msra.mxu0 0
        %2314 = vmatprep.subr.bf16.mxu0 0
        %2315 = vmatpush1.bf16.msra.mxu0 0
        %2316 = vmatprep.subr.bf16.mxu0 0
        %2317 = vmatpush1.bf16.msra.mxu0 0
        %2318 = vmatprep.subr.bf16.mxu0 0
        %2319 = vmatpush1.bf16.msra.mxu0 0
        %2320 = vmatprep.subr.bf16.mxu0 0
        %2321 = vmatpush1.bf16.msra.mxu0 0
        %2322 = vmatprep.subr.bf16.mxu0 0
        %2323 = vmatpush1.bf16.msra.mxu0 0
        %2324 = vmatprep.subr.bf16.mxu0 0
        %2325 = vmatpush1.bf16.msra.mxu0 0
        %2326 = vmatprep.subr.bf16.mxu0 0
        %2327 = vmatpush1.bf16.msra.mxu0 0
        %2328 = vmatprep.subr.bf16.mxu0 0
        %2329 = vmatpush1.bf16.msra.mxu0 0
        %2330 = vmatprep.subr.bf16.mxu0 0
        %2331 = vmatpush1.bf16.msra.mxu0 0
        %2332 = vmatprep.subr.bf16.mxu0 0
        %2333 = vmatpush1.bf16.msra.mxu0 0
        %2334 = vmatprep.mubr.bf16.mxu0 0
        %2335 = vmatmul.mubr.bf16.gmra.mrb[0].mxu0 %v2285
        %v2336 = vpop.f32.mrb[0].mxu0
        %v2337 = vadd.f32 0.0, %v2336
        %v2338 = vpop.f32.mrb[0].mxu0
        %v2339 = vpop.f32.mrb[0].mxu0
        %v2340 = vadd.f32 0.0, %v2339
        %v2341 = vpop.f32.mrb[0].mxu0
        %2342 = vmatprep.mubr.bf16.mxu0 0
        %2343 = vmatmul.mubr.bf16.gmra.mrb[0].mxu0 %v2288
        %v2344 = vpop.f32.mrb[0].mxu0
        %v2345 = vadd.f32 0.0, %v2344
        %v2346 = vpop.f32.mrb[0].mxu0
        %v2347 = vpop.f32.mrb[0].mxu0
        %v2348 = vadd.f32 0.0, %v2347
        %v2349 = vpop.f32.mrb[0].mxu0
        %2350 = vmatprep.mubr.bf16.mxu0 0
        %2351 = vmatmul.mubr.bf16.gmra.mrb[0].mxu0 %v2291
        %v2352 = vpop.f32.mrb[0].mxu0
        %v2353 = vadd.f32 0.0, %v2352
        %v2354 = vpop.f32.mrb[0].mxu0
        %v2355 = vpop.f32.mrb[0].mxu0
        %v2356 = vadd.f32 0.0, %v2355
        %v2357 = vpop.f32.mrb[0].mxu0
        %2358 = vmatprep.mubr.bf16.mxu0 0
        %2359 = vmatmul.mubr.bf16.gmra.mrb[0].mxu0 %v2294
        %v2360 = vpop.f32.mrb[0].mxu0
        %v2361 = vadd.f32 0.0, %v2360
        %v2362 = vpop.f32.mrb[0].mxu0
        %v2363 = vpop.f32.mrb[0].mxu0
        %v2364 = vadd.f32 0.0, %v2363
        %v2365 = vpop.f32.mrb[0].mxu0
        %2366 = vmatprep.mubr.bf16.mxu0 0
        %2367 = vmatmul.mubr.bf16.gmra.mrb[0].mxu0 %v2297
        %v2368 = vpop.f32.mrb[0].mxu0
        %v2369 = vadd.f32 0.0, %v2368
        %v2370 = vpop.f32.mrb[0].mxu0
        %v2371 = vpop.f32.mrb[0].mxu0
        %v2372 = vpop.f32.mrb[0].mxu0
        %2373 = vdwg.mxu0
        %2374 = vrot.lane.b32.xlu0 %v1715, 64
        %v2375 = vpop.permute.xlu0 %2374
        %2376 = vrot.lane.b32.xlu0 %v1716, 64
        %v2377 = vpop.permute.xlu0 %2376
        %2378 = vrot.lane.b32.xlu0 %v1717, 64
        %v2379 = vpop.permute.xlu0 %2378
        %2380 = vrot.lane.b32.xlu0 %v1718, 64
        %v2381 = vpop.permute.xlu0 %2380
        %2382 = vrot.lane.b32.xlu0 %v1719, 64
        %v2383 = vpop.permute.xlu0 %2382
        %2384 = vrot.lane.b32.xlu0 %v1720, 64
        %v2385 = vpop.permute.xlu0 %2384
        %2386 = vrot.lane.b32.xlu0 %v1721, 64
        %v2387 = vpop.permute.xlu0 %2386
        %2388 = vrot.lane.b32.xlu0 %v1722, 64
        %v2389 = vpop.permute.xlu0 %2388
        %2390 = vrot.lane.b32.xlu0 %v1723, 64
        %v2391 = vpop.permute.xlu0 %2390
        %2392 = vrot.lane.b32.xlu0 %v1724, 64
        %v2393 = vpop.permute.xlu0 %2392
        %v2395 = vsel %vm1730, %v2375, 0
        %v2398 = vsel %vm1730, %v2377, 0
        %v2401 = vsel %vm1730, %v2379, 0
        %v2404 = vsel %vm1730, %v2381, 0
        %v2407 = vsel %vm1730, %v2383, 0
        %v2410 = vsel %vm1730, %v2385, 0
        %v2413 = vsel %vm1730, %v2387, 0
        %v2416 = vsel %vm1730, %v2389, 0
        %v2419 = vsel %vm1730, %v2391, 0
        %v2422 = vsel %vm1730, %v2393, 0
        %2424 = vmatprep.subr.bf16.mxu0 0
        %2425 = vmatpush1.bf16.xpose.msra.mxu0 %v2410
        %2426 = vmatprep.subr.bf16.mxu0 0
        %2427 = vmatpush1.bf16.xpose.msra.mxu0 %v2413
        %2428 = vmatprep.subr.bf16.mxu0 0
        %2429 = vmatpush1.bf16.xpose.msra.mxu0 %v2416
        %2430 = vmatprep.subr.bf16.mxu0 0
        %2431 = vmatpush1.bf16.xpose.msra.mxu0 %v2419
        %2432 = vmatprep.subr.bf16.mxu0 0
        %2433 = vmatpush1.bf16.xpose.msra.mxu0 %v2422
        %2434 = vmatprep.subr.bf16.mxu0 0
        %2435 = vmatpush1.bf16.xpose.msra.mxu0 0
        %2436 = vmatprep.subr.bf16.mxu0 0
        %2437 = vmatpush1.bf16.xpose.msra.mxu0 0
        %2438 = vmatprep.subr.bf16.mxu0 0
        %2439 = vmatpush1.bf16.xpose.msra.mxu0 0
        %2440 = vmatprep.subr.bf16.mxu0 0
        %2441 = vmatpush1.bf16.xpose.msra.mxu0 0
        %2442 = vmatprep.subr.bf16.mxu0 0
        %2443 = vmatpush1.bf16.xpose.msra.mxu0 0
        %2444 = vmatprep.subr.bf16.mxu0 0
        %2445 = vmatpush1.bf16.xpose.msra.mxu0 0
        %2446 = vmatprep.subr.bf16.mxu0 0
        %2447 = vmatpush1.bf16.xpose.msra.mxu0 0
        %2448 = vmatprep.subr.bf16.mxu0 0
        %2449 = vmatpush1.bf16.xpose.msra.mxu0 0
        %2450 = vmatprep.subr.bf16.mxu0 0
        %2451 = vmatpush1.bf16.xpose.msra.mxu0 0
        %2452 = vmatprep.subr.bf16.mxu0 0
        %2453 = vmatpush1.bf16.xpose.msra.mxu0 0
        %2454 = vmatprep.subr.bf16.mxu0 0
        %2455 = vmatpush1.bf16.xpose.msra.mxu0 0
        %2456 = vmatprep.mubr.bf16.mxu0 0
        %2457 = vmatmul.mubr.bf16.gmra.mrb[0].mxu0 %v2395
        %v2458 = vpop.f32.mrb[0].mxu0
        %v2459 = vadd.f32 %v1714, %v2458
        %v2460 = vpop.f32.mrb[0].mxu0
        %v2461 = vpop.f32.mrb[0].mxu0
        %v2462 = vadd.f32 %v1714, %v2461
        %v2463 = vpop.f32.mrb[0].mxu0
        %2464 = vmatprep.mubr.bf16.mxu0 0
        %2465 = vmatmul.mubr.bf16.gmra.mrb[0].mxu0 %v2398
        %v2466 = vpop.f32.mrb[0].mxu0
        %v2467 = vadd.f32 %v1714, %v2466
        %v2468 = vpop.f32.mrb[0].mxu0
        %v2469 = vpop.f32.mrb[0].mxu0
        %v2470 = vadd.f32 %v1714, %v2469
        %v2471 = vpop.f32.mrb[0].mxu0
        %2472 = vmatprep.mubr.bf16.mxu0 0
        %2473 = vmatmul.mubr.bf16.gmra.mrb[0].mxu0 %v2401
        %v2474 = vpop.f32.mrb[0].mxu0
        %v2475 = vadd.f32 %v1714, %v2474
        %v2476 = vpop.f32.mrb[0].mxu0
        %v2477 = vpop.f32.mrb[0].mxu0
        %v2478 = vadd.f32 %v1714, %v2477
        %v2479 = vpop.f32.mrb[0].mxu0
        %2480 = vmatprep.mubr.bf16.mxu0 0
        %2481 = vmatmul.mubr.bf16.gmra.mrb[0].mxu0 %v2404
        %v2482 = vpop.f32.mrb[0].mxu0
        %v2483 = vadd.f32 %v1714, %v2482
        %v2484 = vpop.f32.mrb[0].mxu0
        %v2485 = vpop.f32.mrb[0].mxu0
        %v2486 = vadd.f32 %v1714, %v2485
        %v2487 = vpop.f32.mrb[0].mxu0
        %2488 = vmatprep.mubr.bf16.mxu0 0
        %2489 = vmatmul.mubr.bf16.gmra.mrb[0].mxu0 %v2407
        %v2490 = vpop.f32.mrb[0].mxu0
        %v2491 = vadd.f32 %v1714, %v2490
        %v2492 = vpop.f32.mrb[0].mxu0
        %v2493 = vpop.f32.mrb[0].mxu0
        %v2494 = vpop.f32.mrb[0].mxu0
        %2495 = vdwg.mxu0
        %v2496 = vsel %vm1833, %v2459, -inf
        %2497 = vmax.xlane.f32.xlu0 %v2496
        %v2498 = vpop.xlane.xlu0 %2497
        %v2499 = vsel %vm1833, %v2462, -inf
        %2500 = vmax.xlane.f32.xlu0 %v2499
        %v2501 = vpop.xlane.xlu0 %2500
        %v2502 = vsel %vm1833, %v2467, -inf
        %2503 = vmax.xlane.f32.xlu0 %v2502
        %v2504 = vpop.xlane.xlu0 %2503
        %v2505 = vsel %vm1833, %v2470, -inf
        %2506 = vmax.xlane.f32.xlu0 %v2505
        %v2507 = vpop.xlane.xlu0 %2506
        %v2508 = vsel %vm1833, %v2475, -inf
        %2509 = vmax.xlane.f32.xlu0 %v2508
        %v2510 = vpop.xlane.xlu0 %2509
        %v2511 = vsel %vm1833, %v2478, -inf
        %2512 = vmax.xlane.f32.xlu0 %v2511
        %v2513 = vpop.xlane.xlu0 %2512
        %v2514 = vsel %vm1833, %v2483, -inf
        %2515 = vmax.xlane.f32.xlu0 %v2514
        %v2516 = vpop.xlane.xlu0 %2515
        %v2517 = vsel %vm1833, %v2486, -inf
        %2518 = vmax.xlane.f32.xlu0 %v2517
        %v2519 = vpop.xlane.xlu0 %2518
        %v2520 = vsel %vm1833, %v2491, -inf
        %2521 = vmax.xlane.f32.xlu0 %v2520
        %v2522 = vpop.xlane.xlu0 %2521
        %v2523 = vsub.f32 %v2459, %v2498
        %v2524 = vsub.f32 %v2462, %v2501
        %v2525 = vsub.f32 %v2467, %v2504
        %v2526 = vsub.f32 %v2470, %v2507
        %v2527 = vsub.f32 %v2475, %v2510
        %v2528 = vsub.f32 %v2478, %v2513
        %v2529 = vsub.f32 %v2483, %v2516
        %v2530 = vsub.f32 %v2486, %v2519
        %v2531 = vsub.f32 %v2491, %v2522
        %v2532 = vmul.f32 %v2523, 1.442695
        %v2533 = vpow.pop %v2532
        %v2534 = vmul.f32 %v2524, 1.442695
        %v2535 = vpow.pop %v2534
        %v2536 = vmul.f32 %v2525, 1.442695
        %v2537 = vpow.pop %v2536
        %v2538 = vmul.f32 %v2526, 1.442695
        %v2539 = vpow.pop %v2538
        %v2540 = vmul.f32 %v2527, 1.442695
        %v2541 = vpow.pop %v2540
        %v2542 = vmul.f32 %v2528, 1.442695
        %v2543 = vpow.pop %v2542
        %v2544 = vmul.f32 %v2529, 1.442695
        %v2545 = vpow.pop %v2544
        %v2546 = vmul.f32 %v2530, 1.442695
        %v2547 = vpow.pop %v2546
        %v2548 = vmul.f32 %v2531, 1.442695
        %v2549 = vpow.pop %v2548
        %v2550 = vsel %vm1833, %v2533, 0.0
        %2551 = vadd.xlane.f32.xlu0 %v2550
        %v2552 = vpop.xlane.xlu0 %2551
        %v2553 = vsel %vm1833, %v2535, 0.0
        %2554 = vadd.xlane.f32.xlu0 %v2553
        %v2555 = vpop.xlane.xlu0 %2554
        %v2556 = vsel %vm1833, %v2537, 0.0
        %2557 = vadd.xlane.f32.xlu0 %v2556
        %v2558 = vpop.xlane.xlu0 %2557
        %v2559 = vsel %vm1833, %v2539, 0.0
        %2560 = vadd.xlane.f32.xlu0 %v2559
        %v2561 = vpop.xlane.xlu0 %2560
        %v2562 = vsel %vm1833, %v2541, 0.0
        %2563 = vadd.xlane.f32.xlu0 %v2562
        %v2564 = vpop.xlane.xlu0 %2563
        %v2565 = vsel %vm1833, %v2543, 0.0
        %2566 = vadd.xlane.f32.xlu0 %v2565
        %v2567 = vpop.xlane.xlu0 %2566
        %v2568 = vsel %vm1833, %v2545, 0.0
        %2569 = vadd.xlane.f32.xlu0 %v2568
        %v2570 = vpop.xlane.xlu0 %2569
        %v2571 = vsel %vm1833, %v2547, 0.0
        %2572 = vadd.xlane.f32.xlu0 %v2571
        %v2573 = vpop.xlane.xlu0 %2572
        %v2574 = vsel %vm1833, %v2549, 0.0
        %2575 = vadd.xlane.f32.xlu0 %v2574
        %v2576 = vpop.xlane.xlu0 %2575
        %v2577 = vrcp.pop %v2552
        %v2578 = vrcp.pop %v2555
        %v2579 = vrcp.pop %v2558
        %v2580 = vrcp.pop %v2561
        %v2581 = vrcp.pop %v2564
        %v2582 = vrcp.pop %v2567
        %v2583 = vrcp.pop %v2570
        %v2584 = vrcp.pop %v2573
        %v2585 = vrcp.pop %v2576
        %v2586 = vmul.f32 %v2533, %v2577
        %v2587 = vmul.f32 %v2535, %v2578
        %v2588 = vmul.f32 %v2537, %v2579
        %v2589 = vmul.f32 %v2539, %v2580
        %v2590 = vmul.f32 %v2541, %v2581
        %v2591 = vmul.f32 %v2543, %v2582
        %v2592 = vmul.f32 %v2545, %v2583
        %v2593 = vmul.f32 %v2547, %v2584
        %v2594 = vmul.f32 %v2549, %v2585
        %v2595 = vpack.c.bf16 %v2587, %v2586
        %v2596 = vpack.c.bf16 %v2589, %v2588
        %v2597 = vpack.c.bf16 %v2591, %v2590
        %v2598 = vpack.c.bf16 %v2593, %v2592
        %v2599 = vpack.c.bf16 %v2594, %v2594
        %2600 = vrot.lane.b32.xlu0 %v1725, 64
        %v2601 = vpop.permute.xlu0 %2600
        %2602 = vrot.lane.b32.xlu0 %v1726, 64
        %v2603 = vpop.permute.xlu0 %2602
        %2604 = vrot.lane.b32.xlu0 %v1727, 64
        %v2605 = vpop.permute.xlu0 %2604
        %2606 = vrot.lane.b32.xlu0 %v1728, 64
        %v2607 = vpop.permute.xlu0 %2606
        %2608 = vrot.lane.b32.xlu0 %v1729, 64
        %v2609 = vpop.permute.xlu0 %2608
        %v2615 = vsel %vm1833, %v2595, 0
        %v2618 = vsel %vm1833, %v2596, 0
        %v2621 = vsel %vm1833, %v2597, 0
        %v2624 = vsel %vm1833, %v2598, 0
        %v2627 = vsel %vm1833, %v2599, 0
        %v2630 = vsel %vm1953, %v2609, 0
        %2632 = vmatprep.subr.bf16.mxu0 0
        %2633 = vmatpush1.bf16.msra.mxu0 %v2601
        %2634 = vmatprep.subr.bf16.mxu0 0
        %2635 = vmatpush1.bf16.msra.mxu0 %v2603
        %2636 = vmatprep.subr.bf16.mxu0 0
        %2637 = vmatpush1.bf16.msra.mxu0 %v2605
        %2638 = vmatprep.subr.bf16.mxu0 0
        %2639 = vmatpush1.bf16.msra.mxu0 %v2607
        %2640 = vmatprep.subr.bf16.mxu0 0
        %2641 = vmatpush1.bf16.msra.mxu0 %v2630
        %2642 = vmatprep.subr.bf16.mxu0 0
        %2643 = vmatpush1.bf16.msra.mxu0 0
        %2644 = vmatprep.subr.bf16.mxu0 0
        %2645 = vmatpush1.bf16.msra.mxu0 0
        %2646 = vmatprep.subr.bf16.mxu0 0
        %2647 = vmatpush1.bf16.msra.mxu0 0
        %2648 = vmatprep.subr.bf16.mxu0 0
        %2649 = vmatpush1.bf16.msra.mxu0 0
        %2650 = vmatprep.subr.bf16.mxu0 0
        %2651 = vmatpush1.bf16.msra.mxu0 0
        %2652 = vmatprep.subr.bf16.mxu0 0
        %2653 = vmatpush1.bf16.msra.mxu0 0
        %2654 = vmatprep.subr.bf16.mxu0 0
        %2655 = vmatpush1.bf16.msra.mxu0 0
        %2656 = vmatprep.subr.bf16.mxu0 0
        %2657 = vmatpush1.bf16.msra.mxu0 0
        %2658 = vmatprep.subr.bf16.mxu0 0
        %2659 = vmatpush1.bf16.msra.mxu0 0
        %2660 = vmatprep.subr.bf16.mxu0 0
        %2661 = vmatpush1.bf16.msra.mxu0 0
        %2662 = vmatprep.subr.bf16.mxu0 0
        %2663 = vmatpush1.bf16.msra.mxu0 0
        %2664 = vmatprep.mubr.bf16.mxu0 0
        %2665 = vmatmul.mubr.bf16.gmra.mrb[0].mxu0 %v2615
        %v2666 = vpop.f32.mrb[0].mxu0
        %v2667 = vadd.f32 0.0, %v2666
        %v2668 = vpop.f32.mrb[0].mxu0
        %v2669 = vpop.f32.mrb[0].mxu0
        %v2670 = vadd.f32 0.0, %v2669
        %v2671 = vpop.f32.mrb[0].mxu0
        %2672 = vmatprep.mubr.bf16.mxu0 0
        %2673 = vmatmul.mubr.bf16.gmra.mrb[0].mxu0 %v2618
        %v2674 = vpop.f32.mrb[0].mxu0
        %v2675 = vadd.f32 0.0, %v2674
        %v2676 = vpop.f32.mrb[0].mxu0
        %v2677 = vpop.f32.mrb[0].mxu0
        %v2678 = vadd.f32 0.0, %v2677
        %v2679 = vpop.f32.mrb[0].mxu0
        %2680 = vmatprep.mubr.bf16.mxu0 0
        %2681 = vmatmul.mubr.bf16.gmra.mrb[0].mxu0 %v2621
        %v2682 = vpop.f32.mrb[0].mxu0
        %v2683 = vadd.f32 0.0, %v2682
        %v2684 = vpop.f32.mrb[0].mxu0
        %v2685 = vpop.f32.mrb[0].mxu0
        %v2686 = vadd.f32 0.0, %v2685
        %v2687 = vpop.f32.mrb[0].mxu0
        %2688 = vmatprep.mubr.bf16.mxu0 0
        %2689 = vmatmul.mubr.bf16.gmra.mrb[0].mxu0 %v2624
        %v2690 = vpop.f32.mrb[0].mxu0
        %v2691 = vadd.f32 0.0, %v2690
        %v2692 = vpop.f32.mrb[0].mxu0
        %v2693 = vpop.f32.mrb[0].mxu0
        %v2694 = vadd.f32 0.0, %v2693
        %v2695 = vpop.f32.mrb[0].mxu0
        %2696 = vmatprep.mubr.bf16.mxu0 0
        %2697 = vmatmul.mubr.bf16.gmra.mrb[0].mxu0 %v2627
        %v2698 = vpop.f32.mrb[0].mxu0
        %v2699 = vadd.f32 0.0, %v2698
        %v2700 = vpop.f32.mrb[0].mxu0
        %v2701 = vpop.f32.mrb[0].mxu0
        %v2702 = vpop.f32.mrb[0].mxu0
        %2703 = vdwg.mxu0
        %2704 = vrot.lane.b32.xlu0 %v1715, 32
        %v2705 = vpop.permute.xlu0 %2704
        %2706 = vrot.lane.b32.xlu0 %v1716, 32
        %v2707 = vpop.permute.xlu0 %2706
        %2708 = vrot.lane.b32.xlu0 %v1717, 32
        %v2709 = vpop.permute.xlu0 %2708
        %2710 = vrot.lane.b32.xlu0 %v1718, 32
        %v2711 = vpop.permute.xlu0 %2710
        %2712 = vrot.lane.b32.xlu0 %v1719, 32
        %v2713 = vpop.permute.xlu0 %2712
        %2714 = vrot.lane.b32.xlu0 %v1720, 32
        %v2715 = vpop.permute.xlu0 %2714
        %2716 = vrot.lane.b32.xlu0 %v1721, 32
        %v2717 = vpop.permute.xlu0 %2716
        %2718 = vrot.lane.b32.xlu0 %v1722, 32
        %v2719 = vpop.permute.xlu0 %2718
        %2720 = vrot.lane.b32.xlu0 %v1723, 32
        %v2721 = vpop.permute.xlu0 %2720
        %2722 = vrot.lane.b32.xlu0 %v1724, 32
        %v2723 = vpop.permute.xlu0 %2722
        %v2725 = vsel %vm1730, %v2705, 0
        %v2728 = vsel %vm1730, %v2707, 0
        %v2731 = vsel %vm1730, %v2709, 0
        %v2734 = vsel %vm1730, %v2711, 0
        %v2737 = vsel %vm1730, %v2713, 0
        %v2740 = vsel %vm1730, %v2715, 0
        %v2743 = vsel %vm1730, %v2717, 0
        %v2746 = vsel %vm1730, %v2719, 0
        %v2749 = vsel %vm1730, %v2721, 0
        %v2752 = vsel %vm1730, %v2723, 0
        %2754 = vmatprep.subr.bf16.mxu0 0
        %2755 = vmatpush1.bf16.xpose.msra.mxu0 %v2740
        %2756 = vmatprep.subr.bf16.mxu0 0
        %2757 = vmatpush1.bf16.xpose.msra.mxu0 %v2743
        %2758 = vmatprep.subr.bf16.mxu0 0
        %2759 = vmatpush1.bf16.xpose.msra.mxu0 %v2746
        %2760 = vmatprep.subr.bf16.mxu0 0
        %2761 = vmatpush1.bf16.xpose.msra.mxu0 %v2749
        %2762 = vmatprep.subr.bf16.mxu0 0
        %2763 = vmatpush1.bf16.xpose.msra.mxu0 %v2752
        %2764 = vmatprep.subr.bf16.mxu0 0
        %2765 = vmatpush1.bf16.xpose.msra.mxu0 0
        %2766 = vmatprep.subr.bf16.mxu0 0
        %2767 = vmatpush1.bf16.xpose.msra.mxu0 0
        %2768 = vmatprep.subr.bf16.mxu0 0
        %2769 = vmatpush1.bf16.xpose.msra.mxu0 0
        %2770 = vmatprep.subr.bf16.mxu0 0
        %2771 = vmatpush1.bf16.xpose.msra.mxu0 0
        %2772 = vmatprep.subr.bf16.mxu0 0
        %2773 = vmatpush1.bf16.xpose.msra.mxu0 0
        %2774 = vmatprep.subr.bf16.mxu0 0
        %2775 = vmatpush1.bf16.xpose.msra.mxu0 0
        %2776 = vmatprep.subr.bf16.mxu0 0
        %2777 = vmatpush1.bf16.xpose.msra.mxu0 0
        %2778 = vmatprep.subr.bf16.mxu0 0
        %2779 = vmatpush1.bf16.xpose.msra.mxu0 0
        %2780 = vmatprep.subr.bf16.mxu0 0
        %2781 = vmatpush1.bf16.xpose.msra.mxu0 0
        %2782 = vmatprep.subr.bf16.mxu0 0
        %2783 = vmatpush1.bf16.xpose.msra.mxu0 0
        %2784 = vmatprep.subr.bf16.mxu0 0
        %2785 = vmatpush1.bf16.xpose.msra.mxu0 0
        %2786 = vmatprep.mubr.bf16.mxu0 0
        %2787 = vmatmul.mubr.bf16.gmra.mrb[0].mxu0 %v2725
        %v2788 = vpop.f32.mrb[0].mxu0
        %v2789 = vadd.f32 %v1714, %v2788
        %v2790 = vpop.f32.mrb[0].mxu0
        %v2791 = vpop.f32.mrb[0].mxu0
        %v2792 = vadd.f32 %v1714, %v2791
        %v2793 = vpop.f32.mrb[0].mxu0
        %2794 = vmatprep.mubr.bf16.mxu0 0
        %2795 = vmatmul.mubr.bf16.gmra.mrb[0].mxu0 %v2728
        %v2796 = vpop.f32.mrb[0].mxu0
        %v2797 = vadd.f32 %v1714, %v2796
        %v2798 = vpop.f32.mrb[0].mxu0
        %v2799 = vpop.f32.mrb[0].mxu0
        %v2800 = vadd.f32 %v1714, %v2799
        %v2801 = vpop.f32.mrb[0].mxu0
        %2802 = vmatprep.mubr.bf16.mxu0 0
        %2803 = vmatmul.mubr.bf16.gmra.mrb[0].mxu0 %v2731
        %v2804 = vpop.f32.mrb[0].mxu0
        %v2805 = vadd.f32 %v1714, %v2804
        %v2806 = vpop.f32.mrb[0].mxu0
        %v2807 = vpop.f32.mrb[0].mxu0
        %v2808 = vadd.f32 %v1714, %v2807
        %v2809 = vpop.f32.mrb[0].mxu0
        %2810 = vmatprep.mubr.bf16.mxu0 0
        %2811 = vmatmul.mubr.bf16.gmra.mrb[0].mxu0 %v2734
        %v2812 = vpop.f32.mrb[0].mxu0
        %v2813 = vadd.f32 %v1714, %v2812
        %v2814 = vpop.f32.mrb[0].mxu0
        %v2815 = vpop.f32.mrb[0].mxu0
        %v2816 = vadd.f32 %v1714, %v2815
        %v2817 = vpop.f32.mrb[0].mxu0
        %2818 = vmatprep.mubr.bf16.mxu0 0
        %2819 = vmatmul.mubr.bf16.gmra.mrb[0].mxu0 %v2737
        %v2820 = vpop.f32.mrb[0].mxu0
        %v2821 = vadd.f32 %v1714, %v2820
        %v2822 = vpop.f32.mrb[0].mxu0
        %v2823 = vpop.f32.mrb[0].mxu0
        %v2824 = vpop.f32.mrb[0].mxu0
        %2825 = vdwg.mxu0
        %v2826 = vsel %vm1833, %v2789, -inf
        %2827 = vmax.xlane.f32.xlu0 %v2826
        %v2828 = vpop.xlane.xlu0 %2827
        %v2829 = vsel %vm1833, %v2792, -inf
        %2830 = vmax.xlane.f32.xlu0 %v2829
        %v2831 = vpop.xlane.xlu0 %2830
        %v2832 = vsel %vm1833, %v2797, -inf
        %2833 = vmax.xlane.f32.xlu0 %v2832
        %v2834 = vpop.xlane.xlu0 %2833
        %v2835 = vsel %vm1833, %v2800, -inf
        %2836 = vmax.xlane.f32.xlu0 %v2835
        %v2837 = vpop.xlane.xlu0 %2836
        %v2838 = vsel %vm1833, %v2805, -inf
        %2839 = vmax.xlane.f32.xlu0 %v2838
        %v2840 = vpop.xlane.xlu0 %2839
        %v2841 = vsel %vm1833, %v2808, -inf
        %2842 = vmax.xlane.f32.xlu0 %v2841
        %v2843 = vpop.xlane.xlu0 %2842
        %v2844 = vsel %vm1833, %v2813, -inf
        %2845 = vmax.xlane.f32.xlu0 %v2844
        %v2846 = vpop.xlane.xlu0 %2845
        %v2847 = vsel %vm1833, %v2816, -inf
        %2848 = vmax.xlane.f32.xlu0 %v2847
        %v2849 = vpop.xlane.xlu0 %2848
        %v2850 = vsel %vm1833, %v2821, -inf
        %2851 = vmax.xlane.f32.xlu0 %v2850
        %v2852 = vpop.xlane.xlu0 %2851
        %v2853 = vsub.f32 %v2789, %v2828
        %v2854 = vsub.f32 %v2792, %v2831
        %v2855 = vsub.f32 %v2797, %v2834
        %v2856 = vsub.f32 %v2800, %v2837
        %v2857 = vsub.f32 %v2805, %v2840
        %v2858 = vsub.f32 %v2808, %v2843
        %v2859 = vsub.f32 %v2813, %v2846
        %v2860 = vsub.f32 %v2816, %v2849
        %v2861 = vsub.f32 %v2821, %v2852
        %v2862 = vmul.f32 %v2853, 1.442695
        %v2863 = vpow.pop %v2862
        %v2864 = vmul.f32 %v2854, 1.442695
        %v2865 = vpow.pop %v2864
        %v2866 = vmul.f32 %v2855, 1.442695
        %v2867 = vpow.pop %v2866
        %v2868 = vmul.f32 %v2856, 1.442695
        %v2869 = vpow.pop %v2868
        %v2870 = vmul.f32 %v2857, 1.442695
        %v2871 = vpow.pop %v2870
        %v2872 = vmul.f32 %v2858, 1.442695
        %v2873 = vpow.pop %v2872
        %v2874 = vmul.f32 %v2859, 1.442695
        %v2875 = vpow.pop %v2874
        %v2876 = vmul.f32 %v2860, 1.442695
        %v2877 = vpow.pop %v2876
        %v2878 = vmul.f32 %v2861, 1.442695
        %v2879 = vpow.pop %v2878
        %v2880 = vsel %vm1833, %v2863, 0.0
        %2881 = vadd.xlane.f32.xlu0 %v2880
        %v2882 = vpop.xlane.xlu0 %2881
        %v2883 = vsel %vm1833, %v2865, 0.0
        %2884 = vadd.xlane.f32.xlu0 %v2883
        %v2885 = vpop.xlane.xlu0 %2884
        %v2886 = vsel %vm1833, %v2867, 0.0
        %2887 = vadd.xlane.f32.xlu0 %v2886
        %v2888 = vpop.xlane.xlu0 %2887
        %v2889 = vsel %vm1833, %v2869, 0.0
        %2890 = vadd.xlane.f32.xlu0 %v2889
        %v2891 = vpop.xlane.xlu0 %2890
        %v2892 = vsel %vm1833, %v2871, 0.0
        %2893 = vadd.xlane.f32.xlu0 %v2892
        %v2894 = vpop.xlane.xlu0 %2893
        %v2895 = vsel %vm1833, %v2873, 0.0
        %2896 = vadd.xlane.f32.xlu0 %v2895
        %v2897 = vpop.xlane.xlu0 %2896
        %v2898 = vsel %vm1833, %v2875, 0.0
        %2899 = vadd.xlane.f32.xlu0 %v2898
        %v2900 = vpop.xlane.xlu0 %2899
        %v2901 = vsel %vm1833, %v2877, 0.0
        %2902 = vadd.xlane.f32.xlu0 %v2901
        %v2903 = vpop.xlane.xlu0 %2902
        %v2904 = vsel %vm1833, %v2879, 0.0
        %2905 = vadd.xlane.f32.xlu0 %v2904
        %v2906 = vpop.xlane.xlu0 %2905
        %v2907 = vrcp.pop %v2882
        %v2908 = vrcp.pop %v2885
        %v2909 = vrcp.pop %v2888
        %v2910 = vrcp.pop %v2891
        %v2911 = vrcp.pop %v2894
        %v2912 = vrcp.pop %v2897
        %v2913 = vrcp.pop %v2900
        %v2914 = vrcp.pop %v2903
        %v2915 = vrcp.pop %v2906
        %v2916 = vmul.f32 %v2863, %v2907
        %v2917 = vmul.f32 %v2865, %v2908
        %v2918 = vmul.f32 %v2867, %v2909
        %v2919 = vmul.f32 %v2869, %v2910
        %v2920 = vmul.f32 %v2871, %v2911
        %v2921 = vmul.f32 %v2873, %v2912
        %v2922 = vmul.f32 %v2875, %v2913
        %v2923 = vmul.f32 %v2877, %v2914
        %v2924 = vmul.f32 %v2879, %v2915
        %v2925 = vpack.c.bf16 %v2917, %v2916
        %v2926 = vpack.c.bf16 %v2919, %v2918
        %v2927 = vpack.c.bf16 %v2921, %v2920
        %v2928 = vpack.c.bf16 %v2923, %v2922
        %v2929 = vpack.c.bf16 %v2924, %v2924
        %2930 = vrot.lane.b32.xlu0 %v1725, 32
        %v2931 = vpop.permute.xlu0 %2930
        %2932 = vrot.lane.b32.xlu0 %v1726, 32
        %v2933 = vpop.permute.xlu0 %2932
        %2934 = vrot.lane.b32.xlu0 %v1727, 32
        %v2935 = vpop.permute.xlu0 %2934
        %2936 = vrot.lane.b32.xlu0 %v1728, 32
        %v2937 = vpop.permute.xlu0 %2936
        %2938 = vrot.lane.b32.xlu0 %v1729, 32
        %v2939 = vpop.permute.xlu0 %2938
        %v2945 = vsel %vm1833, %v2925, 0
        %v2948 = vsel %vm1833, %v2926, 0
        %v2951 = vsel %vm1833, %v2927, 0
        %v2954 = vsel %vm1833, %v2928, 0
        %v2957 = vsel %vm1833, %v2929, 0
        %v2960 = vsel %vm1953, %v2939, 0
        %2962 = vmatprep.subr.bf16.mxu0 0
        %2963 = vmatpush1.bf16.msra.mxu0 %v2931
        %2964 = vmatprep.subr.bf16.mxu0 0
        %2965 = vmatpush1.bf16.msra.mxu0 %v2933
        %2966 = vmatprep.subr.bf16.mxu0 0
        %2967 = vmatpush1.bf16.msra.mxu0 %v2935
        %2968 = vmatprep.subr.bf16.mxu0 0
        %2969 = vmatpush1.bf16.msra.mxu0 %v2937
        %2970 = vmatprep.subr.bf16.mxu0 0
        %2971 = vmatpush1.bf16.msra.mxu0 %v2960
        %2972 = vmatprep.subr.bf16.mxu0 0
        %2973 = vmatpush1.bf16.msra.mxu0 0
        %2974 = vmatprep.subr.bf16.mxu0 0
        %2975 = vmatpush1.bf16.msra.mxu0 0
        %2976 = vmatprep.subr.bf16.mxu0 0
        %2977 = vmatpush1.bf16.msra.mxu0 0
        %2978 = vmatprep.subr.bf16.mxu0 0
        %2979 = vmatpush1.bf16.msra.mxu0 0
        %2980 = vmatprep.subr.bf16.mxu0 0
        %2981 = vmatpush1.bf16.msra.mxu0 0
        %2982 = vmatprep.subr.bf16.mxu0 0
        %2983 = vmatpush1.bf16.msra.mxu0 0
        %2984 = vmatprep.subr.bf16.mxu0 0
        %2985 = vmatpush1.bf16.msra.mxu0 0
        %2986 = vmatprep.subr.bf16.mxu0 0
        %2987 = vmatpush1.bf16.msra.mxu0 0
        %2988 = vmatprep.subr.bf16.mxu0 0
        %2989 = vmatpush1.bf16.msra.mxu0 0
        %2990 = vmatprep.subr.bf16.mxu0 0
        %2991 = vmatpush1.bf16.msra.mxu0 0
        %2992 = vmatprep.subr.bf16.mxu0 0
        %2993 = vmatpush1.bf16.msra.mxu0 0
        %2994 = vmatprep.mubr.bf16.mxu0 0
        %2995 = vmatmul.mubr.bf16.gmra.mrb[0].mxu0 %v2945
        %v2996 = vpop.f32.mrb[0].mxu0
        %v2997 = vadd.f32 0.0, %v2996
        %v2998 = vpop.f32.mrb[0].mxu0
        %v2999 = vpop.f32.mrb[0].mxu0
        %v3000 = vadd.f32 0.0, %v2999
        %v3001 = vpop.f32.mrb[0].mxu0
        %3002 = vmatprep.mubr.bf16.mxu0 0
        %3003 = vmatmul.mubr.bf16.gmra.mrb[0].mxu0 %v2948
        %v3004 = vpop.f32.mrb[0].mxu0
        %v3005 = vadd.f32 0.0, %v3004
        %v3006 = vpop.f32.mrb[0].mxu0
        %v3007 = vpop.f32.mrb[0].mxu0
        %v3008 = vadd.f32 0.0, %v3007
        %v3009 = vpop.f32.mrb[0].mxu0
        %3010 = vmatprep.mubr.bf16.mxu0 0
        %3011 = vmatmul.mubr.bf16.gmra.mrb[0].mxu0 %v2951
        %v3012 = vpop.f32.mrb[0].mxu0
        %v3013 = vadd.f32 0.0, %v3012
        %v3014 = vpop.f32.mrb[0].mxu0
        %v3015 = vpop.f32.mrb[0].mxu0
        %v3016 = vadd.f32 0.0, %v3015
        %v3017 = vpop.f32.mrb[0].mxu0
        %3018 = vmatprep.mubr.bf16.mxu0 0
        %3019 = vmatmul.mubr.bf16.gmra.mrb[0].mxu0 %v2954
        %v3020 = vpop.f32.mrb[0].mxu0
        %v3021 = vadd.f32 0.0, %v3020
        %v3022 = vpop.f32.mrb[0].mxu0
        %v3023 = vpop.f32.mrb[0].mxu0
        %v3024 = vadd.f32 0.0, %v3023
        %v3025 = vpop.f32.mrb[0].mxu0
        %3026 = vmatprep.mubr.bf16.mxu0 0
        %3027 = vmatmul.mubr.bf16.gmra.mrb[0].mxu0 %v2957
        %v3028 = vpop.f32.mrb[0].mxu0
        %v3029 = vadd.f32 0.0, %v3028
        %v3030 = vpop.f32.mrb[0].mxu0
        %v3031 = vpop.f32.mrb[0].mxu0
        %v3032 = vpop.f32.mrb[0].mxu0
        %3033 = vdwg.mxu0
        %3043 = vrot.lane.b32.xlu0 %v2337, 32
        %v3044 = vpop.permute.xlu0 %3043
        %3045 = vrot.lane.b32.xlu0 %v2340, 32
        %v3046 = vpop.permute.xlu0 %3045
        %3047 = vrot.lane.b32.xlu0 %v2345, 32
        %v3048 = vpop.permute.xlu0 %3047
        %3049 = vrot.lane.b32.xlu0 %v2348, 32
        %v3050 = vpop.permute.xlu0 %3049
        %3051 = vrot.lane.b32.xlu0 %v2353, 32
        %v3052 = vpop.permute.xlu0 %3051
        %3053 = vrot.lane.b32.xlu0 %v2356, 32
        %v3054 = vpop.permute.xlu0 %3053
        %3055 = vrot.lane.b32.xlu0 %v2361, 32
        %v3056 = vpop.permute.xlu0 %3055
        %3057 = vrot.lane.b32.xlu0 %v2364, 32
        %v3058 = vpop.permute.xlu0 %3057
        %3059 = vrot.lane.b32.xlu0 %v2369, 32
        %v3060 = vpop.permute.xlu0 %3059
        %3079 = vrot.lane.b32.xlu0 %v2667, 64
        %v3080 = vpop.permute.xlu0 %3079
        %3081 = vrot.lane.b32.xlu0 %v2670, 64
        %v3082 = vpop.permute.xlu0 %3081
        %3083 = vrot.lane.b32.xlu0 %v2675, 64
        %v3084 = vpop.permute.xlu0 %3083
        %3085 = vrot.lane.b32.xlu0 %v2678, 64
        %v3086 = vpop.permute.xlu0 %3085
        %3087 = vrot.lane.b32.xlu0 %v2683, 64
        %v3088 = vpop.permute.xlu0 %3087
        %3089 = vrot.lane.b32.xlu0 %v2686, 64
        %v3090 = vpop.permute.xlu0 %3089
        %3091 = vrot.lane.b32.xlu0 %v2691, 64
        %v3092 = vpop.permute.xlu0 %3091
        %3093 = vrot.lane.b32.xlu0 %v2694, 64
        %v3094 = vpop.permute.xlu0 %3093
        %3095 = vrot.lane.b32.xlu0 %v2699, 64
        %v3096 = vpop.permute.xlu0 %3095
        %3115 = vrot.lane.b32.xlu0 %v2997, 96
        %v3116 = vpop.permute.xlu0 %3115
        %3117 = vrot.lane.b32.xlu0 %v3000, 96
        %v3118 = vpop.permute.xlu0 %3117
        %3119 = vrot.lane.b32.xlu0 %v3005, 96
        %v3120 = vpop.permute.xlu0 %3119
        %3121 = vrot.lane.b32.xlu0 %v3008, 96
        %v3122 = vpop.permute.xlu0 %3121
        %3123 = vrot.lane.b32.xlu0 %v3013, 96
        %v3124 = vpop.permute.xlu0 %3123
        %3125 = vrot.lane.b32.xlu0 %v3016, 96
        %v3126 = vpop.permute.xlu0 %3125
        %3127 = vrot.lane.b32.xlu0 %v3021, 96
        %v3128 = vpop.permute.xlu0 %3127
        %3129 = vrot.lane.b32.xlu0 %v3024, 96
        %v3130 = vpop.permute.xlu0 %3129
        %3131 = vrot.lane.b32.xlu0 %v3029, 96
        %v3132 = vpop.permute.xlu0 %3131
        %v3142 = vsel %vm1730, %v1992, %v3044
        %v3143 = vsel %vm1730, %v1995, %v3046
        %v3144 = vsel %vm1730, %v2000, %v3048
        %v3145 = vsel %vm1730, %v2003, %v3050
        %v3146 = vsel %vm1730, %v2008, %v3052
        %v3147 = vsel %vm1730, %v2011, %v3054
        %v3148 = vsel %vm1730, %v2016, %v3056
        %v3149 = vsel %vm1730, %v2019, %v3058
        %v3150 = vsel %vm1730, %v2024, %v3060
        %vm3151 = vcmask 523264
        %v3152 = vsel %vm3151, %v3142, %v3080
        %v3153 = vsel %vm3151, %v3143, %v3082
        %v3154 = vsel %vm3151, %v3144, %v3084
        %v3155 = vsel %vm3151, %v3145, %v3086
        %v3156 = vsel %vm3151, %v3146, %v3088
        %v3157 = vsel %vm3151, %v3147, %v3090
        %v3158 = vsel %vm3151, %v3148, %v3092
        %v3159 = vsel %vm3151, %v3149, %v3094
        %v3160 = vsel %vm3151, %v3150, %v3096
        %vm3161 = vcmask 785408
        %v3162 = vsel %vm3161, %v3152, %v3116
        %v3163 = vsel %vm3161, %v3153, %v3118
        %v3164 = vsel %vm3161, %v3154, %v3120
        %v3165 = vsel %vm3161, %v3155, %v3122
        %v3166 = vsel %vm3161, %v3156, %v3124
        %v3167 = vsel %vm3161, %v3157, %v3126
        %v3168 = vsel %vm3161, %v3158, %v3128
        %v3169 = vsel %vm3161, %v3159, %v3130
        %v3170 = vsel %vm3161, %v3160, %v3132
        %v3171 = vpack.c.bf16 %v3163, %v3162
        %v3172 = vpack.c.bf16 %v3165, %v3164
        %v3173 = vpack.c.bf16 %v3167, %v3166
        %v3174 = vpack.c.bf16 %v3169, %v3168
        %v3175 = vpack.c.bf16 %v3170, %v3170
        %v3176 = vld [vmem:[%s905] sm:$0xf]
        %v3177 = vld [vmem:[%s905 + $0x4] sm:$0xf]
        %v3178 = vld [vmem:[%s905 + $0x8] sm:$0xf]
        %v3179 = vld [vmem:[%s905 + $0xc] sm:$0xf]
        %v3180 = vld [vmem:[%s905 + $0x10] sm:$0xf]
        %v3181 = vld [vmem:[%s905 + $0x14] sm:$0xf]
        %v3182 = vld [vmem:[%s905 + $0x18] sm:$0xf]
        %v3183 = vld [vmem:[%s905 + $0x1c] sm:$0xf]
        %v3184 = vld [vmem:[%s905 + $0x20] sm:$0xf]
        %v3185 = vld [vmem:[%s905 + $0x24] sm:$0xf]
        %v3186 = vld [vmem:[%s905 + $0x28] sm:$0xf]
        %v3187 = vld [vmem:[%s905 + $0x2c] sm:$0xf]
        %v3188 = vld [vmem:[%s905 + $0x30] sm:$0xf]
        %v3189 = vld [vmem:[%s905 + $0x34] sm:$0xf]
        %v3190 = vld [vmem:[%s905 + $0x38] sm:$0xf]
        %v3191 = vld [vmem:[%s905 + $0x3c] sm:$0xf]
        %v3192 = vld [vmem:[%s908] sm:$0x1]
        %v3194 = vlaneseq
        %v3195 = vshrl.u32 %v3194, 7
        %v3196 = vsub.s32 0, %v3195
        %v3197 = vrot.slane %v3192, %v3196
        %v3215 = vunpack.c.l.b16 %v3176
        %v3216 = vunpack.c.l.b16 %v3177
        %v3217 = vunpack.c.l.b16 %v3178
        %v3218 = vunpack.c.l.b16 %v3179
        %v3219 = vunpack.c.l.b16 %v3180
        %v3220 = vunpack.c.l.b16 %v3181
        %v3221 = vunpack.c.l.b16 %v3182
        %v3222 = vunpack.c.l.b16 %v3183
        %v3223 = vunpack.c.l.b16 %v3184
        %v3224 = vunpack.c.l.b16 %v3185
        %v3225 = vunpack.c.l.b16 %v3186
        %v3226 = vunpack.c.l.b16 %v3187
        %v3227 = vunpack.c.l.b16 %v3188
        %v3228 = vunpack.c.l.b16 %v3189
        %v3229 = vunpack.c.l.b16 %v3190
        %v3230 = vunpack.c.l.b16 %v3191
        %v3231 = vpack.c.b16 %v3216, %v3215
        %v3232 = vpack.c.b16 %v3218, %v3217
        %v3233 = vpack.c.b16 %v3220, %v3219
        %v3234 = vpack.c.b16 %v3222, %v3221
        %v3235 = vpack.c.b16 %v3224, %v3223
        %v3236 = vpack.c.b16 %v3226, %v3225
        %v3237 = vpack.c.b16 %v3228, %v3227
        %v3238 = vpack.c.b16 %v3230, %v3229
        %3247 = vmatprep.subr.bf16.mxu0 0
        %3248 = vmatpush1.bf16.msra.mxu0 %v3231
        %3249 = vmatprep.subr.bf16.mxu0 0
        %3250 = vmatpush1.bf16.msra.mxu0 %v3232
        %3251 = vmatprep.subr.bf16.mxu0 0
        %3252 = vmatpush1.bf16.msra.mxu0 %v3233
        %3253 = vmatprep.subr.bf16.mxu0 0
        %3254 = vmatpush1.bf16.msra.mxu0 %v3234
        %3255 = vmatprep.subr.bf16.mxu0 0
        %3256 = vmatpush1.bf16.msra.mxu0 %v3235
        %3257 = vmatprep.subr.bf16.mxu0 0
        %3258 = vmatpush1.bf16.msra.mxu0 %v3236
        %3259 = vmatprep.subr.bf16.mxu0 0
        %3260 = vmatpush1.bf16.msra.mxu0 %v3237
        %3261 = vmatprep.subr.bf16.mxu0 0
        %3262 = vmatpush1.bf16.msra.mxu0 %v3238
        %3263 = vmatprep.subr.bf16.mxu0 0
        %3264 = vmatpush1.bf16.msra.mxu0 0
        %3265 = vmatprep.subr.bf16.mxu0 0
        %3266 = vmatpush1.bf16.msra.mxu0 0
        %3267 = vmatprep.subr.bf16.mxu0 0
        %3268 = vmatpush1.bf16.msra.mxu0 0
        %3269 = vmatprep.subr.bf16.mxu0 0
        %3270 = vmatpush1.bf16.msra.mxu0 0
        %3271 = vmatprep.subr.bf16.mxu0 0
        %3272 = vmatpush1.bf16.msra.mxu0 0
        %3273 = vmatprep.subr.bf16.mxu0 0
        %3274 = vmatpush1.bf16.msra.mxu0 0
        %3275 = vmatprep.subr.bf16.mxu0 0
        %3276 = vmatpush1.bf16.msra.mxu0 0
        %3277 = vmatprep.subr.bf16.mxu0 0
        %3278 = vmatpush1.bf16.msra.mxu0 0
        %3279 = vmatprep.mubr.bf16.mxu0 0
        %3280 = vmatmul.mubr.bf16.gmra.mrb[0].mxu0 %v3171
        %v3281 = vpop.f32.mrb[0].mxu0
        %v3282 = vadd.f32 %v3197, %v3281
        %v3283 = vpop.f32.mrb[0].mxu0
        %v3284 = vpop.f32.mrb[0].mxu0
        %v3285 = vadd.f32 %v3197, %v3284
        %v3286 = vpop.f32.mrb[0].mxu0
        %3287 = vmatprep.mubr.bf16.mxu0 0
        %3288 = vmatmul.mubr.bf16.gmra.mrb[0].mxu0 %v3172
        %v3289 = vpop.f32.mrb[0].mxu0
        %v3290 = vadd.f32 %v3197, %v3289
        %v3291 = vpop.f32.mrb[0].mxu0
        %v3292 = vpop.f32.mrb[0].mxu0
        %v3293 = vadd.f32 %v3197, %v3292
        %v3294 = vpop.f32.mrb[0].mxu0
        %3295 = vmatprep.mubr.bf16.mxu0 0
        %3296 = vmatmul.mubr.bf16.gmra.mrb[0].mxu0 %v3173
        %v3297 = vpop.f32.mrb[0].mxu0
        %v3298 = vadd.f32 %v3197, %v3297
        %v3299 = vpop.f32.mrb[0].mxu0
        %v3300 = vpop.f32.mrb[0].mxu0
        %v3301 = vadd.f32 %v3197, %v3300
        %v3302 = vpop.f32.mrb[0].mxu0
        %3303 = vmatprep.mubr.bf16.mxu0 0
        %3304 = vmatmul.mubr.bf16.gmra.mrb[0].mxu0 %v3174
        %v3305 = vpop.f32.mrb[0].mxu0
        %v3306 = vadd.f32 %v3197, %v3305
        %v3307 = vpop.f32.mrb[0].mxu0
        %v3308 = vpop.f32.mrb[0].mxu0
        %v3309 = vadd.f32 %v3197, %v3308
        %v3310 = vpop.f32.mrb[0].mxu0
        %3311 = vmatprep.mubr.bf16.mxu0 0
        %3312 = vmatmul.mubr.bf16.gmra.mrb[0].mxu0 %v3175
        %v3313 = vpop.f32.mrb[0].mxu0
        %v3314 = vadd.f32 %v3197, %v3313
        %v3315 = vpop.f32.mrb[0].mxu0
        %v3316 = vpop.f32.mrb[0].mxu0
        %v3317 = vpop.f32.mrb[0].mxu0
        %3318 = vdwg.mxu0
        %v3319 = vadd.f32 %v1367, %v3282
        %v3320 = vadd.f32 %v1368, %v3285
        %v3321 = vadd.f32 %v1369, %v3290
        %v3322 = vadd.f32 %v1370, %v3293
        %v3323 = vadd.f32 %v1371, %v3298
        %v3324 = vadd.f32 %v1372, %v3301
        %v3325 = vadd.f32 %v1373, %v3306
        %v3326 = vadd.f32 %v1374, %v3309
        %v3327 = vadd.f32 %v1375, %v3314
        %v3328 = vld [vmem:[%s911] sm:$0x1]
        %v3329 = vld [vmem:[%s914] sm:$0x1]
        %3330 = vadd.xlane.f32.xlu0 %v3319
        %v3331 = vpop.xlane.xlu0 %3330
        %3332 = vadd.xlane.f32.xlu0 %v3320
        %v3333 = vpop.xlane.xlu0 %3332
        %3334 = vadd.xlane.f32.xlu0 %v3321
        %v3335 = vpop.xlane.xlu0 %3334
        %3336 = vadd.xlane.f32.xlu0 %v3322
        %v3337 = vpop.xlane.xlu0 %3336
        %3338 = vadd.xlane.f32.xlu0 %v3323
        %v3339 = vpop.xlane.xlu0 %3338
        %3340 = vadd.xlane.f32.xlu0 %v3324
        %v3341 = vpop.xlane.xlu0 %3340
        %3342 = vadd.xlane.f32.xlu0 %v3325
        %v3343 = vpop.xlane.xlu0 %3342
        %3344 = vadd.xlane.f32.xlu0 %v3326
        %v3345 = vpop.xlane.xlu0 %3344
        %3346 = vadd.xlane.f32.xlu0 %v3327
        %v3347 = vpop.xlane.xlu0 %3346
        %v3348 = vrcp.pop 128.0
        %v3349 = vmul.f32 %v3331, %v3348
        %v3350 = vmul.f32 %v3333, %v3348
        %v3351 = vmul.f32 %v3335, %v3348
        %v3352 = vmul.f32 %v3337, %v3348
        %v3353 = vmul.f32 %v3339, %v3348
        %v3354 = vmul.f32 %v3341, %v3348
        %v3355 = vmul.f32 %v3343, %v3348
        %v3356 = vmul.f32 %v3345, %v3348
        %v3357 = vmul.f32 %v3347, %v3348
        %v3358 = vsub.f32 %v3319, %v3349
        %v3359 = vsub.f32 %v3320, %v3350
        %v3360 = vsub.f32 %v3321, %v3351
        %v3361 = vsub.f32 %v3322, %v3352
        %v3362 = vsub.f32 %v3323, %v3353
        %v3363 = vsub.f32 %v3324, %v3354
        %v3364 = vsub.f32 %v3325, %v3355
        %v3365 = vsub.f32 %v3326, %v3356
        %v3366 = vsub.f32 %v3327, %v3357
        %v3367 = vmul.f32 %v3358, %v3358
        %v3368 = vmul.f32 %v3359, %v3359
        %v3369 = vmul.f32 %v3360, %v3360
        %v3370 = vmul.f32 %v3361, %v3361
        %v3371 = vmul.f32 %v3362, %v3362
        %v3372 = vmul.f32 %v3363, %v3363
        %v3373 = vmul.f32 %v3364, %v3364
        %v3374 = vmul.f32 %v3365, %v3365
        %v3375 = vmul.f32 %v3366, %v3366
        %3376 = vadd.xlane.f32.xlu0 %v3367
        %v3377 = vpop.xlane.xlu0 %3376
        %3378 = vadd.xlane.f32.xlu0 %v3368
        %v3379 = vpop.xlane.xlu0 %3378
        %3380 = vadd.xlane.f32.xlu0 %v3369
        %v3381 = vpop.xlane.xlu0 %3380
        %3382 = vadd.xlane.f32.xlu0 %v3370
        %v3383 = vpop.xlane.xlu0 %3382
        %3384 = vadd.xlane.f32.xlu0 %v3371
        %v3385 = vpop.xlane.xlu0 %3384
        %3386 = vadd.xlane.f32.xlu0 %v3372
        %v3387 = vpop.xlane.xlu0 %3386
        %3388 = vadd.xlane.f32.xlu0 %v3373
        %v3389 = vpop.xlane.xlu0 %3388
        %3390 = vadd.xlane.f32.xlu0 %v3374
        %v3391 = vpop.xlane.xlu0 %3390
        %3392 = vadd.xlane.f32.xlu0 %v3375
        %v3393 = vpop.xlane.xlu0 %3392
        %v3394 = vmul.f32 %v3377, %v3348
        %v3395 = vmul.f32 %v3379, %v3348
        %v3396 = vmul.f32 %v3381, %v3348
        %v3397 = vmul.f32 %v3383, %v3348
        %v3398 = vmul.f32 %v3385, %v3348
        %v3399 = vmul.f32 %v3387, %v3348
        %v3400 = vmul.f32 %v3389, %v3348
        %v3401 = vmul.f32 %v3391, %v3348
        %v3402 = vmul.f32 %v3393, %v3348
        %v3403 = vadd.f32 %v3394, 1e-05
        %v3404 = vadd.f32 %v3395, 1e-05
        %v3405 = vadd.f32 %v3396, 1e-05
        %v3406 = vadd.f32 %v3397, 1e-05
        %v3407 = vadd.f32 %v3398, 1e-05
        %v3408 = vadd.f32 %v3399, 1e-05
        %v3409 = vadd.f32 %v3400, 1e-05
        %v3410 = vadd.f32 %v3401, 1e-05
        %v3411 = vadd.f32 %v3402, 1e-05
        %v3412 = vrsqrt.pop %v3403
        %v3413 = vrsqrt.pop %v3404
        %v3414 = vrsqrt.pop %v3405
        %v3415 = vrsqrt.pop %v3406
        %v3416 = vrsqrt.pop %v3407
        %v3417 = vrsqrt.pop %v3408
        %v3418 = vrsqrt.pop %v3409
        %v3419 = vrsqrt.pop %v3410
        %v3420 = vrsqrt.pop %v3411
        %v3421 = vmul.f32 %v3358, %v3412
        %v3422 = vmul.f32 %v3359, %v3413
        %v3423 = vmul.f32 %v3360, %v3414
        %v3424 = vmul.f32 %v3361, %v3415
        %v3425 = vmul.f32 %v3362, %v3416
        %v3426 = vmul.f32 %v3363, %v3417
        %v3427 = vmul.f32 %v3364, %v3418
        %v3428 = vmul.f32 %v3365, %v3419
        %v3429 = vmul.f32 %v3366, %v3420
        %v3431 = vlaneseq
        %v3432 = vshrl.u32 %v3431, 7
        %v3433 = vsub.s32 0, %v3432
        %v3434 = vrot.slane %v3328, %v3433
        %v3436 = vmul.f32 %v3421, %v3434
        %v3437 = vmul.f32 %v3422, %v3434
        %v3438 = vmul.f32 %v3423, %v3434
        %v3439 = vmul.f32 %v3424, %v3434
        %v3440 = vmul.f32 %v3425, %v3434
        %v3441 = vmul.f32 %v3426, %v3434
        %v3442 = vmul.f32 %v3427, %v3434
        %v3443 = vmul.f32 %v3428, %v3434
        %v3444 = vmul.f32 %v3429, %v3434
        %v3446 = vlaneseq
        %v3447 = vshrl.u32 %v3446, 7
        %v3448 = vsub.s32 0, %v3447
        %v3449 = vrot.slane %v3329, %v3448
        %v3451 = vadd.f32 %v3436, %v3449
        %v3452 = vadd.f32 %v3437, %v3449
        %v3453 = vadd.f32 %v3438, %v3449
        %v3454 = vadd.f32 %v3439, %v3449
        %v3455 = vadd.f32 %v3440, %v3449
        %v3456 = vadd.f32 %v3441, %v3449
        %v3457 = vadd.f32 %v3442, %v3449
        %v3458 = vadd.f32 %v3443, %v3449
        %v3459 = vadd.f32 %v3444, %v3449
        %v3460 = vpack.c.bf16 %v3452, %v3451
        %v3461 = vpack.c.bf16 %v3454, %v3453
        %v3462 = vpack.c.bf16 %v3456, %v3455
        %v3463 = vpack.c.bf16 %v3458, %v3457
        %v3464 = vpack.c.bf16 %v3459, %v3459
        %v3465 = vld [vmem:[%s919] sm:$0xff]
        %v3466 = vld [vmem:[%s919 + $0x8] sm:$0xff]
        %v3467 = vld [vmem:[%s919 + $0x10] sm:$0xff]
        %v3468 = vld [vmem:[%s919 + $0x18] sm:$0xff]
        %v3469 = vld [vmem:[%s919 + $0x20] sm:$0xff]
        %v3470 = vld [vmem:[%s919 + $0x28] sm:$0xff]
        %v3471 = vld [vmem:[%s919 + $0x30] sm:$0xff]
        %v3472 = vld [vmem:[%s919 + $0x38] sm:$0xff]
        %v3473 = vld [vmem:[%s919 + $0x40] sm:$0xff]
        %v3474 = vld [vmem:[%s919 + $0x48] sm:$0xff]
        %v3475 = vld [vmem:[%s919 + $0x50] sm:$0xff]
        %v3476 = vld [vmem:[%s919 + $0x58] sm:$0xff]
        %v3477 = vld [vmem:[%s919 + $0x60] sm:$0xff]
        %v3478 = vld [vmem:[%s919 + $0x68] sm:$0xff]
        %v3479 = vld [vmem:[%s919 + $0x70] sm:$0xff]
        %v3480 = vld [vmem:[%s919 + $0x78] sm:$0xff]
        %v3481 = vld [vmem:[%s923] sm:$0x3]
        %v3483 = vlaneseq
        %v3484 = vshrl.u32 %v3483, 7
        %v3485 = vsub.s32 0, %v3484
        %v3486 = vrot.slane %v3481, %v3485
        %v3487 = vlaneseq
        %v3488 = vshrl.u32 %v3487, 7
        %v3489 = vsub.s32 1, %v3488
        %v3490 = vrot.slane %v3481, %v3489
        %v3509 = vunpack.c.l.b16 %v3465
        %v3510 = vunpack.c.h.b16 %v3465
        %v3511 = vunpack.c.l.b16 %v3466
        %v3512 = vunpack.c.h.b16 %v3466
        %v3513 = vunpack.c.l.b16 %v3467
        %v3514 = vunpack.c.h.b16 %v3467
        %v3515 = vunpack.c.l.b16 %v3468
        %v3516 = vunpack.c.h.b16 %v3468
        %v3517 = vunpack.c.l.b16 %v3469
        %v3518 = vunpack.c.h.b16 %v3469
        %v3519 = vunpack.c.l.b16 %v3470
        %v3520 = vunpack.c.h.b16 %v3470
        %v3521 = vunpack.c.l.b16 %v3471
        %v3522 = vunpack.c.h.b16 %v3471
        %v3523 = vunpack.c.l.b16 %v3472
        %v3524 = vunpack.c.h.b16 %v3472
        %v3525 = vunpack.c.l.b16 %v3473
        %v3526 = vunpack.c.h.b16 %v3473
        %v3527 = vunpack.c.l.b16 %v3474
        %v3528 = vunpack.c.h.b16 %v3474
        %v3529 = vunpack.c.l.b16 %v3475
        %v3530 = vunpack.c.h.b16 %v3475
        %v3531 = vunpack.c.l.b16 %v3476
        %v3532 = vunpack.c.h.b16 %v3476
        %v3533 = vunpack.c.l.b16 %v3477
        %v3534 = vunpack.c.h.b16 %v3477
        %v3535 = vunpack.c.l.b16 %v3478
        %v3536 = vunpack.c.h.b16 %v3478
        %v3537 = vunpack.c.l.b16 %v3479
        %v3538 = vunpack.c.h.b16 %v3479
        %v3539 = vunpack.c.l.b16 %v3480
        %v3540 = vunpack.c.h.b16 %v3480
        %v3541 = vpack.c.b16 %v3511, %v3509
        %v3542 = vpack.c.b16 %v3512, %v3510
        %v3543 = vpack.c.b16 %v3515, %v3513
        %v3544 = vpack.c.b16 %v3516, %v3514
        %v3545 = vpack.c.b16 %v3519, %v3517
        %v3546 = vpack.c.b16 %v3520, %v3518
        %v3547 = vpack.c.b16 %v3523, %v3521
        %v3548 = vpack.c.b16 %v3524, %v3522
        %v3549 = vpack.c.b16 %v3527, %v3525
        %v3550 = vpack.c.b16 %v3528, %v3526
        %v3551 = vpack.c.b16 %v3531, %v3529
        %v3552 = vpack.c.b16 %v3532, %v3530
        %v3553 = vpack.c.b16 %v3535, %v3533
        %v3554 = vpack.c.b16 %v3536, %v3534
        %v3555 = vpack.c.b16 %v3539, %v3537
        %v3556 = vpack.c.b16 %v3540, %v3538
        %3573 = vmatprep.subr.bf16.mxu0 %v3542
        %3574 = vmatpush1.bf16.msra.mxu0 %v3541
        %3575 = vmatprep.subr.bf16.mxu0 %v3544
        %3576 = vmatpush1.bf16.msra.mxu0 %v3543
        %3577 = vmatprep.subr.bf16.mxu0 %v3546
        %3578 = vmatpush1.bf16.msra.mxu0 %v3545
        %3579 = vmatprep.subr.bf16.mxu0 %v3548
        %3580 = vmatpush1.bf16.msra.mxu0 %v3547
        %3581 = vmatprep.subr.bf16.mxu0 %v3550
        %3582 = vmatpush1.bf16.msra.mxu0 %v3549
        %3583 = vmatprep.subr.bf16.mxu0 %v3552
        %3584 = vmatpush1.bf16.msra.mxu0 %v3551
        %3585 = vmatprep.subr.bf16.mxu0 %v3554
        %3586 = vmatpush1.bf16.msra.mxu0 %v3553
        %3587 = vmatprep.subr.bf16.mxu0 %v3556
        %3588 = vmatpush1.bf16.msra.mxu0 %v3555
        %3589 = vmatprep.subr.bf16.mxu0 0
        %3590 = vmatpush1.bf16.msra.mxu0 0
        %3591 = vmatprep.subr.bf16.mxu0 0
        %3592 = vmatpush1.bf16.msra.mxu0 0
        %3593 = vmatprep.subr.bf16.mxu0 0
        %3594 = vmatpush1.bf16.msra.mxu0 0
        %3595 = vmatprep.subr.bf16.mxu0 0
        %3596 = vmatpush1.bf16.msra.mxu0 0
        %3597 = vmatprep.subr.bf16.mxu0 0
        %3598 = vmatpush1.bf16.msra.mxu0 0
        %3599 = vmatprep.subr.bf16.mxu0 0
        %3600 = vmatpush1.bf16.msra.mxu0 0
        %3601 = vmatprep.subr.bf16.mxu0 0
        %3602 = vmatpush1.bf16.msra.mxu0 0
        %3603 = vmatprep.subr.bf16.mxu0 0
        %3604 = vmatpush1.bf16.msra.mxu0 0
        %3605 = vmatprep.mubr.bf16.mxu0 0
        %3606 = vmatmul.mubr.bf16.gmra.mrb[0].mxu0 %v3460
        %v3607 = vpop.f32.mrb[0].mxu0
        %v3608 = vadd.f32 %v3486, %v3607
        %v3609 = vpop.f32.mrb[0].mxu0
        %v3610 = vadd.f32 %v3490, %v3609
        %v3611 = vpop.f32.mrb[0].mxu0
        %v3612 = vadd.f32 %v3486, %v3611
        %v3613 = vpop.f32.mrb[0].mxu0
        %v3614 = vadd.f32 %v3490, %v3613
        %3615 = vmatprep.mubr.bf16.mxu0 0
        %3616 = vmatmul.mubr.bf16.gmra.mrb[0].mxu0 %v3461
        %v3617 = vpop.f32.mrb[0].mxu0
        %v3618 = vadd.f32 %v3486, %v3617
        %v3619 = vpop.f32.mrb[0].mxu0
        %v3620 = vadd.f32 %v3490, %v3619
        %v3621 = vpop.f32.mrb[0].mxu0
        %v3622 = vadd.f32 %v3486, %v3621
        %v3623 = vpop.f32.mrb[0].mxu0
        %v3624 = vadd.f32 %v3490, %v3623
        %3625 = vmatprep.mubr.bf16.mxu0 0
        %3626 = vmatmul.mubr.bf16.gmra.mrb[0].mxu0 %v3462
        %v3627 = vpop.f32.mrb[0].mxu0
        %v3628 = vadd.f32 %v3486, %v3627
        %v3629 = vpop.f32.mrb[0].mxu0
        %v3630 = vadd.f32 %v3490, %v3629
        %v3631 = vpop.f32.mrb[0].mxu0
        %v3632 = vadd.f32 %v3486, %v3631
        %v3633 = vpop.f32.mrb[0].mxu0
        %v3634 = vadd.f32 %v3490, %v3633
        %3635 = vmatprep.mubr.bf16.mxu0 0
        %3636 = vmatmul.mubr.bf16.gmra.mrb[0].mxu0 %v3463
        %v3637 = vpop.f32.mrb[0].mxu0
        %v3638 = vadd.f32 %v3486, %v3637
        %v3639 = vpop.f32.mrb[0].mxu0
        %v3640 = vadd.f32 %v3490, %v3639
        %v3641 = vpop.f32.mrb[0].mxu0
        %v3642 = vadd.f32 %v3486, %v3641
        %v3643 = vpop.f32.mrb[0].mxu0
        %v3644 = vadd.f32 %v3490, %v3643
        %3645 = vmatprep.mubr.bf16.mxu0 0
        %3646 = vmatmul.mubr.bf16.gmra.mrb[0].mxu0 %v3464
        %v3647 = vpop.f32.mrb[0].mxu0
        %v3648 = vadd.f32 %v3486, %v3647
        %v3649 = vpop.f32.mrb[0].mxu0
        %v3650 = vadd.f32 %v3490, %v3649
        %v3651 = vpop.f32.mrb[0].mxu0
        %v3652 = vpop.f32.mrb[0].mxu0
        %3653 = vdwg.mxu0
        %v3654 = vmax.f32 %v3608, 0.0
        %v3655 = vmax.f32 %v3610, 0.0
        %v3656 = vmax.f32 %v3612, 0.0
        %v3657 = vmax.f32 %v3614, 0.0
        %v3658 = vmax.f32 %v3618, 0.0
        %v3659 = vmax.f32 %v3620, 0.0
        %v3660 = vmax.f32 %v3622, 0.0
        %v3661 = vmax.f32 %v3624, 0.0
        %v3662 = vmax.f32 %v3628, 0.0
        %v3663 = vmax.f32 %v3630, 0.0
        %v3664 = vmax.f32 %v3632, 0.0
        %v3665 = vmax.f32 %v3634, 0.0
        %v3666 = vmax.f32 %v3638, 0.0
        %v3667 = vmax.f32 %v3640, 0.0
        %v3668 = vmax.f32 %v3642, 0.0
        %v3669 = vmax.f32 %v3644, 0.0
        %v3670 = vmax.f32 %v3648, 0.0
        %v3671 = vmax.f32 %v3650, 0.0
        %v3672 = vpack.c.bf16 %v3656, %v3654
        %v3673 = vpack.c.bf16 %v3657, %v3655
        %v3674 = vpack.c.bf16 %v3660, %v3658
        %v3675 = vpack.c.bf16 %v3661, %v3659
        %v3676 = vpack.c.bf16 %v3664, %v3662
        %v3677 = vpack.c.bf16 %v3665, %v3663
        %v3678 = vpack.c.bf16 %v3668, %v3666
        %v3679 = vpack.c.bf16 %v3669, %v3667
        %v3680 = vpack.c.bf16 %v3670, %v3670
        %v3681 = vpack.c.bf16 %v3671, %v3671
        %v3682 = vld [vmem:[%s928] sm:$0xf]
        %v3683 = vld [vmem:[%s928 + $0x4] sm:$0xf]
        %v3684 = vld [vmem:[%s928 + $0x8] sm:$0xf]
        %v3685 = vld [vmem:[%s928 + $0xc] sm:$0xf]
        %v3686 = vld [vmem:[%s928 + $0x10] sm:$0xf]
        %v3687 = vld [vmem:[%s928 + $0x14] sm:$0xf]
        %v3688 = vld [vmem:[%s928 + $0x18] sm:$0xf]
        %v3689 = vld [vmem:[%s928 + $0x1c] sm:$0xf]
        %v3690 = vld [vmem:[%s928 + $0x20] sm:$0xf]
        %v3691 = vld [vmem:[%s928 + $0x24] sm:$0xf]
        %v3692 = vld [vmem:[%s928 + $0x28] sm:$0xf]
        %v3693 = vld [vmem:[%s928 + $0x2c] sm:$0xf]
        %v3694 = vld [vmem:[%s928 + $0x30] sm:$0xf]
        %v3695 = vld [vmem:[%s928 + $0x34] sm:$0xf]
        %v3696 = vld [vmem:[%s928 + $0x38] sm:$0xf]
        %v3697 = vld [vmem:[%s928 + $0x3c] sm:$0xf]
        %v3698 = vld [vmem:[%s928 + $0x40] sm:$0xf]
        %v3699 = vld [vmem:[%s928 + $0x44] sm:$0xf]
        %v3700 = vld [vmem:[%s928 + $0x48] sm:$0xf]
        %v3701 = vld [vmem:[%s928 + $0x4c] sm:$0xf]
        %v3702 = vld [vmem:[%s928 + $0x50] sm:$0xf]
        %v3703 = vld [vmem:[%s928 + $0x54] sm:$0xf]
        %v3704 = vld [vmem:[%s928 + $0x58] sm:$0xf]
        %v3705 = vld [vmem:[%s928 + $0x5c] sm:$0xf]
        %v3706 = vld [vmem:[%s928 + $0x60] sm:$0xf]
        %v3707 = vld [vmem:[%s928 + $0x64] sm:$0xf]
        %v3708 = vld [vmem:[%s928 + $0x68] sm:$0xf]
        %v3709 = vld [vmem:[%s928 + $0x6c] sm:$0xf]
        %v3710 = vld [vmem:[%s928 + $0x70] sm:$0xf]
        %v3711 = vld [vmem:[%s928 + $0x74] sm:$0xf]
        %v3712 = vld [vmem:[%s928 + $0x78] sm:$0xf]
        %v3713 = vld [vmem:[%s928 + $0x7c] sm:$0xf]
        %v3714 = vld [vmem:[%s931] sm:$0x1]
        %v3716 = vlaneseq
        %v3717 = vshrl.u32 %v3716, 7
        %v3718 = vsub.s32 0, %v3717
        %v3719 = vrot.slane %v3714, %v3718
        %v3753 = vunpack.c.l.b16 %v3682
        %v3754 = vunpack.c.l.b16 %v3683
        %v3755 = vunpack.c.l.b16 %v3684
        %v3756 = vunpack.c.l.b16 %v3685
        %v3757 = vunpack.c.l.b16 %v3686
        %v3758 = vunpack.c.l.b16 %v3687
        %v3759 = vunpack.c.l.b16 %v3688
        %v3760 = vunpack.c.l.b16 %v3689
        %v3761 = vunpack.c.l.b16 %v3690
        %v3762 = vunpack.c.l.b16 %v3691
        %v3763 = vunpack.c.l.b16 %v3692
        %v3764 = vunpack.c.l.b16 %v3693
        %v3765 = vunpack.c.l.b16 %v3694
        %v3766 = vunpack.c.l.b16 %v3695
        %v3767 = vunpack.c.l.b16 %v3696
        %v3768 = vunpack.c.l.b16 %v3697
        %v3769 = vunpack.c.l.b16 %v3698
        %v3770 = vunpack.c.l.b16 %v3699
        %v3771 = vunpack.c.l.b16 %v3700
        %v3772 = vunpack.c.l.b16 %v3701
        %v3773 = vunpack.c.l.b16 %v3702
        %v3774 = vunpack.c.l.b16 %v3703
        %v3775 = vunpack.c.l.b16 %v3704
        %v3776 = vunpack.c.l.b16 %v3705
        %v3777 = vunpack.c.l.b16 %v3706
        %v3778 = vunpack.c.l.b16 %v3707
        %v3779 = vunpack.c.l.b16 %v3708
        %v3780 = vunpack.c.l.b16 %v3709
        %v3781 = vunpack.c.l.b16 %v3710
        %v3782 = vunpack.c.l.b16 %v3711
        %v3783 = vunpack.c.l.b16 %v3712
        %v3784 = vunpack.c.l.b16 %v3713
        %v3785 = vpack.c.b16 %v3754, %v3753
        %v3786 = vpack.c.b16 %v3756, %v3755
        %v3787 = vpack.c.b16 %v3758, %v3757
        %v3788 = vpack.c.b16 %v3760, %v3759
        %v3789 = vpack.c.b16 %v3762, %v3761
        %v3790 = vpack.c.b16 %v3764, %v3763
        %v3791 = vpack.c.b16 %v3766, %v3765
        %v3792 = vpack.c.b16 %v3768, %v3767
        %v3793 = vpack.c.b16 %v3770, %v3769
        %v3794 = vpack.c.b16 %v3772, %v3771
        %v3795 = vpack.c.b16 %v3774, %v3773
        %v3796 = vpack.c.b16 %v3776, %v3775
        %v3797 = vpack.c.b16 %v3778, %v3777
        %v3798 = vpack.c.b16 %v3780, %v3779
        %v3799 = vpack.c.b16 %v3782, %v3781
        %v3800 = vpack.c.b16 %v3784, %v3783
        %3817 = vmatprep.subr.bf16.mxu0 0
        %3818 = vmatpush1.bf16.msra.mxu0 %v3785
        %3819 = vmatprep.subr.bf16.mxu0 0
        %3820 = vmatpush1.bf16.msra.mxu0 %v3786
        %3821 = vmatprep.subr.bf16.mxu0 0
        %3822 = vmatpush1.bf16.msra.mxu0 %v3787
        %3823 = vmatprep.subr.bf16.mxu0 0
        %3824 = vmatpush1.bf16.msra.mxu0 %v3788
        %3825 = vmatprep.subr.bf16.mxu0 0
        %3826 = vmatpush1.bf16.msra.mxu0 %v3789
        %3827 = vmatprep.subr.bf16.mxu0 0
        %3828 = vmatpush1.bf16.msra.mxu0 %v3790
        %3829 = vmatprep.subr.bf16.mxu0 0
        %3830 = vmatpush1.bf16.msra.mxu0 %v3791
        %3831 = vmatprep.subr.bf16.mxu0 0
        %3832 = vmatpush1.bf16.msra.mxu0 %v3792
        %3833 = vmatprep.subr.bf16.mxu0 0
        %3834 = vmatpush1.bf16.msra.mxu0 %v3793
        %3835 = vmatprep.subr.bf16.mxu0 0
        %3836 = vmatpush1.bf16.msra.mxu0 %v3794
        %3837 = vmatprep.subr.bf16.mxu0 0
        %3838 = vmatpush1.bf16.msra.mxu0 %v3795
        %3839 = vmatprep.subr.bf16.mxu0 0
        %3840 = vmatpush1.bf16.msra.mxu0 %v3796
        %3841 = vmatprep.subr.bf16.mxu0 0
        %3842 = vmatpush1.bf16.msra.mxu0 %v3797
        %3843 = vmatprep.subr.bf16.mxu0 0
        %3844 = vmatpush1.bf16.msra.mxu0 %v3798
        %3845 = vmatprep.subr.bf16.mxu0 0
        %3846 = vmatpush1.bf16.msra.mxu0 %v3799
        %3847 = vmatprep.subr.bf16.mxu0 0
        %3848 = vmatpush1.bf16.msra.mxu0 %v3800
        %3849 = vmatprep.mubr.bf16.mxu0 %v3673
        %3850 = vmatmul.mubr.bf16.gmra.mrb[0].mxu0 %v3672
        %v3851 = vpop.f32.mrb[0].mxu0
        %v3852 = vadd.f32 %v3719, %v3851
        %v3853 = vpop.f32.mrb[0].mxu0
        %v3854 = vpop.f32.mrb[0].mxu0
        %v3855 = vadd.f32 %v3719, %v3854
        %v3856 = vpop.f32.mrb[0].mxu0
        %3857 = vmatprep.mubr.bf16.mxu0 %v3675
        %3858 = vmatmul.mubr.bf16.gmra.mrb[0].mxu0 %v3674
        %v3859 = vpop.f32.mrb[0].mxu0
        %v3860 = vadd.f32 %v3719, %v3859
        %v3861 = vpop.f32.mrb[0].mxu0
        %v3862 = vpop.f32.mrb[0].mxu0
        %v3863 = vadd.f32 %v3719, %v3862
        %v3864 = vpop.f32.mrb[0].mxu0
        %3865 = vmatprep.mubr.bf16.mxu0 %v3677
        %3866 = vmatmul.mubr.bf16.gmra.mrb[0].mxu0 %v3676
        %v3867 = vpop.f32.mrb[0].mxu0
        %v3868 = vadd.f32 %v3719, %v3867
        %v3869 = vpop.f32.mrb[0].mxu0
        %v3870 = vpop.f32.mrb[0].mxu0
        %v3871 = vadd.f32 %v3719, %v3870
        %v3872 = vpop.f32.mrb[0].mxu0
        %3873 = vmatprep.mubr.bf16.mxu0 %v3679
        %3874 = vmatmul.mubr.bf16.gmra.mrb[0].mxu0 %v3678
        %v3875 = vpop.f32.mrb[0].mxu0
        %v3876 = vadd.f32 %v3719, %v3875
        %v3877 = vpop.f32.mrb[0].mxu0
        %v3878 = vpop.f32.mrb[0].mxu0
        %v3879 = vadd.f32 %v3719, %v3878
        %v3880 = vpop.f32.mrb[0].mxu0
        %3881 = vmatprep.mubr.bf16.mxu0 %v3681
        %3882 = vmatmul.mubr.bf16.gmra.mrb[0].mxu0 %v3680
        %v3883 = vpop.f32.mrb[0].mxu0
        %v3884 = vadd.f32 %v3719, %v3883
        %v3885 = vpop.f32.mrb[0].mxu0
        %v3886 = vpop.f32.mrb[0].mxu0
        %v3887 = vpop.f32.mrb[0].mxu0
        %3888 = vdwg.mxu0
        %v3889 = vadd.f32 %v3451, %v3852
        %v3890 = vadd.f32 %v3452, %v3855
        %v3891 = vadd.f32 %v3453, %v3860
        %v3892 = vadd.f32 %v3454, %v3863
        %v3893 = vadd.f32 %v3455, %v3868
        %v3894 = vadd.f32 %v3456, %v3871
        %v3895 = vadd.f32 %v3457, %v3876
        %v3896 = vadd.f32 %v3458, %v3879
        %v3897 = vadd.f32 %v3459, %v3884
        %v3898 = vld [vmem:[%s934] sm:$0x1]
        %v3899 = vld [vmem:[%s937] sm:$0x1]
        %3900 = vadd.xlane.f32.xlu0 %v3889
        %v3901 = vpop.xlane.xlu0 %3900
        %3902 = vadd.xlane.f32.xlu0 %v3890
        %v3903 = vpop.xlane.xlu0 %3902
        %3904 = vadd.xlane.f32.xlu0 %v3891
        %v3905 = vpop.xlane.xlu0 %3904
        %3906 = vadd.xlane.f32.xlu0 %v3892
        %v3907 = vpop.xlane.xlu0 %3906
        %3908 = vadd.xlane.f32.xlu0 %v3893
        %v3909 = vpop.xlane.xlu0 %3908
        %3910 = vadd.xlane.f32.xlu0 %v3894
        %v3911 = vpop.xlane.xlu0 %3910
        %3912 = vadd.xlane.f32.xlu0 %v3895
        %v3913 = vpop.xlane.xlu0 %3912
        %3914 = vadd.xlane.f32.xlu0 %v3896
        %v3915 = vpop.xlane.xlu0 %3914
        %3916 = vadd.xlane.f32.xlu0 %v3897
        %v3917 = vpop.xlane.xlu0 %3916
        %v3918 = vmul.f32 %v3901, %v3348
        %v3919 = vmul.f32 %v3903, %v3348
        %v3920 = vmul.f32 %v3905, %v3348
        %v3921 = vmul.f32 %v3907, %v3348
        %v3922 = vmul.f32 %v3909, %v3348
        %v3923 = vmul.f32 %v3911, %v3348
        %v3924 = vmul.f32 %v3913, %v3348
        %v3925 = vmul.f32 %v3915, %v3348
        %v3926 = vmul.f32 %v3917, %v3348
        %v3927 = vsub.f32 %v3889, %v3918
        %v3928 = vsub.f32 %v3890, %v3919
        %v3929 = vsub.f32 %v3891, %v3920
        %v3930 = vsub.f32 %v3892, %v3921
        %v3931 = vsub.f32 %v3893, %v3922
        %v3932 = vsub.f32 %v3894, %v3923
        %v3933 = vsub.f32 %v3895, %v3924
        %v3934 = vsub.f32 %v3896, %v3925
        %v3935 = vsub.f32 %v3897, %v3926
        %v3936 = vmul.f32 %v3927, %v3927
        %v3937 = vmul.f32 %v3928, %v3928
        %v3938 = vmul.f32 %v3929, %v3929
        %v3939 = vmul.f32 %v3930, %v3930
        %v3940 = vmul.f32 %v3931, %v3931
        %v3941 = vmul.f32 %v3932, %v3932
        %v3942 = vmul.f32 %v3933, %v3933
        %v3943 = vmul.f32 %v3934, %v3934
        %v3944 = vmul.f32 %v3935, %v3935
        %3945 = vadd.xlane.f32.xlu0 %v3936
        %v3946 = vpop.xlane.xlu0 %3945
        %3947 = vadd.xlane.f32.xlu0 %v3937
        %v3948 = vpop.xlane.xlu0 %3947
        %3949 = vadd.xlane.f32.xlu0 %v3938
        %v3950 = vpop.xlane.xlu0 %3949
        %3951 = vadd.xlane.f32.xlu0 %v3939
        %v3952 = vpop.xlane.xlu0 %3951
        %3953 = vadd.xlane.f32.xlu0 %v3940
        %v3954 = vpop.xlane.xlu0 %3953
        %3955 = vadd.xlane.f32.xlu0 %v3941
        %v3956 = vpop.xlane.xlu0 %3955
        %3957 = vadd.xlane.f32.xlu0 %v3942
        %v3958 = vpop.xlane.xlu0 %3957
        %3959 = vadd.xlane.f32.xlu0 %v3943
        %v3960 = vpop.xlane.xlu0 %3959
        %3961 = vadd.xlane.f32.xlu0 %v3944
        %v3962 = vpop.xlane.xlu0 %3961
        %v3963 = vmul.f32 %v3946, %v3348
        %v3964 = vmul.f32 %v3948, %v3348
        %v3965 = vmul.f32 %v3950, %v3348
        %v3966 = vmul.f32 %v3952, %v3348
        %v3967 = vmul.f32 %v3954, %v3348
        %v3968 = vmul.f32 %v3956, %v3348
        %v3969 = vmul.f32 %v3958, %v3348
        %v3970 = vmul.f32 %v3960, %v3348
        %v3971 = vmul.f32 %v3962, %v3348
        %v3972 = vadd.f32 %v3963, 1e-05
        %v3973 = vadd.f32 %v3964, 1e-05
        %v3974 = vadd.f32 %v3965, 1e-05
        %v3975 = vadd.f32 %v3966, 1e-05
        %v3976 = vadd.f32 %v3967, 1e-05
        %v3977 = vadd.f32 %v3968, 1e-05
        %v3978 = vadd.f32 %v3969, 1e-05
        %v3979 = vadd.f32 %v3970, 1e-05
        %v3980 = vadd.f32 %v3971, 1e-05
        %v3981 = vrsqrt.pop %v3972
        %v3982 = vrsqrt.pop %v3973
        %v3983 = vrsqrt.pop %v3974
        %v3984 = vrsqrt.pop %v3975
        %v3985 = vrsqrt.pop %v3976
        %v3986 = vrsqrt.pop %v3977
        %v3987 = vrsqrt.pop %v3978
        %v3988 = vrsqrt.pop %v3979
        %v3989 = vrsqrt.pop %v3980
        %v3990 = vmul.f32 %v3927, %v3981
        %v3991 = vmul.f32 %v3928, %v3982
        %v3992 = vmul.f32 %v3929, %v3983
        %v3993 = vmul.f32 %v3930, %v3984
        %v3994 = vmul.f32 %v3931, %v3985
        %v3995 = vmul.f32 %v3932, %v3986
        %v3996 = vmul.f32 %v3933, %v3987
        %v3997 = vmul.f32 %v3934, %v3988
        %v3998 = vmul.f32 %v3935, %v3989
        %v4000 = vlaneseq
        %v4001 = vshrl.u32 %v4000, 7
        %v4002 = vsub.s32 0, %v4001
        %v4003 = vrot.slane %v3898, %v4002
        %v4005 = vmul.f32 %v3990, %v4003
        %v4006 = vmul.f32 %v3991, %v4003
        %v4007 = vmul.f32 %v3992, %v4003
        %v4008 = vmul.f32 %v3993, %v4003
        %v4009 = vmul.f32 %v3994, %v4003
        %v4010 = vmul.f32 %v3995, %v4003
        %v4011 = vmul.f32 %v3996, %v4003
        %v4012 = vmul.f32 %v3997, %v4003
        %v4013 = vmul.f32 %v3998, %v4003
        %v4015 = vlaneseq
        %v4016 = vshrl.u32 %v4015, 7
        %v4017 = vsub.s32 0, %v4016
        %v4018 = vrot.slane %v3899, %v4017
        %v4020 = vadd.f32 %v4005, %v4018
        %v4021 = vadd.f32 %v4006, %v4018
        %v4022 = vadd.f32 %v4007, %v4018
        %v4023 = vadd.f32 %v4008, %v4018
        %v4024 = vadd.f32 %v4009, %v4018
        %v4025 = vadd.f32 %v4010, %v4018
        %v4026 = vadd.f32 %v4011, %v4018
        %v4027 = vadd.f32 %v4012, %v4018
        %v4028 = vadd.f32 %v4013, %v4018
        %4029 = vst [vmem:[#allocation2] sm:$0xff] %v4020
        %4030 = vst [vmem:[#allocation2 + $0x8] sm:$0xff] %v4021
        %4031 = vst [vmem:[#allocation2 + $0x10] sm:$0xff] %v4022
        %4032 = vst [vmem:[#allocation2 + $0x18] sm:$0xff] %v4023
        %4033 = vst [vmem:[#allocation2 + $0x20] sm:$0xff] %v4024
        %4034 = vst [vmem:[#allocation2 + $0x28] sm:$0xff] %v4025
        %4035 = vst [vmem:[#allocation2 + $0x30] sm:$0xff] %v4026
        %4036 = vst [vmem:[#allocation2 + $0x38] sm:$0xff] %v4027
        %4037 = vst [vmem:[#allocation2 + $0x40] sm:$0xff] %v4028
        %p4038 = scmp.eq.s32.totalorder %s42, 1
        // Predicated region
        $region117: #{context_transformer_forward.1} parent=111 // pred_check
          %p4039 = pneg %p4038
        $region118: #{context_transformer_forward.1} parent=111 // pred_check_branch
          %4041 = sbr.rel (%p4039) target = $region120
        $region119: #{context_transformer_forward.1} parent=111 // pred_region
          %v4042 = vpack.c.bf16 %v4020, %v4020
          %v4043 = vld [vmem:[%s19] sm:$0xff]
          %v4044 = vld [vmem:[%s19 + $0x8] sm:$0xff]
          %v4045 = vld [vmem:[%s19 + $0x10] sm:$0xff]
          %v4046 = vld [vmem:[%s19 + $0x18] sm:$0xff]
          %v4047 = vld [vmem:[%s19 + $0x20] sm:$0xff]
          %v4048 = vld [vmem:[%s19 + $0x28] sm:$0xff]
          %v4049 = vld [vmem:[%s19 + $0x30] sm:$0xff]
          %v4050 = vld [vmem:[%s19 + $0x38] sm:$0xff]
          %v4051 = vld [vmem:[%s19 + $0x40] sm:$0xff]
          %v4052 = vld [vmem:[%s19 + $0x48] sm:$0xff]
          %v4053 = vld [vmem:[%s19 + $0x50] sm:$0xff]
          %v4054 = vld [vmem:[%s19 + $0x58] sm:$0xff]
          %v4055 = vld [vmem:[%s19 + $0x60] sm:$0xff]
          %v4056 = vld [vmem:[%s19 + $0x68] sm:$0xff]
          %v4057 = vld [vmem:[%s19 + $0x70] sm:$0xff]
          %v4058 = vld [vmem:[%s19 + $0x78] sm:$0xff]
          %v4059 = vld [vmem:[%s20] sm:$0x3]
          %v4076 = vunpack.c.l.b16 %v4043
          %v4077 = vunpack.c.h.b16 %v4043
          %v4078 = vunpack.c.l.b16 %v4044
          %v4079 = vunpack.c.h.b16 %v4044
          %v4080 = vunpack.c.l.b16 %v4045
          %v4081 = vunpack.c.h.b16 %v4045
          %v4082 = vunpack.c.l.b16 %v4046
          %v4083 = vunpack.c.h.b16 %v4046
          %v4084 = vunpack.c.l.b16 %v4047
          %v4085 = vunpack.c.h.b16 %v4047
          %v4086 = vunpack.c.l.b16 %v4048
          %v4087 = vunpack.c.h.b16 %v4048
          %v4088 = vunpack.c.l.b16 %v4049
          %v4089 = vunpack.c.h.b16 %v4049
          %v4090 = vunpack.c.l.b16 %v4050
          %v4091 = vunpack.c.h.b16 %v4050
          %v4092 = vunpack.c.l.b16 %v4051
          %v4093 = vunpack.c.h.b16 %v4051
          %v4094 = vunpack.c.l.b16 %v4052
          %v4095 = vunpack.c.h.b16 %v4052
          %v4096 = vunpack.c.l.b16 %v4053
          %v4097 = vunpack.c.h.b16 %v4053
          %v4098 = vunpack.c.l.b16 %v4054
          %v4099 = vunpack.c.h.b16 %v4054
          %v4100 = vunpack.c.l.b16 %v4055
          %v4101 = vunpack.c.h.b16 %v4055
          %v4102 = vunpack.c.l.b16 %v4056
          %v4103 = vunpack.c.h.b16 %v4056
          %v4104 = vunpack.c.l.b16 %v4057
          %v4105 = vunpack.c.h.b16 %v4057
          %v4106 = vunpack.c.l.b16 %v4058
          %v4107 = vunpack.c.h.b16 %v4058
          %v4108 = vpack.c.b16 %v4078, %v4076
          %v4109 = vpack.c.b16 %v4079, %v4077
          %v4110 = vpack.c.b16 %v4082, %v4080
          %v4111 = vpack.c.b16 %v4083, %v4081
          %v4112 = vpack.c.b16 %v4086, %v4084
          %v4113 = vpack.c.b16 %v4087, %v4085
          %v4114 = vpack.c.b16 %v4090, %v4088
          %v4115 = vpack.c.b16 %v4091, %v4089
          %v4116 = vpack.c.b16 %v4094, %v4092
          %v4117 = vpack.c.b16 %v4095, %v4093
          %v4118 = vpack.c.b16 %v4098, %v4096
          %v4119 = vpack.c.b16 %v4099, %v4097
          %v4120 = vpack.c.b16 %v4102, %v4100
          %v4121 = vpack.c.b16 %v4103, %v4101
          %v4122 = vpack.c.b16 %v4106, %v4104
          %v4123 = vpack.c.b16 %v4107, %v4105
          %v4141 = vlaneseq
          %v4142 = vshrl.u32 %v4141, 7
          %v4143 = vsub.s32 0, %v4142
          %v4144 = vrot.slane %v4059, %v4143
          %v4145 = vlaneseq
          %v4146 = vshrl.u32 %v4145, 7
          %v4147 = vsub.s32 1, %v4146
          %v4148 = vrot.slane %v4059, %v4147
          %4151 = vmatprep.subr.bf16.mxu0 %v4109
          %4152 = vmatpush1.bf16.msra.mxu0 %v4108
          %4153 = vmatprep.subr.bf16.mxu0 %v4111
          %4154 = vmatpush1.bf16.msra.mxu0 %v4110
          %4155 = vmatprep.subr.bf16.mxu0 %v4113
          %4156 = vmatpush1.bf16.msra.mxu0 %v4112
          %4157 = vmatprep.subr.bf16.mxu0 %v4115
          %4158 = vmatpush1.bf16.msra.mxu0 %v4114
          %4159 = vmatprep.subr.bf16.mxu0 %v4117
          %4160 = vmatpush1.bf16.msra.mxu0 %v4116
          %4161 = vmatprep.subr.bf16.mxu0 %v4119
          %4162 = vmatpush1.bf16.msra.mxu0 %v4118
          %4163 = vmatprep.subr.bf16.mxu0 %v4121
          %4164 = vmatpush1.bf16.msra.mxu0 %v4120
          %4165 = vmatprep.subr.bf16.mxu0 %v4123
          %4166 = vmatpush1.bf16.msra.mxu0 %v4122
          %4167 = vmatprep.subr.bf16.mxu0 0
          %4168 = vmatpush1.bf16.msra.mxu0 0
          %4169 = vmatprep.subr.bf16.mxu0 0
          %4170 = vmatpush1.bf16.msra.mxu0 0
          %4171 = vmatprep.subr.bf16.mxu0 0
          %4172 = vmatpush1.bf16.msra.mxu0 0
          %4173 = vmatprep.subr.bf16.mxu0 0
          %4174 = vmatpush1.bf16.msra.mxu0 0
          %4175 = vmatprep.subr.bf16.mxu0 0
          %4176 = vmatpush1.bf16.msra.mxu0 0
          %4177 = vmatprep.subr.bf16.mxu0 0
          %4178 = vmatpush1.bf16.msra.mxu0 0
          %4179 = vmatprep.subr.bf16.mxu0 0
          %4180 = vmatpush1.bf16.msra.mxu0 0
          %4181 = vmatprep.subr.bf16.mxu0 0
          %4182 = vmatpush1.bf16.msra.mxu0 0
          %4183 = vmatprep.mubr.bf16.mxu0 0
          %4184 = vmatmul.mubr.bf16.gmra.mrb[0].mxu0 %v4042
          %v4185 = vpop.f32.mrb[0].mxu0
          %v4186 = vadd.f32 %v4144, %v4185
          %v4187 = vpop.f32.mrb[0].mxu0
          %v4188 = vadd.f32 %v4148, %v4187
          %v4189 = vpop.f32.mrb[0].mxu0
          %v4190 = vpop.f32.mrb[0].mxu0
          %4191 = vdwg.mxu0
          %v4192 = vmul.f32 %v4186, 0.5
          %v4193 = vmul.f32 %v4188, 0.5
          %v4194 = vmul.f32 %v4186, 0.044715
          %v4195 = vmul.f32 %v4188, 0.044715
          %v4196 = vmul.f32 %v4194, %v4186
          %v4197 = vmul.f32 %v4195, %v4188
          %v4198 = vmul.f32 %v4196, %v4186
          %v4199 = vmul.f32 %v4197, %v4188
          %v4200 = vadd.f32 %v4186, %v4198
          %v4201 = vadd.f32 %v4188, %v4199
          %v4202 = vmul.f32 %v4200, 0.7978846
          %v4203 = vmul.f32 %v4201, 0.7978846
          %v4204 = vtanh.pop %v4202
          %v4205 = vtanh.pop %v4203
          %v4206 = vadd.f32 %v4204, 1.0
          %v4207 = vadd.f32 %v4205, 1.0
          %v4208 = vmul.f32 %v4192, %v4206
          %v4209 = vmul.f32 %v4193, %v4207
          %v4210 = vpack.c.bf16 %v4208, %v4208
          %v4211 = vpack.c.bf16 %v4209, %v4209
          %v4212 = vld [vmem:[%s21] sm:$0xf]
          %v4213 = vld [vmem:[%s21 + $0x4] sm:$0xf]
          %v4214 = vld [vmem:[%s21 + $0x8] sm:$0xf]
          %v4215 = vld [vmem:[%s21 + $0xc] sm:$0xf]
          %v4216 = vld [vmem:[%s21 + $0x10] sm:$0xf]
          %v4217 = vld [vmem:[%s21 + $0x14] sm:$0xf]
          %v4218 = vld [vmem:[%s21 + $0x18] sm:$0xf]
          %v4219 = vld [vmem:[%s21 + $0x1c] sm:$0xf]
          %v4220 = vld [vmem:[%s21 + $0x20] sm:$0xf]
          %v4221 = vld [vmem:[%s21 + $0x24] sm:$0xf]
          %v4222 = vld [vmem:[%s21 + $0x28] sm:$0xf]
          %v4223 = vld [vmem:[%s21 + $0x2c] sm:$0xf]
          %v4224 = vld [vmem:[%s21 + $0x30] sm:$0xf]
          %v4225 = vld [vmem:[%s21 + $0x34] sm:$0xf]
          %v4226 = vld [vmem:[%s21 + $0x38] sm:$0xf]
          %v4227 = vld [vmem:[%s21 + $0x3c] sm:$0xf]
          %v4228 = vld [vmem:[%s21 + $0x40] sm:$0xf]
          %v4229 = vld [vmem:[%s21 + $0x44] sm:$0xf]
          %v4230 = vld [vmem:[%s21 + $0x48] sm:$0xf]
          %v4231 = vld [vmem:[%s21 + $0x4c] sm:$0xf]
          %v4232 = vld [vmem:[%s21 + $0x50] sm:$0xf]
          %v4233 = vld [vmem:[%s21 + $0x54] sm:$0xf]
          %v4234 = vld [vmem:[%s21 + $0x58] sm:$0xf]
          %v4235 = vld [vmem:[%s21 + $0x5c] sm:$0xf]
          %v4236 = vld [vmem:[%s21 + $0x60] sm:$0xf]
          %v4237 = vld [vmem:[%s21 + $0x64] sm:$0xf]
          %v4238 = vld [vmem:[%s21 + $0x68] sm:$0xf]
          %v4239 = vld [vmem:[%s21 + $0x6c] sm:$0xf]
          %v4240 = vld [vmem:[%s21 + $0x70] sm:$0xf]
          %v4241 = vld [vmem:[%s21 + $0x74] sm:$0xf]
          %v4242 = vld [vmem:[%s21 + $0x78] sm:$0xf]
          %v4243 = vld [vmem:[%s21 + $0x7c] sm:$0xf]
          %v4244 = vld [vmem:[%s22] sm:$0x1]
          %v4277 = vunpack.c.l.b16 %v4212
          %v4278 = vunpack.c.l.b16 %v4213
          %v4279 = vunpack.c.l.b16 %v4214
          %v4280 = vunpack.c.l.b16 %v4215
          %v4281 = vunpack.c.l.b16 %v4216
          %v4282 = vunpack.c.l.b16 %v4217
          %v4283 = vunpack.c.l.b16 %v4218
          %v4284 = vunpack.c.l.b16 %v4219
          %v4285 = vunpack.c.l.b16 %v4220
          %v4286 = vunpack.c.l.b16 %v4221
          %v4287 = vunpack.c.l.b16 %v4222
          %v4288 = vunpack.c.l.b16 %v4223
          %v4289 = vunpack.c.l.b16 %v4224
          %v4290 = vunpack.c.l.b16 %v4225
          %v4291 = vunpack.c.l.b16 %v4226
          %v4292 = vunpack.c.l.b16 %v4227
          %v4293 = vunpack.c.l.b16 %v4228
          %v4294 = vunpack.c.l.b16 %v4229
          %v4295 = vunpack.c.l.b16 %v4230
          %v4296 = vunpack.c.l.b16 %v4231
          %v4297 = vunpack.c.l.b16 %v4232
          %v4298 = vunpack.c.l.b16 %v4233
          %v4299 = vunpack.c.l.b16 %v4234
          %v4300 = vunpack.c.l.b16 %v4235
          %v4301 = vunpack.c.l.b16 %v4236
          %v4302 = vunpack.c.l.b16 %v4237
          %v4303 = vunpack.c.l.b16 %v4238
          %v4304 = vunpack.c.l.b16 %v4239
          %v4305 = vunpack.c.l.b16 %v4240
          %v4306 = vunpack.c.l.b16 %v4241
          %v4307 = vunpack.c.l.b16 %v4242
          %v4308 = vunpack.c.l.b16 %v4243
          %v4309 = vpack.c.b16 %v4278, %v4277
          %v4310 = vpack.c.b16 %v4280, %v4279
          %v4311 = vpack.c.b16 %v4282, %v4281
          %v4312 = vpack.c.b16 %v4284, %v4283
          %v4313 = vpack.c.b16 %v4286, %v4285
          %v4314 = vpack.c.b16 %v4288, %v4287
          %v4315 = vpack.c.b16 %v4290, %v4289
          %v4316 = vpack.c.b16 %v4292, %v4291
          %v4317 = vpack.c.b16 %v4294, %v4293
          %v4318 = vpack.c.b16 %v4296, %v4295
          %v4319 = vpack.c.b16 %v4298, %v4297
          %v4320 = vpack.c.b16 %v4300, %v4299
          %v4321 = vpack.c.b16 %v4302, %v4301
          %v4322 = vpack.c.b16 %v4304, %v4303
          %v4323 = vpack.c.b16 %v4306, %v4305
          %v4324 = vpack.c.b16 %v4308, %v4307
          %4341 = vmatprep.subr.bf16.mxu0 0
          %4342 = vmatpush1.bf16.msra.mxu0 %v4309
          %4343 = vmatprep.subr.bf16.mxu0 0
          %4344 = vmatpush1.bf16.msra.mxu0 %v4310
          %4345 = vmatprep.subr.bf16.mxu0 0
          %4346 = vmatpush1.bf16.msra.mxu0 %v4311
          %4347 = vmatprep.subr.bf16.mxu0 0
          %4348 = vmatpush1.bf16.msra.mxu0 %v4312
          %4349 = vmatprep.subr.bf16.mxu0 0
          %4350 = vmatpush1.bf16.msra.mxu0 %v4313
          %4351 = vmatprep.subr.bf16.mxu0 0
          %4352 = vmatpush1.bf16.msra.mxu0 %v4314
          %4353 = vmatprep.subr.bf16.mxu0 0
          %4354 = vmatpush1.bf16.msra.mxu0 %v4315
          %4355 = vmatprep.subr.bf16.mxu0 0
          %4356 = vmatpush1.bf16.msra.mxu0 %v4316
          %4357 = vmatprep.subr.bf16.mxu0 0
          %4358 = vmatpush1.bf16.msra.mxu0 %v4317
          %4359 = vmatprep.subr.bf16.mxu0 0
          %4360 = vmatpush1.bf16.msra.mxu0 %v4318
          %4361 = vmatprep.subr.bf16.mxu0 0
          %4362 = vmatpush1.bf16.msra.mxu0 %v4319
          %4363 = vmatprep.subr.bf16.mxu0 0
          %4364 = vmatpush1.bf16.msra.mxu0 %v4320
          %4365 = vmatprep.subr.bf16.mxu0 0
          %4366 = vmatpush1.bf16.msra.mxu0 %v4321
          %4367 = vmatprep.subr.bf16.mxu0 0
          %4368 = vmatpush1.bf16.msra.mxu0 %v4322
          %4369 = vmatprep.subr.bf16.mxu0 0
          %4370 = vmatpush1.bf16.msra.mxu0 %v4323
          %4371 = vmatprep.subr.bf16.mxu0 0
          %4372 = vmatpush1.bf16.msra.mxu0 %v4324
          %4373 = vmatprep.mubr.bf16.mxu0 %v4211
          %4374 = vmatmul.mubr.bf16.gmra.mrb[0].mxu0 %v4210
          %v4375 = vpop.f32.mrb[0].mxu0
          %v4376 = vadd.f32 %v4244, %v4375
          %v4377 = vpop.f32.mrb[0].mxu0
          %v4378 = vpop.f32.mrb[0].mxu0
          %v4379 = vpop.f32.mrb[0].mxu0
          %4380 = vdwg.mxu0
          %vm4381 = vcmask 73728
          %4382 = vst.msk [vmem:[%s881] sm:$0x1] %vm4381, %v4376
        $region120: #{context_transformer_forward.1} parent=111 // pred_fallthru
          _
        %s4383 = sand.u32 %s610, 1
        %s4384 = scalar_lea.sflag [#allocation4], %s4383
        %s4385 = sand.u32 %s610, 1
        %s4386 = scalar_lea.vmem [#allocation3], %s4385
        // Predicated region
        $region121: #{context_transformer_forward.1} parent=111 // pred_check
          %p4387 = pneg %p620
        $region122: #{context_transformer_forward.1} parent=111 // pred_check_branch
          %4389 = sbr.rel (%p4387) target = $region124
        $region123: #{context_transformer_forward.1} parent=111 // pred_region
          %s4391 = ssub.s32 16, 16
          %4392 = vsyncadd %s4384, %s4391
          %s4393 = smul.addr %s41, 16
          %s4394 = scalar_lea.hbm %s23, %s4393
          %s4396 = sshll.u32 %s4386, 4
          %s4397 = int_to_ptr.vmem [resolvable:$true] %s4396
          %4399 = dma.vmem_to_hbm [thread:$0]  %s4397, 16, %s4394, %s4384
        $region124: #{context_transformer_forward.1} parent=111 // pred_fallthru
          _
      $region112: #{context_transformer_forward.1} parent=5 // pred_fallthru
        _
      %p4400 = scmp.le.s32.totalorder 2, %s32
      // Predicated region
      $region125: #{context_transformer_forward.1} parent=5 // pred_check
        %p4401 = pneg %p4400
      $region126: #{context_transformer_forward.1} parent=5 // pred_check_branch
        %4403 = sbr.rel (%p4401) target = $region128
      $region127: #{context_transformer_forward.1} parent=5 // pred_region
        %s4404 = ssub.s32 %s32, 2
        // Predicated region
        $region129: #{context_transformer_forward.1} parent=127 // pred_check
          %p4405 = pneg %p626
        $region130: #{context_transformer_forward.1} parent=127 // pred_check_branch
          %4407 = sbr.rel (%p4405) target = $region132
        $region131: #{context_transformer_forward.1} parent=127 // pred_region
          %s4408 = sand.u32 %s611, 1
          %s4409 = scalar_lea.sflag [#allocation4], %s4408
          %s4410 = sand.u32 %s611, 1
          %s4411 = scalar_lea.vmem [#allocation3], %s4410
          %4412 = dma.done %s4409, 16
        $region132: #{context_transformer_forward.1} parent=127 // pred_fallthru
          _
      $region128: #{context_transformer_forward.1} parent=5 // pred_fallthru
        _
    $region6: #{context_transformer_forward.1} parent=1 // loop_footer
      %s36 = sadd.s32 1, %s32
    $region7: #{context_transformer_forward.1} parent=1 // loop_footer_branch
      %31 = sbr.rel target = $region3
    $region8: #{context_transformer_forward.1} parent=1 // loop_exit
      _
    %4413 = vsyncpa [#allocation4], 1
    %s4414 = scalar_lea.sflag [#allocation4], 1
    %4415 = vsyncpa %s4414, 1

</llo_original>
